<compile_context>
chip_gen: v7x
topology: tpu7x:2x2x1
jax: 0.10.0
libtpu: 0.0.40
codegen_flags: <defaults>
</compile_context>

<pallas_src>
import functools
import math

import jax
import jax.numpy as jnp
from jax.experimental import pallas as pl
from jax.experimental.pallas import tpu as pltpu

_EPS_BN = 1e-5   # PyTorch BatchNorm1d default
_EPS_LN = 1e-5   # PyTorch TransformerEncoderLayer layer_norm_eps default


# ----------------------------------------------------------------------------
# helpers
# ----------------------------------------------------------------------------
def _mm_t(a, w):
    """a @ w.T with w stored PyTorch-style as (out_features, in_features)."""
    return jax.lax.dot_general(
        a, w, (((1,), (1,)), ((), ())), preferred_element_type=jnp.float32)


def _layer_norm(x, g, b):
    mu = jnp.mean(x, axis=-1, keepdims=True)
    var = jnp.mean((x - mu) ** 2, axis=-1, keepdims=True)
    return (x - mu) * jax.lax.rsqrt(var + _EPS_LN) * g + b


# ----------------------------------------------------------------------------
# single fused kernel: preprocess + n_layers encoder layers + decoder.
# Processes one batch element per grid step (batch dim squeezed by BlockSpec).
# ----------------------------------------------------------------------------
def fused_transformer_kernel(nlayers, nhead,
                             x_ref, mean_ref, var_ref, gamma_ref, beta_ref,
                             pe_ref, mask_ref,
                             wqkv_ref, bqkv_ref, wo_ref, bo_ref,
                             g1_ref, be1_ref,
                             w1_ref, bb1_ref, w2_ref, bb2_ref,
                             g2_ref, be2_ref,
                             wd_ref, bd_ref,
                             o_ref):
    S, D = x_ref.shape
    hd = D // nhead

    # --- BatchNorm1d (eval) + *sqrt(d_model) + positional add -------------
    x = x_ref[...]                                              # (S, D)
    xn = (x - mean_ref[...]) * jax.lax.rsqrt(var_ref[...] + _EPS_BN)
    xn = xn * gamma_ref[...] + beta_ref[...]
    h = xn * math.sqrt(D) + pe_ref[...]                         # (S, D)

    mask = mask_ref[...]                                        # (S, S), -inf above diag

    # --- encoder layers (static Python loop over stacked weights) ---------
    for l in range(nlayers):
        # fused QKV projection: one (S,D)@(D,3D) MXU push.
        # 1/sqrt(hd) is pre-folded into the Q rows of wqkv / bqkv.
        qkv = _mm_t(h, wqkv_ref[l]) + bqkv_ref[l]               # (S, 3D)

        heads = []
        for hh in range(nhead):                                 # static, nhead == 2
            qh = qkv[:, hh * hd:(hh + 1) * hd]                  # (S, hd)
            kh = qkv[:, D + hh * hd:D + (hh + 1) * hd]
            vh = qkv[:, 2 * D + hh * hd:2 * D + (hh + 1) * hd]

            s = _mm_t(qh, kh) + mask                            # (S, S)
            m = jnp.max(s, axis=-1, keepdims=True)
            p = jnp.exp(s - m)
            p = p * pl.reciprocal(jnp.sum(p, axis=-1, keepdims=True), approx=True)
            heads.append(jnp.dot(p, vh, preferred_element_type=jnp.float32))

        attn = jnp.concatenate(heads, axis=-1)                  # (S, D)
        attn = _mm_t(attn, wo_ref[l]) + bo_ref[l]               # single out-proj matmul

        # residual + norm1
        y = _layer_norm(h + attn, g1_ref[l], be1_ref[l])
        # feed-forward (Linear -> relu -> Linear), residual + norm2
        f1 = jnp.maximum(_mm_t(y, w1_ref[l]) + bb1_ref[l], 0.0)
        ff = _mm_t(f1, w2_ref[l]) + bb2_ref[l]
        h = _layer_norm(y + ff, g2_ref[l], be2_ref[l])

    # --- decoder: mean over S commutes with the affine Linear -------------
    xm = jnp.mean(h, axis=0, keepdims=True)                     # (1, D)
    o_ref[...] = _mm_t(xm, wd_ref[...]) + bd_ref[...]           # (1, n_classes)


# ----------------------------------------------------------------------------
# parameter construction (weights stacked per layer for the fused kernel)
# ----------------------------------------------------------------------------
def make_params(key, *, S, D, H, n_layers, n_classes):
    hd = D // H
    keys = iter(jax.random.split(key, 8 + 12 * n_layers))   # 4 BN + 12/layer + 1 decoder (+spares)

    def uni(k, shape, scale):
        return jax.random.uniform(k, shape, jnp.float32, -scale, scale)

    params = {}
    # BatchNorm1d(S*D) running stats / affine, reshaped to (S, D)
    params['bn_mean'] = 0.1 * jax.random.normal(next(keys), (S, D), jnp.float32)
    params['bn_var'] = jax.random.uniform(next(keys), (S, D), jnp.float32, 0.5, 1.5)
    params['bn_gamma'] = jax.random.uniform(next(keys), (S, D), jnp.float32, 0.9, 1.1)
    params['bn_beta'] = 0.05 * jax.random.normal(next(keys), (S, D), jnp.float32)

    # positional embedding, matching Transformer.position_embed()
    pos = jnp.arange(S, dtype=jnp.float32)[:, None]
    i = jnp.arange(D)[None, :]
    angle = pos / jnp.power(10000.0, (i - (i % 2)).astype(jnp.float32) / D)
    params['pe'] = jnp.where(i % 2 == 0, jnp.sin(angle), jnp.cos(angle)).astype(jnp.float32)

    # causal mask (== generate_square_subsequent_mask)
    params['mask'] = jnp.where(jnp.arange(S)[None, :] > jnp.arange(S)[:, None],
                               -jnp.inf, 0.0).astype(jnp.float32)

    s_in = 1.0 / math.sqrt(D)
    inv_sqrt_hd = 1.0 / math.sqrt(hd)

    wqkv_l, bqkv_l, wo_l, bo_l = [], [], [], []
    w1_l, bb1_l, w2_l, bb2_l = [], [], [], []
    for _ in range(n_layers):
        wq = uni(next(keys), (D, D), s_in) * inv_sqrt_hd     # fold attention scale into Q
        wk = uni(next(keys), (D, D), s_in)
        wv = uni(next(keys), (D, D), s_in)
        bq = uni(next(keys), (D,), s_in) * inv_sqrt_hd
        bk = uni(next(keys), (D,), s_in)
        bv = uni(next(keys), (D,), s_in)
        wo = uni(next(keys), (D, D), s_in)
        bo = uni(next(keys), (D,), s_in)
        w1 = uni(next(keys), (D, D), s_in)                   # dim_feedforward == nhid
        bb1 = uni(next(keys), (D,), s_in)
        w2 = uni(next(keys), (D, D), s_in)
        bb2 = uni(next(keys), (D,), s_in)

        wqkv_l.append(jnp.concatenate([wq, wk, wv], axis=0))           # (3D, D)
        bqkv_l.append(jnp.concatenate([bq, bk, bv], axis=0)[None, :])  # (1, 3D)
        wo_l.append(wo)
        bo_l.append(bo[None, :])
        w1_l.append(w1)
        bb1_l.append(bb1[None, :])
        w2_l.append(w2)
        bb2_l.append(bb2[None, :])

    params['wqkv'] = jnp.stack(wqkv_l)      # (L, 3D, D)
    params['bqkv'] = jnp.stack(bqkv_l)      # (L, 1, 3D)
    params['wo'] = jnp.stack(wo_l)          # (L, D, D)
    params['bo'] = jnp.stack(bo_l)          # (L, 1, D)
    params['g1'] = jnp.ones((n_layers, 1, D), jnp.float32)
    params['be1'] = jnp.zeros((n_layers, 1, D), jnp.float32)
    params['w1'] = jnp.stack(w1_l)
    params['bb1'] = jnp.stack(bb1_l)
    params['w2'] = jnp.stack(w2_l)
    params['bb2'] = jnp.stack(bb2_l)
    params['g2'] = jnp.ones((n_layers, 1, D), jnp.float32)
    params['be2'] = jnp.zeros((n_layers, 1, D), jnp.float32)

    # decoder (init_weights: uniform(-0.1, 0.1) weight, zero bias)
    params['wd'] = uni(next(keys), (n_classes, D), 0.1)
    params['bd'] = jnp.zeros((1, n_classes), jnp.float32)
    return params


# ----------------------------------------------------------------------------
# forward wrapper: one pallas_call, grid over batch (parallel)
# ----------------------------------------------------------------------------
def transformer_forward(x, params, *, nhead, n_classes):
    B, S, D = x.shape
    n_layers = params['wqkv'].shape[0]

    shared = [params['bn_mean'], params['bn_var'], params['bn_gamma'],
              params['bn_beta'], params['pe'], params['mask'],
              params['wqkv'], params['bqkv'], params['wo'], params['bo'],
              params['g1'], params['be1'],
              params['w1'], params['bb1'], params['w2'], params['bb2'],
              params['g2'], params['be2'],
              params['wd'], params['bd']]

    def full_spec(a):
        nd = a.ndim
        return pl.BlockSpec(a.shape, lambda b, _nd=nd: (0,) * _nd)

    in_specs = ([pl.BlockSpec((None, S, D), lambda b: (b, 0, 0))]
                + [full_spec(a) for a in shared])

    kernel = functools.partial(fused_transformer_kernel, n_layers, nhead)

    out = pl.pallas_call(
        kernel,
        out_shape=jax.ShapeDtypeStruct((B, 1, n_classes), jnp.float32),
        grid=(B,),
        in_specs=in_specs,
        out_specs=pl.BlockSpec((None, 1, n_classes), lambda b: (b, 0, 0)),
        compiler_params=pltpu.CompilerParams(
            dimension_semantics=("parallel",)),
    )(x, *shared)
    return out.reshape(B, n_classes)


if __name__ == "__main__":
    # small shapes consistent with the module: input (batch, sql, nhid)
    B, S, D, H = 2, 8, 32, 2          # batch, sql, nhid, nhead
    N_LAYERS, N_CLASSES = 2, 10

    key = jax.random.PRNGKey(0)
    k_x, k_p = jax.random.split(key)
    x = jax.random.normal(k_x, (B, S, D), jnp.float32)
    params = make_params(k_p, S=S, D=D, H=H, n_layers=N_LAYERS, n_classes=N_CLASSES)

    fwd = jax.jit(lambda inp: transformer_forward(inp, params, nhead=H,
                                                  n_classes=N_CLASSES))
    out = fwd(x)
    jax.block_until_ready(out)
    assert out.shape == (B, N_CLASSES) and out.dtype == jnp.float32
    print("KERNEL_OK")
</pallas_src>

<mosaic_0001>
module attributes {stable_mosaic.version = 11 : i64} {
  func.func @fused_transformer_kernel(%arg0: i32, %arg1: memref<1x8x32xf32, #tpu.memory_space<vmem>>, %arg2: memref<8x32xf32, #tpu.memory_space<vmem>>, %arg3: memref<8x32xf32, #tpu.memory_space<vmem>>, %arg4: memref<8x32xf32, #tpu.memory_space<vmem>>, %arg5: memref<8x32xf32, #tpu.memory_space<vmem>>, %arg6: memref<8x32xf32, #tpu.memory_space<vmem>>, %arg7: memref<8x8xf32, #tpu.memory_space<vmem>>, %arg8: memref<2x96x32xf32, #tpu.memory_space<vmem>>, %arg9: memref<2x1x96xf32, #tpu.memory_space<vmem>>, %arg10: memref<2x32x32xf32, #tpu.memory_space<vmem>>, %arg11: memref<2x1x32xf32, #tpu.memory_space<vmem>>, %arg12: memref<2x1x32xf32, #tpu.memory_space<vmem>>, %arg13: memref<2x1x32xf32, #tpu.memory_space<vmem>>, %arg14: memref<2x32x32xf32, #tpu.memory_space<vmem>>, %arg15: memref<2x1x32xf32, #tpu.memory_space<vmem>>, %arg16: memref<2x32x32xf32, #tpu.memory_space<vmem>>, %arg17: memref<2x1x32xf32, #tpu.memory_space<vmem>>, %arg18: memref<2x1x32xf32, #tpu.memory_space<vmem>>, %arg19: memref<2x1x32xf32, #tpu.memory_space<vmem>>, %arg20: memref<10x32xf32, #tpu.memory_space<vmem>>, %arg21: memref<1x10xf32, #tpu.memory_space<vmem>>, %arg22: memref<1x1x10xf32, #tpu.memory_space<vmem>>) attributes {dimension_semantics = [#tpu.dimension_semantics<parallel>], iteration_bounds = array<i64: 2>, scalar_prefetch = 0 : i64, scratch_operands = 0 : i64, tpu.core_type = #tpu.core_type<tc>, window_params = [{transform_indices = @transform_0, window_bounds = array<i64: 1, 8, 32>}, {pipeline_mode = #tpu.pipeline_mode<synchronous>, transform_indices = @transform_1, window_bounds = array<i64: 8, 32>}, {pipeline_mode = #tpu.pipeline_mode<synchronous>, transform_indices = @transform_2, window_bounds = array<i64: 8, 32>}, {pipeline_mode = #tpu.pipeline_mode<synchronous>, transform_indices = @transform_3, window_bounds = array<i64: 8, 32>}, {pipeline_mode = #tpu.pipeline_mode<synchronous>, transform_indices = @transform_4, window_bounds = array<i64: 8, 32>}, {pipeline_mode = #tpu.pipeline_mode<synchronous>, transform_indices = @transform_5, window_bounds = array<i64: 8, 32>}, {pipeline_mode = #tpu.pipeline_mode<synchronous>, transform_indices = @transform_6, window_bounds = array<i64: 8, 8>}, {pipeline_mode = #tpu.pipeline_mode<synchronous>, transform_indices = @transform_7, window_bounds = array<i64: 2, 96, 32>}, {pipeline_mode = #tpu.pipeline_mode<synchronous>, transform_indices = @transform_8, window_bounds = array<i64: 2, 1, 96>}, {pipeline_mode = #tpu.pipeline_mode<synchronous>, transform_indices = @transform_9, window_bounds = array<i64: 2, 32, 32>}, {pipeline_mode = #tpu.pipeline_mode<synchronous>, transform_indices = @transform_10, window_bounds = array<i64: 2, 1, 32>}, {pipeline_mode = #tpu.pipeline_mode<synchronous>, transform_indices = @transform_11, window_bounds = array<i64: 2, 1, 32>}, {pipeline_mode = #tpu.pipeline_mode<synchronous>, transform_indices = @transform_12, window_bounds = array<i64: 2, 1, 32>}, {pipeline_mode = #tpu.pipeline_mode<synchronous>, transform_indices = @transform_13, window_bounds = array<i64: 2, 32, 32>}, {pipeline_mode = #tpu.pipeline_mode<synchronous>, transform_indices = @transform_14, window_bounds = array<i64: 2, 1, 32>}, {pipeline_mode = #tpu.pipeline_mode<synchronous>, transform_indices = @transform_15, window_bounds = array<i64: 2, 32, 32>}, {pipeline_mode = #tpu.pipeline_mode<synchronous>, transform_indices = @transform_16, window_bounds = array<i64: 2, 1, 32>}, {pipeline_mode = #tpu.pipeline_mode<synchronous>, transform_indices = @transform_17, window_bounds = array<i64: 2, 1, 32>}, {pipeline_mode = #tpu.pipeline_mode<synchronous>, transform_indices = @transform_18, window_bounds = array<i64: 2, 1, 32>}, {pipeline_mode = #tpu.pipeline_mode<synchronous>, transform_indices = @transform_19, window_bounds = array<i64: 10, 32>}, {pipeline_mode = #tpu.pipeline_mode<synchronous>, transform_indices = @transform_20, window_bounds = array<i64: 1, 10>}, {transform_indices = @transform_21, window_bounds = array<i64: 1, 1, 10>}]} {
    %c0 = arith.constant 0 : index
    %c0_0 = arith.constant 0 : index
    %c0_1 = arith.constant 0 : index
    %0 = vector.load %arg1[%c0, %c0_0, %c0_1] : memref<1x8x32xf32, #tpu.memory_space<vmem>>, vector<1x8x32xf32>
    %1 = vector.shape_cast %0 : vector<1x8x32xf32> to vector<8x32xf32>
    %c0_2 = arith.constant 0 : index
    %c0_3 = arith.constant 0 : index
    %2 = vector.load %arg2[%c0_2, %c0_3] : memref<8x32xf32, #tpu.memory_space<vmem>>, vector<8x32xf32>
    %3 = arith.subf %1, %2 : vector<8x32xf32>
    %c0_4 = arith.constant 0 : index
    %c0_5 = arith.constant 0 : index
    %4 = vector.load %arg3[%c0_4, %c0_5] : memref<8x32xf32, #tpu.memory_space<vmem>>, vector<8x32xf32>
    %cst = arith.constant 9.99999974E-6 : f32
    %5 = vector.broadcast %cst : f32 to vector<8x32xf32>
    %6 = arith.addf %4, %5 : vector<8x32xf32>
    %7 = math.rsqrt %6 : vector<8x32xf32>
    %8 = arith.mulf %3, %7 : vector<8x32xf32>
    %c0_6 = arith.constant 0 : index
    %c0_7 = arith.constant 0 : index
    %9 = vector.load %arg4[%c0_6, %c0_7] : memref<8x32xf32, #tpu.memory_space<vmem>>, vector<8x32xf32>
    %10 = arith.mulf %8, %9 : vector<8x32xf32>
    %c0_8 = arith.constant 0 : index
    %c0_9 = arith.constant 0 : index
    %11 = vector.load %arg5[%c0_8, %c0_9] : memref<8x32xf32, #tpu.memory_space<vmem>>, vector<8x32xf32>
    %12 = arith.addf %10, %11 : vector<8x32xf32>
    %cst_10 = arith.constant 5.65685415 : f32
    %13 = vector.broadcast %cst_10 : f32 to vector<8x32xf32>
    %14 = arith.mulf %12, %13 : vector<8x32xf32>
    %c0_11 = arith.constant 0 : index
    %c0_12 = arith.constant 0 : index
    %15 = vector.load %arg6[%c0_11, %c0_12] : memref<8x32xf32, #tpu.memory_space<vmem>>, vector<8x32xf32>
    %16 = arith.addf %14, %15 : vector<8x32xf32>
    %c0_13 = arith.constant 0 : index
    %c0_14 = arith.constant 0 : index
    %17 = vector.load %arg7[%c0_13, %c0_14] : memref<8x8xf32, #tpu.memory_space<vmem>>, vector<8x8xf32>
    %c0_15 = arith.constant 0 : index
    %c0_16 = arith.constant 0 : index
    %c0_17 = arith.constant 0 : index
    %18 = vector.load %arg8[%c0_15, %c0_16, %c0_17] : memref<2x96x32xf32, #tpu.memory_space<vmem>>, vector<1x96x32xf32>
    %19 = vector.shape_cast %18 : vector<1x96x32xf32> to vector<96x32xf32>
    %cst_18 = arith.constant dense<0.000000e+00> : vector<8x96xf32>
    %20 = tpu.matmul %16, %19, %cst_18 {dimension_numbers = #tpu.dot_dimension_numbers<[1], [1], [0], [0], [0, 0, 1, 0], [], []>} : vector<8x32xf32>, vector<96x32xf32>, vector<8x96xf32> -> vector<8x96xf32>
    %c0_19 = arith.constant 0 : index
    %c0_20 = arith.constant 0 : index
    %c0_21 = arith.constant 0 : index
    %21 = vector.load %arg9[%c0_19, %c0_20, %c0_21] : memref<2x1x96xf32, #tpu.memory_space<vmem>>, vector<1x1x96xf32>
    %22 = vector.shape_cast %21 : vector<1x1x96xf32> to vector<1x96xf32>
    %23 = vector.broadcast %22 : vector<1x96xf32> to vector<8x96xf32>
    %24 = arith.addf %20, %23 : vector<8x96xf32>
    %25 = vector.extract_strided_slice %24 {offsets = [0, 0], sizes = [8, 16], strides = [1, 1]} : vector<8x96xf32> to vector<8x16xf32>
    %26 = vector.extract_strided_slice %24 {offsets = [0, 32], sizes = [8, 16], strides = [1, 1]} : vector<8x96xf32> to vector<8x16xf32>
    %27 = vector.extract_strided_slice %24 {offsets = [0, 64], sizes = [8, 16], strides = [1, 1]} : vector<8x96xf32> to vector<8x16xf32>
    %cst_22 = arith.constant dense<0.000000e+00> : vector<8x8xf32>
    %28 = tpu.matmul %25, %26, %cst_22 {dimension_numbers = #tpu.dot_dimension_numbers<[1], [1], [0], [0], [0, 0, 1, 0], [], []>} : vector<8x16xf32>, vector<8x16xf32>, vector<8x8xf32> -> vector<8x8xf32>
    %29 = arith.addf %28, %17 : vector<8x8xf32>
    %cst_23 = arith.constant dense<0xFF800000> : vector<8xf32>
    %30 = vector.multi_reduction <maximumf>, %29, %cst_23 [1] : vector<8x8xf32> to vector<8xf32>
    %31 = vector.shape_cast %30 : vector<8xf32> to vector<8x1xf32>
    %32 = vector.broadcast %31 : vector<8x1xf32> to vector<8x8xf32>
    %33 = arith.subf %29, %32 : vector<8x8xf32>
    %34 = math.exp %33 : vector<8x8xf32>
    %cst_24 = arith.constant dense<0.000000e+00> : vector<8xf32>
    %35 = vector.multi_reduction <add>, %34, %cst_24 [1] : vector<8x8xf32> to vector<8xf32>
    %36 = vector.shape_cast %35 : vector<8xf32> to vector<8x1xf32>
    %37 = tpu.reciprocal %36 {approx = true} : vector<8x1xf32> -> vector<8x1xf32>
    %38 = vector.broadcast %37 : vector<8x1xf32> to vector<8x8xf32>
    %39 = arith.mulf %34, %38 : vector<8x8xf32>
    %cst_25 = arith.constant dense<0.000000e+00> : vector<8x16xf32>
    %40 = tpu.matmul %39, %27, %cst_25 {dimension_numbers = #tpu.dot_dimension_numbers<[1], [0], [0], [1], [0, 0, 1, 1], [], []>} : vector<8x8xf32>, vector<8x16xf32>, vector<8x16xf32> -> vector<8x16xf32>
    %41 = vector.extract_strided_slice %24 {offsets = [0, 16], sizes = [8, 16], strides = [1, 1]} : vector<8x96xf32> to vector<8x16xf32>
    %42 = vector.extract_strided_slice %24 {offsets = [0, 48], sizes = [8, 16], strides = [1, 1]} : vector<8x96xf32> to vector<8x16xf32>
    %43 = vector.extract_strided_slice %24 {offsets = [0, 80], sizes = [8, 16], strides = [1, 1]} : vector<8x96xf32> to vector<8x16xf32>
    %cst_26 = arith.constant dense<0.000000e+00> : vector<8x8xf32>
    %44 = tpu.matmul %41, %42, %cst_26 {dimension_numbers = #tpu.dot_dimension_numbers<[1], [1], [0], [0], [0, 0, 1, 0], [], []>} : vector<8x16xf32>, vector<8x16xf32>, vector<8x8xf32> -> vector<8x8xf32>
    %45 = arith.addf %44, %17 : vector<8x8xf32>
    %cst_27 = arith.constant dense<0xFF800000> : vector<8xf32>
    %46 = vector.multi_reduction <maximumf>, %45, %cst_27 [1] : vector<8x8xf32> to vector<8xf32>
    %47 = vector.shape_cast %46 : vector<8xf32> to vector<8x1xf32>
    %48 = vector.broadcast %47 : vector<8x1xf32> to vector<8x8xf32>
    %49 = arith.subf %45, %48 : vector<8x8xf32>
    %50 = math.exp %49 : vector<8x8xf32>
    %cst_28 = arith.constant dense<0.000000e+00> : vector<8xf32>
    %51 = vector.multi_reduction <add>, %50, %cst_28 [1] : vector<8x8xf32> to vector<8xf32>
    %52 = vector.shape_cast %51 : vector<8xf32> to vector<8x1xf32>
    %53 = tpu.reciprocal %52 {approx = true} : vector<8x1xf32> -> vector<8x1xf32>
    %54 = vector.broadcast %53 : vector<8x1xf32> to vector<8x8xf32>
    %55 = arith.mulf %50, %54 : vector<8x8xf32>
    %cst_29 = arith.constant dense<0.000000e+00> : vector<8x16xf32>
    %56 = tpu.matmul %55, %43, %cst_29 {dimension_numbers = #tpu.dot_dimension_numbers<[1], [0], [0], [1], [0, 0, 1, 1], [], []>} : vector<8x8xf32>, vector<8x16xf32>, vector<8x16xf32> -> vector<8x16xf32>
    %57 = tpu.concatenate %40, %56 in 1 : vector<8x16xf32>, vector<8x16xf32> -> vector<8x32xf32>
    %c0_30 = arith.constant 0 : index
    %c0_31 = arith.constant 0 : index
    %c0_32 = arith.constant 0 : index
    %58 = vector.load %arg10[%c0_30, %c0_31, %c0_32] : memref<2x32x32xf32, #tpu.memory_space<vmem>>, vector<1x32x32xf32>
    %59 = vector.shape_cast %58 : vector<1x32x32xf32> to vector<32x32xf32>
    %cst_33 = arith.constant dense<0.000000e+00> : vector<8x32xf32>
    %60 = tpu.matmul %57, %59, %cst_33 {dimension_numbers = #tpu.dot_dimension_numbers<[1], [1], [0], [0], [0, 0, 1, 0], [], []>} : vector<8x32xf32>, vector<32x32xf32>, vector<8x32xf32> -> vector<8x32xf32>
    %c0_34 = arith.constant 0 : index
    %c0_35 = arith.constant 0 : index
    %c0_36 = arith.constant 0 : index
    %61 = vector.load %arg11[%c0_34, %c0_35, %c0_36] : memref<2x1x32xf32, #tpu.memory_space<vmem>>, vector<1x1x32xf32>
    %62 = vector.shape_cast %61 : vector<1x1x32xf32> to vector<1x32xf32>
    %63 = vector.broadcast %62 : vector<1x32xf32> to vector<8x32xf32>
    %64 = arith.addf %60, %63 : vector<8x32xf32>
    %65 = arith.addf %16, %64 : vector<8x32xf32>
    %c0_37 = arith.constant 0 : index
    %c0_38 = arith.constant 0 : index
    %c0_39 = arith.constant 0 : index
    %66 = vector.load %arg12[%c0_37, %c0_38, %c0_39] : memref<2x1x32xf32, #tpu.memory_space<vmem>>, vector<1x1x32xf32>
    %67 = vector.shape_cast %66 : vector<1x1x32xf32> to vector<1x32xf32>
    %c0_40 = arith.constant 0 : index
    %c0_41 = arith.constant 0 : index
    %c0_42 = arith.constant 0 : index
    %68 = vector.load %arg13[%c0_40, %c0_41, %c0_42] : memref<2x1x32xf32, #tpu.memory_space<vmem>>, vector<1x1x32xf32>
    %69 = vector.shape_cast %68 : vector<1x1x32xf32> to vector<1x32xf32>
    %cst_43 = arith.constant dense<0.000000e+00> : vector<8xf32>
    %70 = vector.multi_reduction <add>, %65, %cst_43 [1] : vector<8x32xf32> to vector<8xf32>
    %71 = vector.shape_cast %70 : vector<8xf32> to vector<8x1xf32>
    %cst_44 = arith.constant 3.200000e+01 : f32
    %72 = vector.broadcast %cst_44 : f32 to vector<8x1xf32>
    %73 = arith.divf %71, %72 : vector<8x1xf32>
    %74 = vector.broadcast %73 : vector<8x1xf32> to vector<8x32xf32>
    %75 = arith.subf %65, %74 : vector<8x32xf32>
    %76 = arith.mulf %75, %75 : vector<8x32xf32>
    %cst_45 = arith.constant dense<0.000000e+00> : vector<8xf32>
    %77 = vector.multi_reduction <add>, %76, %cst_45 [1] : vector<8x32xf32> to vector<8xf32>
    %78 = vector.shape_cast %77 : vector<8xf32> to vector<8x1xf32>
    %cst_46 = arith.constant 3.200000e+01 : f32
    %79 = vector.broadcast %cst_46 : f32 to vector<8x1xf32>
    %80 = arith.divf %78, %79 : vector<8x1xf32>
    %81 = vector.broadcast %73 : vector<8x1xf32> to vector<8x32xf32>
    %82 = arith.subf %65, %81 : vector<8x32xf32>
    %cst_47 = arith.constant 9.99999974E-6 : f32
    %83 = vector.broadcast %cst_47 : f32 to vector<8x1xf32>
    %84 = arith.addf %80, %83 : vector<8x1xf32>
    %85 = math.rsqrt %84 : vector<8x1xf32>
    %86 = vector.broadcast %85 : vector<8x1xf32> to vector<8x32xf32>
    %87 = arith.mulf %82, %86 : vector<8x32xf32>
    %88 = vector.broadcast %67 : vector<1x32xf32> to vector<8x32xf32>
    %89 = arith.mulf %87, %88 : vector<8x32xf32>
    %90 = vector.broadcast %69 : vector<1x32xf32> to vector<8x32xf32>
    %91 = arith.addf %89, %90 : vector<8x32xf32>
    %c0_48 = arith.constant 0 : index
    %c0_49 = arith.constant 0 : index
    %c0_50 = arith.constant 0 : index
    %92 = vector.load %arg14[%c0_48, %c0_49, %c0_50] : memref<2x32x32xf32, #tpu.memory_space<vmem>>, vector<1x32x32xf32>
    %93 = vector.shape_cast %92 : vector<1x32x32xf32> to vector<32x32xf32>
    %cst_51 = arith.constant dense<0.000000e+00> : vector<8x32xf32>
    %94 = tpu.matmul %91, %93, %cst_51 {dimension_numbers = #tpu.dot_dimension_numbers<[1], [1], [0], [0], [0, 0, 1, 0], [], []>} : vector<8x32xf32>, vector<32x32xf32>, vector<8x32xf32> -> vector<8x32xf32>
    %c0_52 = arith.constant 0 : index
    %c0_53 = arith.constant 0 : index
    %c0_54 = arith.constant 0 : index
    %95 = vector.load %arg15[%c0_52, %c0_53, %c0_54] : memref<2x1x32xf32, #tpu.memory_space<vmem>>, vector<1x1x32xf32>
    %96 = vector.shape_cast %95 : vector<1x1x32xf32> to vector<1x32xf32>
    %97 = vector.broadcast %96 : vector<1x32xf32> to vector<8x32xf32>
    %98 = arith.addf %94, %97 : vector<8x32xf32>
    %cst_55 = arith.constant 0.000000e+00 : f32
    %99 = vector.broadcast %cst_55 : f32 to vector<8x32xf32>
    %100 = arith.maximumf %98, %99 : vector<8x32xf32>
    %c0_56 = arith.constant 0 : index
    %c0_57 = arith.constant 0 : index
    %c0_58 = arith.constant 0 : index
    %101 = vector.load %arg16[%c0_56, %c0_57, %c0_58] : memref<2x32x32xf32, #tpu.memory_space<vmem>>, vector<1x32x32xf32>
    %102 = vector.shape_cast %101 : vector<1x32x32xf32> to vector<32x32xf32>
    %cst_59 = arith.constant dense<0.000000e+00> : vector<8x32xf32>
    %103 = tpu.matmul %100, %102, %cst_59 {dimension_numbers = #tpu.dot_dimension_numbers<[1], [1], [0], [0], [0, 0, 1, 0], [], []>} : vector<8x32xf32>, vector<32x32xf32>, vector<8x32xf32> -> vector<8x32xf32>
    %c0_60 = arith.constant 0 : index
    %c0_61 = arith.constant 0 : index
    %c0_62 = arith.constant 0 : index
    %104 = vector.load %arg17[%c0_60, %c0_61, %c0_62] : memref<2x1x32xf32, #tpu.memory_space<vmem>>, vector<1x1x32xf32>
    %105 = vector.shape_cast %104 : vector<1x1x32xf32> to vector<1x32xf32>
    %106 = vector.broadcast %105 : vector<1x32xf32> to vector<8x32xf32>
    %107 = arith.addf %103, %106 : vector<8x32xf32>
    %108 = arith.addf %91, %107 : vector<8x32xf32>
    %c0_63 = arith.constant 0 : index
    %c0_64 = arith.constant 0 : index
    %c0_65 = arith.constant 0 : index
    %109 = vector.load %arg18[%c0_63, %c0_64, %c0_65] : memref<2x1x32xf32, #tpu.memory_space<vmem>>, vector<1x1x32xf32>
    %110 = vector.shape_cast %109 : vector<1x1x32xf32> to vector<1x32xf32>
    %c0_66 = arith.constant 0 : index
    %c0_67 = arith.constant 0 : index
    %c0_68 = arith.constant 0 : index
    %111 = vector.load %arg19[%c0_66, %c0_67, %c0_68] : memref<2x1x32xf32, #tpu.memory_space<vmem>>, vector<1x1x32xf32>
    %112 = vector.shape_cast %111 : vector<1x1x32xf32> to vector<1x32xf32>
    %cst_69 = arith.constant dense<0.000000e+00> : vector<8xf32>
    %113 = vector.multi_reduction <add>, %108, %cst_69 [1] : vector<8x32xf32> to vector<8xf32>
    %114 = vector.shape_cast %113 : vector<8xf32> to vector<8x1xf32>
    %cst_70 = arith.constant 3.200000e+01 : f32
    %115 = vector.broadcast %cst_70 : f32 to vector<8x1xf32>
    %116 = arith.divf %114, %115 : vector<8x1xf32>
    %117 = vector.broadcast %116 : vector<8x1xf32> to vector<8x32xf32>
    %118 = arith.subf %108, %117 : vector<8x32xf32>
    %119 = arith.mulf %118, %118 : vector<8x32xf32>
    %cst_71 = arith.constant dense<0.000000e+00> : vector<8xf32>
    %120 = vector.multi_reduction <add>, %119, %cst_71 [1] : vector<8x32xf32> to vector<8xf32>
    %121 = vector.shape_cast %120 : vector<8xf32> to vector<8x1xf32>
    %cst_72 = arith.constant 3.200000e+01 : f32
    %122 = vector.broadcast %cst_72 : f32 to vector<8x1xf32>
    %123 = arith.divf %121, %122 : vector<8x1xf32>
    %124 = vector.broadcast %116 : vector<8x1xf32> to vector<8x32xf32>
    %125 = arith.subf %108, %124 : vector<8x32xf32>
    %cst_73 = arith.constant 9.99999974E-6 : f32
    %126 = vector.broadcast %cst_73 : f32 to vector<8x1xf32>
    %127 = arith.addf %123, %126 : vector<8x1xf32>
    %128 = math.rsqrt %127 : vector<8x1xf32>
    %129 = vector.broadcast %128 : vector<8x1xf32> to vector<8x32xf32>
    %130 = arith.mulf %125, %129 : vector<8x32xf32>
    %131 = vector.broadcast %110 : vector<1x32xf32> to vector<8x32xf32>
    %132 = arith.mulf %130, %131 : vector<8x32xf32>
    %133 = vector.broadcast %112 : vector<1x32xf32> to vector<8x32xf32>
    %134 = arith.addf %132, %133 : vector<8x32xf32>
    %c1 = arith.constant 1 : index
    %c0_74 = arith.constant 0 : index
    %c0_75 = arith.constant 0 : index
    %135 = vector.load %arg8[%c1, %c0_74, %c0_75] : memref<2x96x32xf32, #tpu.memory_space<vmem>>, vector<1x96x32xf32>
    %136 = vector.shape_cast %135 : vector<1x96x32xf32> to vector<96x32xf32>
    %cst_76 = arith.constant dense<0.000000e+00> : vector<8x96xf32>
    %137 = tpu.matmul %134, %136, %cst_76 {dimension_numbers = #tpu.dot_dimension_numbers<[1], [1], [0], [0], [0, 0, 1, 0], [], []>} : vector<8x32xf32>, vector<96x32xf32>, vector<8x96xf32> -> vector<8x96xf32>
    %c1_77 = arith.constant 1 : index
    %c0_78 = arith.constant 0 : index
    %c0_79 = arith.constant 0 : index
    %138 = vector.load %arg9[%c1_77, %c0_78, %c0_79] : memref<2x1x96xf32, #tpu.memory_space<vmem>>, vector<1x1x96xf32>
    %139 = vector.shape_cast %138 : vector<1x1x96xf32> to vector<1x96xf32>
    %140 = vector.broadcast %139 : vector<1x96xf32> to vector<8x96xf32>
    %141 = arith.addf %137, %140 : vector<8x96xf32>
    %142 = vector.extract_strided_slice %141 {offsets = [0, 0], sizes = [8, 16], strides = [1, 1]} : vector<8x96xf32> to vector<8x16xf32>
    %143 = vector.extract_strided_slice %141 {offsets = [0, 32], sizes = [8, 16], strides = [1, 1]} : vector<8x96xf32> to vector<8x16xf32>
    %144 = vector.extract_strided_slice %141 {offsets = [0, 64], sizes = [8, 16], strides = [1, 1]} : vector<8x96xf32> to vector<8x16xf32>
    %cst_80 = arith.constant dense<0.000000e+00> : vector<8x8xf32>
    %145 = tpu.matmul %142, %143, %cst_80 {dimension_numbers = #tpu.dot_dimension_numbers<[1], [1], [0], [0], [0, 0, 1, 0], [], []>} : vector<8x16xf32>, vector<8x16xf32>, vector<8x8xf32> -> vector<8x8xf32>
    %146 = arith.addf %145, %17 : vector<8x8xf32>
    %cst_81 = arith.constant dense<0xFF800000> : vector<8xf32>
    %147 = vector.multi_reduction <maximumf>, %146, %cst_81 [1] : vector<8x8xf32> to vector<8xf32>
    %148 = vector.shape_cast %147 : vector<8xf32> to vector<8x1xf32>
    %149 = vector.broadcast %148 : vector<8x1xf32> to vector<8x8xf32>
    %150 = arith.subf %146, %149 : vector<8x8xf32>
    %151 = math.exp %150 : vector<8x8xf32>
    %cst_82 = arith.constant dense<0.000000e+00> : vector<8xf32>
    %152 = vector.multi_reduction <add>, %151, %cst_82 [1] : vector<8x8xf32> to vector<8xf32>
    %153 = vector.shape_cast %152 : vector<8xf32> to vector<8x1xf32>
    %154 = tpu.reciprocal %153 {approx = true} : vector<8x1xf32> -> vector<8x1xf32>
    %155 = vector.broadcast %154 : vector<8x1xf32> to vector<8x8xf32>
    %156 = arith.mulf %151, %155 : vector<8x8xf32>
    %cst_83 = arith.constant dense<0.000000e+00> : vector<8x16xf32>
    %157 = tpu.matmul %156, %144, %cst_83 {dimension_numbers = #tpu.dot_dimension_numbers<[1], [0], [0], [1], [0, 0, 1, 1], [], []>} : vector<8x8xf32>, vector<8x16xf32>, vector<8x16xf32> -> vector<8x16xf32>
    %158 = vector.extract_strided_slice %141 {offsets = [0, 16], sizes = [8, 16], strides = [1, 1]} : vector<8x96xf32> to vector<8x16xf32>
    %159 = vector.extract_strided_slice %141 {offsets = [0, 48], sizes = [8, 16], strides = [1, 1]} : vector<8x96xf32> to vector<8x16xf32>
    %160 = vector.extract_strided_slice %141 {offsets = [0, 80], sizes = [8, 16], strides = [1, 1]} : vector<8x96xf32> to vector<8x16xf32>
    %cst_84 = arith.constant dense<0.000000e+00> : vector<8x8xf32>
    %161 = tpu.matmul %158, %159, %cst_84 {dimension_numbers = #tpu.dot_dimension_numbers<[1], [1], [0], [0], [0, 0, 1, 0], [], []>} : vector<8x16xf32>, vector<8x16xf32>, vector<8x8xf32> -> vector<8x8xf32>
    %162 = arith.addf %161, %17 : vector<8x8xf32>
    %cst_85 = arith.constant dense<0xFF800000> : vector<8xf32>
    %163 = vector.multi_reduction <maximumf>, %162, %cst_85 [1] : vector<8x8xf32> to vector<8xf32>
    %164 = vector.shape_cast %163 : vector<8xf32> to vector<8x1xf32>
    %165 = vector.broadcast %164 : vector<8x1xf32> to vector<8x8xf32>
    %166 = arith.subf %162, %165 : vector<8x8xf32>
    %167 = math.exp %166 : vector<8x8xf32>
    %cst_86 = arith.constant dense<0.000000e+00> : vector<8xf32>
    %168 = vector.multi_reduction <add>, %167, %cst_86 [1] : vector<8x8xf32> to vector<8xf32>
    %169 = vector.shape_cast %168 : vector<8xf32> to vector<8x1xf32>
    %170 = tpu.reciprocal %169 {approx = true} : vector<8x1xf32> -> vector<8x1xf32>
    %171 = vector.broadcast %170 : vector<8x1xf32> to vector<8x8xf32>
    %172 = arith.mulf %167, %171 : vector<8x8xf32>
    %cst_87 = arith.constant dense<0.000000e+00> : vector<8x16xf32>
    %173 = tpu.matmul %172, %160, %cst_87 {dimension_numbers = #tpu.dot_dimension_numbers<[1], [0], [0], [1], [0, 0, 1, 1], [], []>} : vector<8x8xf32>, vector<8x16xf32>, vector<8x16xf32> -> vector<8x16xf32>
    %174 = tpu.concatenate %157, %173 in 1 : vector<8x16xf32>, vector<8x16xf32> -> vector<8x32xf32>
    %c1_88 = arith.constant 1 : index
    %c0_89 = arith.constant 0 : index
    %c0_90 = arith.constant 0 : index
    %175 = vector.load %arg10[%c1_88, %c0_89, %c0_90] : memref<2x32x32xf32, #tpu.memory_space<vmem>>, vector<1x32x32xf32>
    %176 = vector.shape_cast %175 : vector<1x32x32xf32> to vector<32x32xf32>
    %cst_91 = arith.constant dense<0.000000e+00> : vector<8x32xf32>
    %177 = tpu.matmul %174, %176, %cst_91 {dimension_numbers = #tpu.dot_dimension_numbers<[1], [1], [0], [0], [0, 0, 1, 0], [], []>} : vector<8x32xf32>, vector<32x32xf32>, vector<8x32xf32> -> vector<8x32xf32>
    %c1_92 = arith.constant 1 : index
    %c0_93 = arith.constant 0 : index
    %c0_94 = arith.constant 0 : index
    %178 = vector.load %arg11[%c1_92, %c0_93, %c0_94] : memref<2x1x32xf32, #tpu.memory_space<vmem>>, vector<1x1x32xf32>
    %179 = vector.shape_cast %178 : vector<1x1x32xf32> to vector<1x32xf32>
    %180 = vector.broadcast %179 : vector<1x32xf32> to vector<8x32xf32>
    %181 = arith.addf %177, %180 : vector<8x32xf32>
    %182 = arith.addf %134, %181 : vector<8x32xf32>
    %c1_95 = arith.constant 1 : index
    %c0_96 = arith.constant 0 : index
    %c0_97 = arith.constant 0 : index
    %183 = vector.load %arg12[%c1_95, %c0_96, %c0_97] : memref<2x1x32xf32, #tpu.memory_space<vmem>>, vector<1x1x32xf32>
    %184 = vector.shape_cast %183 : vector<1x1x32xf32> to vector<1x32xf32>
    %c1_98 = arith.constant 1 : index
    %c0_99 = arith.constant 0 : index
    %c0_100 = arith.constant 0 : index
    %185 = vector.load %arg13[%c1_98, %c0_99, %c0_100] : memref<2x1x32xf32, #tpu.memory_space<vmem>>, vector<1x1x32xf32>
    %186 = vector.shape_cast %185 : vector<1x1x32xf32> to vector<1x32xf32>
    %cst_101 = arith.constant dense<0.000000e+00> : vector<8xf32>
    %187 = vector.multi_reduction <add>, %182, %cst_101 [1] : vector<8x32xf32> to vector<8xf32>
    %188 = vector.shape_cast %187 : vector<8xf32> to vector<8x1xf32>
    %cst_102 = arith.constant 3.200000e+01 : f32
    %189 = vector.broadcast %cst_102 : f32 to vector<8x1xf32>
    %190 = arith.divf %188, %189 : vector<8x1xf32>
    %191 = vector.broadcast %190 : vector<8x1xf32> to vector<8x32xf32>
    %192 = arith.subf %182, %191 : vector<8x32xf32>
    %193 = arith.mulf %192, %192 : vector<8x32xf32>
    %cst_103 = arith.constant dense<0.000000e+00> : vector<8xf32>
    %194 = vector.multi_reduction <add>, %193, %cst_103 [1] : vector<8x32xf32> to vector<8xf32>
    %195 = vector.shape_cast %194 : vector<8xf32> to vector<8x1xf32>
    %cst_104 = arith.constant 3.200000e+01 : f32
    %196 = vector.broadcast %cst_104 : f32 to vector<8x1xf32>
    %197 = arith.divf %195, %196 : vector<8x1xf32>
    %198 = vector.broadcast %190 : vector<8x1xf32> to vector<8x32xf32>
    %199 = arith.subf %182, %198 : vector<8x32xf32>
    %cst_105 = arith.constant 9.99999974E-6 : f32
    %200 = vector.broadcast %cst_105 : f32 to vector<8x1xf32>
    %201 = arith.addf %197, %200 : vector<8x1xf32>
    %202 = math.rsqrt %201 : vector<8x1xf32>
    %203 = vector.broadcast %202 : vector<8x1xf32> to vector<8x32xf32>
    %204 = arith.mulf %199, %203 : vector<8x32xf32>
    %205 = vector.broadcast %184 : vector<1x32xf32> to vector<8x32xf32>
    %206 = arith.mulf %204, %205 : vector<8x32xf32>
    %207 = vector.broadcast %186 : vector<1x32xf32> to vector<8x32xf32>
    %208 = arith.addf %206, %207 : vector<8x32xf32>
    %c1_106 = arith.constant 1 : index
    %c0_107 = arith.constant 0 : index
    %c0_108 = arith.constant 0 : index
    %209 = vector.load %arg14[%c1_106, %c0_107, %c0_108] : memref<2x32x32xf32, #tpu.memory_space<vmem>>, vector<1x32x32xf32>
    %210 = vector.shape_cast %209 : vector<1x32x32xf32> to vector<32x32xf32>
    %cst_109 = arith.constant dense<0.000000e+00> : vector<8x32xf32>
    %211 = tpu.matmul %208, %210, %cst_109 {dimension_numbers = #tpu.dot_dimension_numbers<[1], [1], [0], [0], [0, 0, 1, 0], [], []>} : vector<8x32xf32>, vector<32x32xf32>, vector<8x32xf32> -> vector<8x32xf32>
    %c1_110 = arith.constant 1 : index
    %c0_111 = arith.constant 0 : index
    %c0_112 = arith.constant 0 : index
    %212 = vector.load %arg15[%c1_110, %c0_111, %c0_112] : memref<2x1x32xf32, #tpu.memory_space<vmem>>, vector<1x1x32xf32>
    %213 = vector.shape_cast %212 : vector<1x1x32xf32> to vector<1x32xf32>
    %214 = vector.broadcast %213 : vector<1x32xf32> to vector<8x32xf32>
    %215 = arith.addf %211, %214 : vector<8x32xf32>
    %cst_113 = arith.constant 0.000000e+00 : f32
    %216 = vector.broadcast %cst_113 : f32 to vector<8x32xf32>
    %217 = arith.maximumf %215, %216 : vector<8x32xf32>
    %c1_114 = arith.constant 1 : index
    %c0_115 = arith.constant 0 : index
    %c0_116 = arith.constant 0 : index
    %218 = vector.load %arg16[%c1_114, %c0_115, %c0_116] : memref<2x32x32xf32, #tpu.memory_space<vmem>>, vector<1x32x32xf32>
    %219 = vector.shape_cast %218 : vector<1x32x32xf32> to vector<32x32xf32>
    %cst_117 = arith.constant dense<0.000000e+00> : vector<8x32xf32>
    %220 = tpu.matmul %217, %219, %cst_117 {dimension_numbers = #tpu.dot_dimension_numbers<[1], [1], [0], [0], [0, 0, 1, 0], [], []>} : vector<8x32xf32>, vector<32x32xf32>, vector<8x32xf32> -> vector<8x32xf32>
    %c1_118 = arith.constant 1 : index
    %c0_119 = arith.constant 0 : index
    %c0_120 = arith.constant 0 : index
    %221 = vector.load %arg17[%c1_118, %c0_119, %c0_120] : memref<2x1x32xf32, #tpu.memory_space<vmem>>, vector<1x1x32xf32>
    %222 = vector.shape_cast %221 : vector<1x1x32xf32> to vector<1x32xf32>
    %223 = vector.broadcast %222 : vector<1x32xf32> to vector<8x32xf32>
    %224 = arith.addf %220, %223 : vector<8x32xf32>
    %225 = arith.addf %208, %224 : vector<8x32xf32>
    %c1_121 = arith.constant 1 : index
    %c0_122 = arith.constant 0 : index
    %c0_123 = arith.constant 0 : index
    %226 = vector.load %arg18[%c1_121, %c0_122, %c0_123] : memref<2x1x32xf32, #tpu.memory_space<vmem>>, vector<1x1x32xf32>
    %227 = vector.shape_cast %226 : vector<1x1x32xf32> to vector<1x32xf32>
    %c1_124 = arith.constant 1 : index
    %c0_125 = arith.constant 0 : index
    %c0_126 = arith.constant 0 : index
    %228 = vector.load %arg19[%c1_124, %c0_125, %c0_126] : memref<2x1x32xf32, #tpu.memory_space<vmem>>, vector<1x1x32xf32>
    %229 = vector.shape_cast %228 : vector<1x1x32xf32> to vector<1x32xf32>
    %cst_127 = arith.constant dense<0.000000e+00> : vector<8xf32>
    %230 = vector.multi_reduction <add>, %225, %cst_127 [1] : vector<8x32xf32> to vector<8xf32>
    %231 = vector.shape_cast %230 : vector<8xf32> to vector<8x1xf32>
    %cst_128 = arith.constant 3.200000e+01 : f32
    %232 = vector.broadcast %cst_128 : f32 to vector<8x1xf32>
    %233 = arith.divf %231, %232 : vector<8x1xf32>
    %234 = vector.broadcast %233 : vector<8x1xf32> to vector<8x32xf32>
    %235 = arith.subf %225, %234 : vector<8x32xf32>
    %236 = arith.mulf %235, %235 : vector<8x32xf32>
    %cst_129 = arith.constant dense<0.000000e+00> : vector<8xf32>
    %237 = vector.multi_reduction <add>, %236, %cst_129 [1] : vector<8x32xf32> to vector<8xf32>
    %238 = vector.shape_cast %237 : vector<8xf32> to vector<8x1xf32>
    %cst_130 = arith.constant 3.200000e+01 : f32
    %239 = vector.broadcast %cst_130 : f32 to vector<8x1xf32>
    %240 = arith.divf %238, %239 : vector<8x1xf32>
    %241 = vector.broadcast %233 : vector<8x1xf32> to vector<8x32xf32>
    %242 = arith.subf %225, %241 : vector<8x32xf32>
    %cst_131 = arith.constant 9.99999974E-6 : f32
    %243 = vector.broadcast %cst_131 : f32 to vector<8x1xf32>
    %244 = arith.addf %240, %243 : vector<8x1xf32>
    %245 = math.rsqrt %244 : vector<8x1xf32>
    %246 = vector.broadcast %245 : vector<8x1xf32> to vector<8x32xf32>
    %247 = arith.mulf %242, %246 : vector<8x32xf32>
    %248 = vector.broadcast %227 : vector<1x32xf32> to vector<8x32xf32>
    %249 = arith.mulf %247, %248 : vector<8x32xf32>
    %250 = vector.broadcast %229 : vector<1x32xf32> to vector<8x32xf32>
    %251 = arith.addf %249, %250 : vector<8x32xf32>
    %cst_132 = arith.constant dense<0.000000e+00> : vector<32xf32>
    %252 = vector.multi_reduction <add>, %251, %cst_132 [0] : vector<8x32xf32> to vector<32xf32>
    %253 = vector.shape_cast %252 : vector<32xf32> to vector<1x32xf32>
    %cst_133 = arith.constant 8.000000e+00 : f32
    %254 = vector.broadcast %cst_133 : f32 to vector<1x32xf32>
    %255 = arith.divf %253, %254 : vector<1x32xf32>
    %c0_134 = arith.constant 0 : index
    %c0_135 = arith.constant 0 : index
    %256 = vector.load %arg20[%c0_134, %c0_135] : memref<10x32xf32, #tpu.memory_space<vmem>>, vector<10x32xf32>
    %cst_136 = arith.constant dense<0.000000e+00> : vector<1x10xf32>
    %257 = tpu.matmul %255, %256, %cst_136 {dimension_numbers = #tpu.dot_dimension_numbers<[1], [1], [0], [0], [0, 0, 1, 0], [], []>} : vector<1x32xf32>, vector<10x32xf32>, vector<1x10xf32> -> vector<1x10xf32>
    %c0_137 = arith.constant 0 : index
    %c0_138 = arith.constant 0 : index
    %258 = vector.load %arg21[%c0_137, %c0_138] : memref<1x10xf32, #tpu.memory_space<vmem>>, vector<1x10xf32>
    %259 = arith.addf %257, %258 : vector<1x10xf32>
    %c0_139 = arith.constant 0 : index
    %c0_140 = arith.constant 0 : index
    %c0_141 = arith.constant 0 : index
    %260 = vector.load %arg22[%c0_139, %c0_140, %c0_141] : memref<1x1x10xf32, #tpu.memory_space<vmem>>, vector<1x1x10xf32>
    %261 = vector.shape_cast %260 : vector<1x1x10xf32> to vector<1x10xf32>
    %262 = vector.shape_cast %259 : vector<1x10xf32> to vector<1x1x10xf32>
    tpu.vector_store %arg22[%c0_139, %c0_140, %c0_141], %262 {strides = array<i32>} : memref<1x1x10xf32, #tpu.memory_space<vmem>>, vector<1x1x10xf32>,
    return
  }
  func.func @transform_0(%arg0: i32) -> (i32, i32, i32) {
    %c0_i32 = arith.constant 0 : i32
    %c0_i32_0 = arith.constant 0 : i32
    %c0_i32_1 = arith.constant 0 : i32
    return %arg0, %c0_i32, %c0_i32_0 : i32, i32, i32
  }
  func.func @transform_1(%arg0: i32) -> (i32, i32) {
    %c0_i32 = arith.constant 0 : i32
    %c0_i32_0 = arith.constant 0 : i32
    %c0_i32_1 = arith.constant 0 : i32
    return %c0_i32, %c0_i32_0 : i32, i32
  }
  func.func @transform_2(%arg0: i32) -> (i32, i32) {
    %c0_i32 = arith.constant 0 : i32
    %c0_i32_0 = arith.constant 0 : i32
    %c0_i32_1 = arith.constant 0 : i32
    return %c0_i32, %c0_i32_0 : i32, i32
  }
  func.func @transform_3(%arg0: i32) -> (i32, i32) {
    %c0_i32 = arith.constant 0 : i32
    %c0_i32_0 = arith.constant 0 : i32
    %c0_i32_1 = arith.constant 0 : i32
    return %c0_i32, %c0_i32_0 : i32, i32
  }
  func.func @transform_4(%arg0: i32) -> (i32, i32) {
    %c0_i32 = arith.constant 0 : i32
    %c0_i32_0 = arith.constant 0 : i32
    %c0_i32_1 = arith.constant 0 : i32
    return %c0_i32, %c0_i32_0 : i32, i32
  }
  func.func @transform_5(%arg0: i32) -> (i32, i32) {
    %c0_i32 = arith.constant 0 : i32
    %c0_i32_0 = arith.constant 0 : i32
    %c0_i32_1 = arith.constant 0 : i32
    return %c0_i32, %c0_i32_0 : i32, i32
  }
  func.func @transform_6(%arg0: i32) -> (i32, i32) {
    %c0_i32 = arith.constant 0 : i32
    %c0_i32_0 = arith.constant 0 : i32
    %c0_i32_1 = arith.constant 0 : i32
    return %c0_i32, %c0_i32_0 : i32, i32
  }
  func.func @transform_7(%arg0: i32) -> (i32, i32, i32) {
    %c0_i32 = arith.constant 0 : i32
    %c0_i32_0 = arith.constant 0 : i32
    %c0_i32_1 = arith.constant 0 : i32
    %c0_i32_2 = arith.constant 0 : i32
    return %c0_i32, %c0_i32_0, %c0_i32_1 : i32, i32, i32
  }
  func.func @transform_8(%arg0: i32) -> (i32, i32, i32) {
    %c0_i32 = arith.constant 0 : i32
    %c0_i32_0 = arith.constant 0 : i32
    %c0_i32_1 = arith.constant 0 : i32
    %c0_i32_2 = arith.constant 0 : i32
    return %c0_i32, %c0_i32_0, %c0_i32_1 : i32, i32, i32
  }
  func.func @transform_9(%arg0: i32) -> (i32, i32, i32) {
    %c0_i32 = arith.constant 0 : i32
    %c0_i32_0 = arith.constant 0 : i32
    %c0_i32_1 = arith.constant 0 : i32
    %c0_i32_2 = arith.constant 0 : i32
    return %c0_i32, %c0_i32_0, %c0_i32_1 : i32, i32, i32
  }
  func.func @transform_10(%arg0: i32) -> (i32, i32, i32) {
    %c0_i32 = arith.constant 0 : i32
    %c0_i32_0 = arith.constant 0 : i32
    %c0_i32_1 = arith.constant 0 : i32
    %c0_i32_2 = arith.constant 0 : i32
    return %c0_i32, %c0_i32_0, %c0_i32_1 : i32, i32, i32
  }
  func.func @transform_11(%arg0: i32) -> (i32, i32, i32) {
    %c0_i32 = arith.constant 0 : i32
    %c0_i32_0 = arith.constant 0 : i32
    %c0_i32_1 = arith.constant 0 : i32
    %c0_i32_2 = arith.constant 0 : i32
    return %c0_i32, %c0_i32_0, %c0_i32_1 : i32, i32, i32
  }
  func.func @transform_12(%arg0: i32) -> (i32, i32, i32) {
    %c0_i32 = arith.constant 0 : i32
    %c0_i32_0 = arith.constant 0 : i32
    %c0_i32_1 = arith.constant 0 : i32
    %c0_i32_2 = arith.constant 0 : i32
    return %c0_i32, %c0_i32_0, %c0_i32_1 : i32, i32, i32
  }
  func.func @transform_13(%arg0: i32) -> (i32, i32, i32) {
    %c0_i32 = arith.constant 0 : i32
    %c0_i32_0 = arith.constant 0 : i32
    %c0_i32_1 = arith.constant 0 : i32
    %c0_i32_2 = arith.constant 0 : i32
    return %c0_i32, %c0_i32_0, %c0_i32_1 : i32, i32, i32
  }
  func.func @transform_14(%arg0: i32) -> (i32, i32, i32) {
    %c0_i32 = arith.constant 0 : i32
    %c0_i32_0 = arith.constant 0 : i32
    %c0_i32_1 = arith.constant 0 : i32
    %c0_i32_2 = arith.constant 0 : i32
    return %c0_i32, %c0_i32_0, %c0_i32_1 : i32, i32, i32
  }
  func.func @transform_15(%arg0: i32) -> (i32, i32, i32) {
    %c0_i32 = arith.constant 0 : i32
    %c0_i32_0 = arith.constant 0 : i32
    %c0_i32_1 = arith.constant 0 : i32
    %c0_i32_2 = arith.constant 0 : i32
    return %c0_i32, %c0_i32_0, %c0_i32_1 : i32, i32, i32
  }
  func.func @transform_16(%arg0: i32) -> (i32, i32, i32) {
    %c0_i32 = arith.constant 0 : i32
    %c0_i32_0 = arith.constant 0 : i32
    %c0_i32_1 = arith.constant 0 : i32
    %c0_i32_2 = arith.constant 0 : i32
    return %c0_i32, %c0_i32_0, %c0_i32_1 : i32, i32, i32
  }
  func.func @transform_17(%arg0: i32) -> (i32, i32, i32) {
    %c0_i32 = arith.constant 0 : i32
    %c0_i32_0 = arith.constant 0 : i32
    %c0_i32_1 = arith.constant 0 : i32
    %c0_i32_2 = arith.constant 0 : i32
    return %c0_i32, %c0_i32_0, %c0_i32_1 : i32, i32, i32
  }
  func.func @transform_18(%arg0: i32) -> (i32, i32, i32) {
    %c0_i32 = arith.constant 0 : i32
    %c0_i32_0 = arith.constant 0 : i32
    %c0_i32_1 = arith.constant 0 : i32
    %c0_i32_2 = arith.constant 0 : i32
    return %c0_i32, %c0_i32_0, %c0_i32_1 : i32, i32, i32
  }
  func.func @transform_19(%arg0: i32) -> (i32, i32) {
    %c0_i32 = arith.constant 0 : i32
    %c0_i32_0 = arith.constant 0 : i32
    %c0_i32_1 = arith.constant 0 : i32
    return %c0_i32, %c0_i32_0 : i32, i32
  }
  func.func @transform_20(%arg0: i32) -> (i32, i32) {
    %c0_i32 = arith.constant 0 : i32
    %c0_i32_0 = arith.constant 0 : i32
    %c0_i32_1 = arith.constant 0 : i32
    return %c0_i32, %c0_i32_0 : i32, i32
  }
  func.func @transform_21(%arg0: i32) -> (i32, i32, i32) {
    %c0_i32 = arith.constant 0 : i32
    %c0_i32_0 = arith.constant 0 : i32
    %c0_i32_1 = arith.constant 0 : i32
    return %arg0, %c0_i32, %c0_i32_0 : i32, i32, i32
  }
}

</mosaic_0001>

<llo_original>
// kernel: _lambda_.1
$region0: #{_lambda_.1}
  #allocation0 [shape = 'u32[]', space=smem, size = 0x4, offset = 0x4, fixed_abs, tag = 'smem constant byte address 0x4 - core index']
  #allocation1 [shape = 'u32[144,128]{1,0:T(1,128)}', space=vmem, size = 0x12000, scoped, tag = 'internal scratch']
  %s0 = inlined_call_operand.hbm [shape: f32[2,8,32], index: 0, kind: input, shape index: {}]
  %s1 = inlined_call_operand.hbm [shape: f32[8,32], index: 1, kind: input, shape index: {}]
  %s2 = inlined_call_operand.hbm [shape: f32[8,32], index: 2, kind: input, shape index: {}]
  %s3 = inlined_call_operand.hbm [shape: f32[8,32], index: 3, kind: input, shape index: {}]
  %s4 = inlined_call_operand.hbm [shape: f32[8,32], index: 4, kind: input, shape index: {}]
  %s5 = inlined_call_operand.hbm [shape: f32[8,32], index: 5, kind: input, shape index: {}]
  %s6 = inlined_call_operand.hbm [shape: f32[8,8], index: 6, kind: input, shape index: {}]
  %s7 = inlined_call_operand.hbm [shape: f32[2,96,32], index: 7, kind: input, shape index: {}]
  %s8 = inlined_call_operand.hbm [shape: f32[2,1,96], index: 8, kind: input, shape index: {}]
  %s9 = inlined_call_operand.hbm [shape: f32[2,32,32], index: 9, kind: input, shape index: {}]
  %s10 = inlined_call_operand.hbm [shape: f32[2,1,32], index: 10, kind: input, shape index: {}]
  %s11 = inlined_call_operand.vmem [shape: f32[2,1,32], index: 11, kind: input, shape index: {}, may-alias: {11,17}]
  %s12 = inlined_call_operand.vmem [shape: f32[2,1,32], index: 12, kind: input, shape index: {}, may-alias: {12,18}]
  %s13 = inlined_call_operand.hbm [shape: f32[2,32,32], index: 13, kind: input, shape index: {}]
  %s14 = inlined_call_operand.vmem [shape: f32[2,1,32], index: 14, kind: input, shape index: {}]
  %s15 = inlined_call_operand.vmem [shape: f32[2,32,32], index: 15, kind: input, shape index: {}]
  %s16 = inlined_call_operand.vmem [shape: f32[2,1,32], index: 16, kind: input, shape index: {}]
  %s17 = inlined_call_operand.vmem [shape: f32[2,1,32], index: 17, kind: input, shape index: {}, may-alias: {11,17}]
  %s18 = inlined_call_operand.vmem [shape: f32[2,1,32], index: 18, kind: input, shape index: {}, may-alias: {12,18}]
  %s19 = inlined_call_operand.hbm [shape: f32[10,32], index: 19, kind: input, shape index: {}]
  %s20 = inlined_call_operand.vmem [shape: f32[1,10], index: 20, kind: input, shape index: {}]
  %s21 = inlined_call_operand.hbm [shape: f32[2,1,10], index: 21, kind: output, shape index: {}]
  %s22 = sld [smem:[#allocation0]]
  $region169: #{_lambda_.1} parent=0
    _
  %s24 = ssub.s32 1, %s22
  %s25 = scalar_select 0, %s24, %s22
  $region1: #{_lambda_.1} parent=0
    #allocation2 [shape = 'u8[8192]{0}', space=vmem, size = 0x2000, scoped, tag = 'input window, operand 0']
    #allocation3 [shape = 's32[2]{0}', space=sflag, size = 0x8, scoped, tag = 'scoped memory for _lambda_.1']
    #allocation4 [shape = 's32[2]{0}', space=sflag, size = 0x8, scoped, tag = 'scoped memory for _lambda_.1']
    #allocation5 [shape = 'u8[4096]{0}', space=vmem, size = 0x1000, scoped, tag = 'input window, operand 1, single buffered']
    #allocation6 [shape = 's32[1]{0}', space=sflag, size = 0x4, scoped, tag = 'scoped memory for _lambda_.1']
    #allocation7 [shape = 'u8[4096]{0}', space=vmem, size = 0x1000, scoped, tag = 'input window, operand 2, single buffered']
    #allocation8 [shape = 'u8[4096]{0}', space=vmem, size = 0x1000, scoped, tag = 'input window, operand 3, single buffered']
    #allocation9 [shape = 's32[1]{0}', space=sflag, size = 0x4, scoped, tag = 'scoped memory for _lambda_.1']
    #allocation10 [shape = 'u8[4096]{0}', space=vmem, size = 0x1000, scoped, tag = 'input window, operand 4, single buffered']
    #allocation11 [shape = 'u8[4096]{0}', space=vmem, size = 0x1000, scoped, tag = 'input window, operand 5, single buffered']
    #allocation12 [shape = 's32[1]{0}', space=sflag, size = 0x4, scoped, tag = 'scoped memory for _lambda_.1']
    #allocation13 [shape = 'u8[4096]{0}', space=vmem, size = 0x1000, scoped, tag = 'input window, operand 6, single buffered']
    #allocation14 [shape = 'u8[98304]{0}', space=vmem, size = 0x18000, scoped, tag = 'input window, operand 7, single buffered']
    #allocation15 [shape = 's32[1]{0}', space=sflag, size = 0x4, scoped, tag = 'scoped memory for _lambda_.1']
    #allocation16 [shape = 'u8[1024]{0}', space=vmem, size = 0x400, scoped, tag = 'input window, operand 8, single buffered']
    #allocation17 [shape = 'u8[32768]{0}', space=vmem, size = 0x8000, scoped, tag = 'input window, operand 9, single buffered']
    #allocation18 [shape = 's32[1]{0}', space=sflag, size = 0x4, scoped, tag = 'scoped memory for _lambda_.1']
    #allocation19 [shape = 'u8[1024]{0}', space=vmem, size = 0x400, scoped, tag = 'input window, operand 10, single buffered']
    #allocation20 [shape = 'u8[32768]{0}', space=vmem, size = 0x8000, scoped, tag = 'input window, operand 13, single buffered']
    #allocation21 [shape = 's32[1]{0}', space=sflag, size = 0x4, scoped, tag = 'scoped memory for _lambda_.1']
    #allocation22 [shape = 'u8[8192]{0}', space=vmem, size = 0x2000, scoped, tag = 'input window, operand 19, single buffered']
    #allocation23 [shape = 'u8[1024]{0}', space=vmem, size = 0x400, scoped, tag = 'output window, operand 0']
    %26 = vsyncpa [#allocation3], 0
    %s27 = scalar_lea.sflag [#allocation3], 1
    %28 = vsyncpa %s27, 0
    %29 = vsyncpa [#allocation6], 0
    %30 = vsyncpa [#allocation9], 0
    %31 = vsyncpa [#allocation12], 0
    %32 = vsyncpa [#allocation15], 0
    %33 = vsyncpa [#allocation18], 0
    %34 = vsyncpa [#allocation21], 0
    %35 = vsyncpa [#allocation4], 0
    %s36 = scalar_lea.sflag [#allocation4], 1
    %37 = vsyncpa %s36, 0
    loop: start=0, step=1, limit=4
    $region2: #{_lambda_.1} parent=1 // loop_pre_header
      _
    $region3: #{_lambda_.1} parent=1 // loop_header
      %s39 = sphi 0, %s43
      %p40 = scmp.ge.s32.totalorder %s39, 4
      %s49 = sphi 0, %s51
      %s52 = sphi 0, %s49
      %s53 = sphi 0, %s52
      %s69 = sphi 0, %s53
      %s73 = sphi 0, %s73
      %s75 = sphi 0, %s73
      %s76 = sphi 0, %s75
      %s90 = sphi 0, %s76
      %s94 = sphi 0, %s94
      %s96 = sphi 0, %s94
      %s97 = sphi 0, %s96
      %s111 = sphi 0, %s97
      %s115 = sphi 0, %s115
      %s117 = sphi 0, %s115
      %s118 = sphi 0, %s117
      %s132 = sphi 0, %s118
      %s136 = sphi 0, %s136
      %s138 = sphi 0, %s136
      %s139 = sphi 0, %s138
      %s153 = sphi 0, %s139
      %s157 = sphi 0, %s157
      %s159 = sphi 0, %s157
      %s160 = sphi 0, %s159
      %s174 = sphi 0, %s160
      %s178 = sphi 0, %s178
      %s180 = sphi 0, %s178
      %s181 = sphi 0, %s180
      %s195 = sphi 0, %s181
      %s199 = sphi 0, %s199
      %s201 = sphi 0, %s199
      %s202 = sphi 0, %s201
      %s216 = sphi 0, %s202
      %s220 = sphi 0, %s220
      %s222 = sphi 0, %s220
      %s223 = sphi 0, %s222
      %s237 = sphi 0, %s223
      %s241 = sphi 0, %s241
      %s243 = sphi 0, %s241
      %s244 = sphi 0, %s243
      %s258 = sphi 0, %s244
      %s262 = sphi 0, %s262
      %s264 = sphi 0, %s262
      %s265 = sphi 0, %s264
      %s279 = sphi 0, %s265
      %s283 = sphi 0, %s283
      %s285 = sphi 0, %s283
      %s286 = sphi 0, %s285
      %s300 = sphi 0, %s286
      %s304 = sphi 0, %s304
      %s306 = sphi 0, %s304
      %s307 = sphi 0, %s306
      %s321 = sphi 0, %s307
      %s325 = sphi 0, %s325
      %s327 = sphi 0, %s325
      %s328 = sphi 0, %s327
      %s342 = sphi 0, %s328
      %s346 = sphi 0, %s346
      %s348 = sphi 0, %s346
      %s349 = sphi 0, %s348
      %s363 = sphi 0, %s349
      %s367 = sphi 0, %s367
      %s369 = sphi 0, %s367
      %s370 = sphi 0, %s369
      %s384 = sphi 0, %s370
      %s388 = sphi 0, %s388
      %s390 = sphi 0, %s388
      %s391 = sphi 0, %s390
      %s405 = sphi 0, %s391
      %s409 = sphi 0, %s409
      %s411 = sphi 0, %s409
      %s412 = sphi 0, %s411
      %s426 = sphi 0, %s412
      %s430 = sphi 0, %s430
      %s432 = sphi 0, %s430
      %s433 = sphi 0, %s432
      %s447 = sphi 0, %s433
      %s451 = sphi 0, %s451
      %s453 = sphi 0, %s451
      %s454 = sphi 0, %s453
      %s468 = sphi 0, %s454
      %s472 = sphi 0, %s472
      %s474 = sphi 0, %s472
      %s475 = sphi 0, %s474
      %s489 = sphi 0, %s475
      %s495 = sphi 0, %s497
      %s498 = sphi 0, %s495
      %s499 = sphi 0, %s498
      %s515 = sphi 0, %s499
    $region4: #{_lambda_.1} parent=1 // loop_header_branch
      %42 = sbr.rel (%p40) target = $region8
    $region5: #{_lambda_.1} parent=1 // loop_body
      %s44 = ssub.s32 %s39, 1
      %s45 = ssub.s32 %s39, 2
      %s46 = sadd.s32 %s39, 1
      %s47 = ssub.s32 %s39, %s46
      %p48 = scmp.eq.s32.totalorder %s47, 0
      %s50 = sadd.s32 %s49, 1
      %s51 = scalar_select %p48, %s49, %s50
      %p54 = pneg %p48
      %p55 = scmp.eq.s32.totalorder %s39, 1
      %p56 = por %p54, %p55
      %p57 = scmp.ne.s32.totalorder %s49, %s52
      %p58 = scmp.eq.s32.totalorder %s39, 0
      %p59 = por %p57, %p58
      %p60 = scmp.ne.s32.totalorder %s49, %s52
      %p61 = scmp.eq.s32.totalorder %s44, 1
      %p62 = por %p60, %p61
      %p63 = scmp.ne.s32.totalorder %s52, %s53
      %p64 = scmp.eq.s32.totalorder %s44, 0
      %p65 = por %p63, %p64
      %p66 = scmp.ne.s32.totalorder %s52, %s53
      %p67 = scmp.eq.s32.totalorder %s45, 1
      %p68 = por %p66, %p67
      %p70 = scmp.ne.s32.totalorder %s53, %s69
      %p71 = scmp.eq.s32.totalorder %s45, 0
      %p72 = por %p70, %p71
      %s74 = sadd.s32 %s73, 1
      %p77 = scmp.eq.s32.totalorder %s39, 1
      %p78 = scmp.ne.s32.totalorder %s73, %s75
      %p79 = scmp.eq.s32.totalorder %s39, 0
      %p80 = por %p78, %p79
      %p81 = scmp.ne.s32.totalorder %s73, %s75
      %p82 = scmp.eq.s32.totalorder %s44, 1
      %p83 = por %p81, %p82
      %p84 = scmp.ne.s32.totalorder %s75, %s76
      %p85 = scmp.eq.s32.totalorder %s44, 0
      %p86 = por %p84, %p85
      %p87 = scmp.ne.s32.totalorder %s75, %s76
      %p88 = scmp.eq.s32.totalorder %s45, 1
      %p89 = por %p87, %p88
      %p91 = scmp.ne.s32.totalorder %s76, %s90
      %p92 = scmp.eq.s32.totalorder %s45, 0
      %p93 = por %p91, %p92
      %s95 = sadd.s32 %s94, 1
      %p98 = scmp.eq.s32.totalorder %s39, 1
      %p99 = scmp.ne.s32.totalorder %s94, %s96
      %p100 = scmp.eq.s32.totalorder %s39, 0
      %p101 = por %p99, %p100
      %p102 = scmp.ne.s32.totalorder %s94, %s96
      %p103 = scmp.eq.s32.totalorder %s44, 1
      %p104 = por %p102, %p103
      %p105 = scmp.ne.s32.totalorder %s96, %s97
      %p106 = scmp.eq.s32.totalorder %s44, 0
      %p107 = por %p105, %p106
      %p108 = scmp.ne.s32.totalorder %s96, %s97
      %p109 = scmp.eq.s32.totalorder %s45, 1
      %p110 = por %p108, %p109
      %p112 = scmp.ne.s32.totalorder %s97, %s111
      %p113 = scmp.eq.s32.totalorder %s45, 0
      %p114 = por %p112, %p113
      %s116 = sadd.s32 %s115, 1
      %p119 = scmp.eq.s32.totalorder %s39, 1
      %p120 = scmp.ne.s32.totalorder %s115, %s117
      %p121 = scmp.eq.s32.totalorder %s39, 0
      %p122 = por %p120, %p121
      %p123 = scmp.ne.s32.totalorder %s115, %s117
      %p124 = scmp.eq.s32.totalorder %s44, 1
      %p125 = por %p123, %p124
      %p126 = scmp.ne.s32.totalorder %s117, %s118
      %p127 = scmp.eq.s32.totalorder %s44, 0
      %p128 = por %p126, %p127
      %p129 = scmp.ne.s32.totalorder %s117, %s118
      %p130 = scmp.eq.s32.totalorder %s45, 1
      %p131 = por %p129, %p130
      %p133 = scmp.ne.s32.totalorder %s118, %s132
      %p134 = scmp.eq.s32.totalorder %s45, 0
      %p135 = por %p133, %p134
      %s137 = sadd.s32 %s136, 1
      %p140 = scmp.eq.s32.totalorder %s39, 1
      %p141 = scmp.ne.s32.totalorder %s136, %s138
      %p142 = scmp.eq.s32.totalorder %s39, 0
      %p143 = por %p141, %p142
      %p144 = scmp.ne.s32.totalorder %s136, %s138
      %p145 = scmp.eq.s32.totalorder %s44, 1
      %p146 = por %p144, %p145
      %p147 = scmp.ne.s32.totalorder %s138, %s139
      %p148 = scmp.eq.s32.totalorder %s44, 0
      %p149 = por %p147, %p148
      %p150 = scmp.ne.s32.totalorder %s138, %s139
      %p151 = scmp.eq.s32.totalorder %s45, 1
      %p152 = por %p150, %p151
      %p154 = scmp.ne.s32.totalorder %s139, %s153
      %p155 = scmp.eq.s32.totalorder %s45, 0
      %p156 = por %p154, %p155
      %s158 = sadd.s32 %s157, 1
      %p161 = scmp.eq.s32.totalorder %s39, 1
      %p162 = scmp.ne.s32.totalorder %s157, %s159
      %p163 = scmp.eq.s32.totalorder %s39, 0
      %p164 = por %p162, %p163
      %p165 = scmp.ne.s32.totalorder %s157, %s159
      %p166 = scmp.eq.s32.totalorder %s44, 1
      %p167 = por %p165, %p166
      %p168 = scmp.ne.s32.totalorder %s159, %s160
      %p169 = scmp.eq.s32.totalorder %s44, 0
      %p170 = por %p168, %p169
      %p171 = scmp.ne.s32.totalorder %s159, %s160
      %p172 = scmp.eq.s32.totalorder %s45, 1
      %p173 = por %p171, %p172
      %p175 = scmp.ne.s32.totalorder %s160, %s174
      %p176 = scmp.eq.s32.totalorder %s45, 0
      %p177 = por %p175, %p176
      %s179 = sadd.s32 %s178, 1
      %p182 = scmp.eq.s32.totalorder %s39, 1
      %p183 = scmp.ne.s32.totalorder %s178, %s180
      %p184 = scmp.eq.s32.totalorder %s39, 0
      %p185 = por %p183, %p184
      %p186 = scmp.ne.s32.totalorder %s178, %s180
      %p187 = scmp.eq.s32.totalorder %s44, 1
      %p188 = por %p186, %p187
      %p189 = scmp.ne.s32.totalorder %s180, %s181
      %p190 = scmp.eq.s32.totalorder %s44, 0
      %p191 = por %p189, %p190
      %p192 = scmp.ne.s32.totalorder %s180, %s181
      %p193 = scmp.eq.s32.totalorder %s45, 1
      %p194 = por %p192, %p193
      %p196 = scmp.ne.s32.totalorder %s181, %s195
      %p197 = scmp.eq.s32.totalorder %s45, 0
      %p198 = por %p196, %p197
      %s200 = sadd.s32 %s199, 1
      %p203 = scmp.eq.s32.totalorder %s39, 1
      %p204 = scmp.ne.s32.totalorder %s199, %s201
      %p205 = scmp.eq.s32.totalorder %s39, 0
      %p206 = por %p204, %p205
      %p207 = scmp.ne.s32.totalorder %s199, %s201
      %p208 = scmp.eq.s32.totalorder %s44, 1
      %p209 = por %p207, %p208
      %p210 = scmp.ne.s32.totalorder %s201, %s202
      %p211 = scmp.eq.s32.totalorder %s44, 0
      %p212 = por %p210, %p211
      %p213 = scmp.ne.s32.totalorder %s201, %s202
      %p214 = scmp.eq.s32.totalorder %s45, 1
      %p215 = por %p213, %p214
      %p217 = scmp.ne.s32.totalorder %s202, %s216
      %p218 = scmp.eq.s32.totalorder %s45, 0
      %p219 = por %p217, %p218
      %s221 = sadd.s32 %s220, 1
      %p224 = scmp.eq.s32.totalorder %s39, 1
      %p225 = scmp.ne.s32.totalorder %s220, %s222
      %p226 = scmp.eq.s32.totalorder %s39, 0
      %p227 = por %p225, %p226
      %p228 = scmp.ne.s32.totalorder %s220, %s222
      %p229 = scmp.eq.s32.totalorder %s44, 1
      %p230 = por %p228, %p229
      %p231 = scmp.ne.s32.totalorder %s222, %s223
      %p232 = scmp.eq.s32.totalorder %s44, 0
      %p233 = por %p231, %p232
      %p234 = scmp.ne.s32.totalorder %s222, %s223
      %p235 = scmp.eq.s32.totalorder %s45, 1
      %p236 = por %p234, %p235
      %p238 = scmp.ne.s32.totalorder %s223, %s237
      %p239 = scmp.eq.s32.totalorder %s45, 0
      %p240 = por %p238, %p239
      %s242 = sadd.s32 %s241, 1
      %p245 = scmp.eq.s32.totalorder %s39, 1
      %p246 = scmp.ne.s32.totalorder %s241, %s243
      %p247 = scmp.eq.s32.totalorder %s39, 0
      %p248 = por %p246, %p247
      %p249 = scmp.ne.s32.totalorder %s241, %s243
      %p250 = scmp.eq.s32.totalorder %s44, 1
      %p251 = por %p249, %p250
      %p252 = scmp.ne.s32.totalorder %s243, %s244
      %p253 = scmp.eq.s32.totalorder %s44, 0
      %p254 = por %p252, %p253
      %p255 = scmp.ne.s32.totalorder %s243, %s244
      %p256 = scmp.eq.s32.totalorder %s45, 1
      %p257 = por %p255, %p256
      %p259 = scmp.ne.s32.totalorder %s244, %s258
      %p260 = scmp.eq.s32.totalorder %s45, 0
      %p261 = por %p259, %p260
      %s263 = sadd.s32 %s262, 1
      %p266 = scmp.eq.s32.totalorder %s39, 1
      %p267 = scmp.ne.s32.totalorder %s262, %s264
      %p268 = scmp.eq.s32.totalorder %s39, 0
      %p269 = por %p267, %p268
      %p270 = scmp.ne.s32.totalorder %s262, %s264
      %p271 = scmp.eq.s32.totalorder %s44, 1
      %p272 = por %p270, %p271
      %p273 = scmp.ne.s32.totalorder %s264, %s265
      %p274 = scmp.eq.s32.totalorder %s44, 0
      %p275 = por %p273, %p274
      %p276 = scmp.ne.s32.totalorder %s264, %s265
      %p277 = scmp.eq.s32.totalorder %s45, 1
      %p278 = por %p276, %p277
      %p280 = scmp.ne.s32.totalorder %s265, %s279
      %p281 = scmp.eq.s32.totalorder %s45, 0
      %p282 = por %p280, %p281
      %s284 = sadd.s32 %s283, 1
      %p287 = scmp.eq.s32.totalorder %s39, 1
      %p288 = scmp.ne.s32.totalorder %s283, %s285
      %p289 = scmp.eq.s32.totalorder %s39, 0
      %p290 = por %p288, %p289
      %p291 = scmp.ne.s32.totalorder %s283, %s285
      %p292 = scmp.eq.s32.totalorder %s44, 1
      %p293 = por %p291, %p292
      %p294 = scmp.ne.s32.totalorder %s285, %s286
      %p295 = scmp.eq.s32.totalorder %s44, 0
      %p296 = por %p294, %p295
      %p297 = scmp.ne.s32.totalorder %s285, %s286
      %p298 = scmp.eq.s32.totalorder %s45, 1
      %p299 = por %p297, %p298
      %p301 = scmp.ne.s32.totalorder %s286, %s300
      %p302 = scmp.eq.s32.totalorder %s45, 0
      %p303 = por %p301, %p302
      %s305 = sadd.s32 %s304, 1
      %p308 = scmp.eq.s32.totalorder %s39, 1
      %p309 = scmp.ne.s32.totalorder %s304, %s306
      %p310 = scmp.eq.s32.totalorder %s39, 0
      %p311 = por %p309, %p310
      %p312 = scmp.ne.s32.totalorder %s304, %s306
      %p313 = scmp.eq.s32.totalorder %s44, 1
      %p314 = por %p312, %p313
      %p315 = scmp.ne.s32.totalorder %s306, %s307
      %p316 = scmp.eq.s32.totalorder %s44, 0
      %p317 = por %p315, %p316
      %p318 = scmp.ne.s32.totalorder %s306, %s307
      %p319 = scmp.eq.s32.totalorder %s45, 1
      %p320 = por %p318, %p319
      %p322 = scmp.ne.s32.totalorder %s307, %s321
      %p323 = scmp.eq.s32.totalorder %s45, 0
      %p324 = por %p322, %p323
      %s326 = sadd.s32 %s325, 1
      %p329 = scmp.eq.s32.totalorder %s39, 1
      %p330 = scmp.ne.s32.totalorder %s325, %s327
      %p331 = scmp.eq.s32.totalorder %s39, 0
      %p332 = por %p330, %p331
      %p333 = scmp.ne.s32.totalorder %s325, %s327
      %p334 = scmp.eq.s32.totalorder %s44, 1
      %p335 = por %p333, %p334
      %p336 = scmp.ne.s32.totalorder %s327, %s328
      %p337 = scmp.eq.s32.totalorder %s44, 0
      %p338 = por %p336, %p337
      %p339 = scmp.ne.s32.totalorder %s327, %s328
      %p340 = scmp.eq.s32.totalorder %s45, 1
      %p341 = por %p339, %p340
      %p343 = scmp.ne.s32.totalorder %s328, %s342
      %p344 = scmp.eq.s32.totalorder %s45, 0
      %p345 = por %p343, %p344
      %s347 = sadd.s32 %s346, 1
      %p350 = scmp.eq.s32.totalorder %s39, 1
      %p351 = scmp.ne.s32.totalorder %s346, %s348
      %p352 = scmp.eq.s32.totalorder %s39, 0
      %p353 = por %p351, %p352
      %p354 = scmp.ne.s32.totalorder %s346, %s348
      %p355 = scmp.eq.s32.totalorder %s44, 1
      %p356 = por %p354, %p355
      %p357 = scmp.ne.s32.totalorder %s348, %s349
      %p358 = scmp.eq.s32.totalorder %s44, 0
      %p359 = por %p357, %p358
      %p360 = scmp.ne.s32.totalorder %s348, %s349
      %p361 = scmp.eq.s32.totalorder %s45, 1
      %p362 = por %p360, %p361
      %p364 = scmp.ne.s32.totalorder %s349, %s363
      %p365 = scmp.eq.s32.totalorder %s45, 0
      %p366 = por %p364, %p365
      %s368 = sadd.s32 %s367, 1
      %p371 = scmp.eq.s32.totalorder %s39, 1
      %p372 = scmp.ne.s32.totalorder %s367, %s369
      %p373 = scmp.eq.s32.totalorder %s39, 0
      %p374 = por %p372, %p373
      %p375 = scmp.ne.s32.totalorder %s367, %s369
      %p376 = scmp.eq.s32.totalorder %s44, 1
      %p377 = por %p375, %p376
      %p378 = scmp.ne.s32.totalorder %s369, %s370
      %p379 = scmp.eq.s32.totalorder %s44, 0
      %p380 = por %p378, %p379
      %p381 = scmp.ne.s32.totalorder %s369, %s370
      %p382 = scmp.eq.s32.totalorder %s45, 1
      %p383 = por %p381, %p382
      %p385 = scmp.ne.s32.totalorder %s370, %s384
      %p386 = scmp.eq.s32.totalorder %s45, 0
      %p387 = por %p385, %p386
      %s389 = sadd.s32 %s388, 1
      %p392 = scmp.eq.s32.totalorder %s39, 1
      %p393 = scmp.ne.s32.totalorder %s388, %s390
      %p394 = scmp.eq.s32.totalorder %s39, 0
      %p395 = por %p393, %p394
      %p396 = scmp.ne.s32.totalorder %s388, %s390
      %p397 = scmp.eq.s32.totalorder %s44, 1
      %p398 = por %p396, %p397
      %p399 = scmp.ne.s32.totalorder %s390, %s391
      %p400 = scmp.eq.s32.totalorder %s44, 0
      %p401 = por %p399, %p400
      %p402 = scmp.ne.s32.totalorder %s390, %s391
      %p403 = scmp.eq.s32.totalorder %s45, 1
      %p404 = por %p402, %p403
      %p406 = scmp.ne.s32.totalorder %s391, %s405
      %p407 = scmp.eq.s32.totalorder %s45, 0
      %p408 = por %p406, %p407
      %s410 = sadd.s32 %s409, 1
      %p413 = scmp.eq.s32.totalorder %s39, 1
      %p414 = scmp.ne.s32.totalorder %s409, %s411
      %p415 = scmp.eq.s32.totalorder %s39, 0
      %p416 = por %p414, %p415
      %p417 = scmp.ne.s32.totalorder %s409, %s411
      %p418 = scmp.eq.s32.totalorder %s44, 1
      %p419 = por %p417, %p418
      %p420 = scmp.ne.s32.totalorder %s411, %s412
      %p421 = scmp.eq.s32.totalorder %s44, 0
      %p422 = por %p420, %p421
      %p423 = scmp.ne.s32.totalorder %s411, %s412
      %p424 = scmp.eq.s32.totalorder %s45, 1
      %p425 = por %p423, %p424
      %p427 = scmp.ne.s32.totalorder %s412, %s426
      %p428 = scmp.eq.s32.totalorder %s45, 0
      %p429 = por %p427, %p428
      %s431 = sadd.s32 %s430, 1
      %p434 = scmp.eq.s32.totalorder %s39, 1
      %p435 = scmp.ne.s32.totalorder %s430, %s432
      %p436 = scmp.eq.s32.totalorder %s39, 0
      %p437 = por %p435, %p436
      %p438 = scmp.ne.s32.totalorder %s430, %s432
      %p439 = scmp.eq.s32.totalorder %s44, 1
      %p440 = por %p438, %p439
      %p441 = scmp.ne.s32.totalorder %s432, %s433
      %p442 = scmp.eq.s32.totalorder %s44, 0
      %p443 = por %p441, %p442
      %p444 = scmp.ne.s32.totalorder %s432, %s433
      %p445 = scmp.eq.s32.totalorder %s45, 1
      %p446 = por %p444, %p445
      %p448 = scmp.ne.s32.totalorder %s433, %s447
      %p449 = scmp.eq.s32.totalorder %s45, 0
      %p450 = por %p448, %p449
      %s452 = sadd.s32 %s451, 1
      %p455 = scmp.eq.s32.totalorder %s39, 1
      %p456 = scmp.ne.s32.totalorder %s451, %s453
      %p457 = scmp.eq.s32.totalorder %s39, 0
      %p458 = por %p456, %p457
      %p459 = scmp.ne.s32.totalorder %s451, %s453
      %p460 = scmp.eq.s32.totalorder %s44, 1
      %p461 = por %p459, %p460
      %p462 = scmp.ne.s32.totalorder %s453, %s454
      %p463 = scmp.eq.s32.totalorder %s44, 0
      %p464 = por %p462, %p463
      %p465 = scmp.ne.s32.totalorder %s453, %s454
      %p466 = scmp.eq.s32.totalorder %s45, 1
      %p467 = por %p465, %p466
      %p469 = scmp.ne.s32.totalorder %s454, %s468
      %p470 = scmp.eq.s32.totalorder %s45, 0
      %p471 = por %p469, %p470
      %s473 = sadd.s32 %s472, 1
      %p476 = scmp.eq.s32.totalorder %s39, 1
      %p477 = scmp.ne.s32.totalorder %s472, %s474
      %p478 = scmp.eq.s32.totalorder %s39, 0
      %p479 = por %p477, %p478
      %p480 = scmp.ne.s32.totalorder %s472, %s474
      %p481 = scmp.eq.s32.totalorder %s44, 1
      %p482 = por %p480, %p481
      %p483 = scmp.ne.s32.totalorder %s474, %s475
      %p484 = scmp.eq.s32.totalorder %s44, 0
      %p485 = por %p483, %p484
      %p486 = scmp.ne.s32.totalorder %s474, %s475
      %p487 = scmp.eq.s32.totalorder %s45, 1
      %p488 = por %p486, %p487
      %p490 = scmp.ne.s32.totalorder %s475, %s489
      %p491 = scmp.eq.s32.totalorder %s45, 0
      %p492 = por %p490, %p491
      %s493 = ssub.s32 %s39, %s46
      %p494 = scmp.eq.s32.totalorder %s493, 0
      %s496 = sadd.s32 %s495, 1
      %s497 = scalar_select %p494, %s495, %s496
      %p500 = pneg %p494
      %p501 = scmp.eq.s32.totalorder %s39, 1
      %p502 = por %p500, %p501
      %p503 = scmp.ne.s32.totalorder %s495, %s498
      %p504 = scmp.eq.s32.totalorder %s39, 0
      %p505 = por %p503, %p504
      %p506 = scmp.ne.s32.totalorder %s495, %s498
      %p507 = scmp.eq.s32.totalorder %s44, 1
      %p508 = por %p506, %p507
      %p509 = scmp.ne.s32.totalorder %s498, %s499
      %p510 = scmp.eq.s32.totalorder %s44, 0
      %p511 = por %p509, %p510
      %p512 = scmp.ne.s32.totalorder %s498, %s499
      %p513 = scmp.eq.s32.totalorder %s45, 1
      %p514 = por %p512, %p513
      %p516 = scmp.ne.s32.totalorder %s499, %s515
      %p517 = scmp.eq.s32.totalorder %s45, 0
      %p518 = por %p516, %p517
      %p519 = scmp.le.s32.totalorder 1, %s39
      %p520 = scmp.lt.s32.totalorder %s39, 3
      %p521 = pnand %p519, %p520
      %p522 = pneg %p521
      // Predicated region
      $region9: #{_lambda_.1} parent=5 // pred_check
        _
      $region10: #{_lambda_.1} parent=5 // pred_check_branch
        %524 = sbr.rel (%p521) target = $region12
      $region11: #{_lambda_.1} parent=5 // pred_region
        %s525 = ssub.s32 %s39, 1
        // Predicated region
        $region13: #{_lambda_.1} parent=11 // pred_check
          %p526 = pneg %p86
        $region14: #{_lambda_.1} parent=11 // pred_check_branch
          %528 = sbr.rel (%p526) target = $region16
        $region15: #{_lambda_.1} parent=11 // pred_region
          %s530 = ssub.s32 128, 128
          %531 = vsyncadd [#allocation6], %s530
          %s533 = sshll.u32 [#allocation5], 4
          %s534 = int_to_ptr.vmem [resolvable:$true] %s533
          %536 = dma.hbm_to_vmem [thread:$0]  %s1, 128, %s534, [#allocation6]
        $region16: #{_lambda_.1} parent=11 // pred_fallthru
          _
        // Predicated region
        $region17: #{_lambda_.1} parent=11 // pred_check
          %p537 = pneg %p107
        $region18: #{_lambda_.1} parent=11 // pred_check_branch
          %539 = sbr.rel (%p537) target = $region20
        $region19: #{_lambda_.1} parent=11 // pred_region
          %s541 = ssub.s32 128, 128
          %542 = vsyncadd [#allocation6], %s541
          %s544 = sshll.u32 [#allocation7], 4
          %s545 = int_to_ptr.vmem [resolvable:$true] %s544
          %547 = dma.hbm_to_vmem [thread:$0]  %s2, 128, %s545, [#allocation6]
        $region20: #{_lambda_.1} parent=11 // pred_fallthru
          _
        // Predicated region
        $region21: #{_lambda_.1} parent=11 // pred_check
          %p548 = pneg %p128
        $region22: #{_lambda_.1} parent=11 // pred_check_branch
          %550 = sbr.rel (%p548) target = $region24
        $region23: #{_lambda_.1} parent=11 // pred_region
          %s552 = ssub.s32 128, 128
          %553 = vsyncadd [#allocation9], %s552
          %s555 = sshll.u32 [#allocation8], 4
          %s556 = int_to_ptr.vmem [resolvable:$true] %s555
          %558 = dma.hbm_to_vmem [thread:$0]  %s3, 128, %s556, [#allocation9]
        $region24: #{_lambda_.1} parent=11 // pred_fallthru
          _
        // Predicated region
        $region25: #{_lambda_.1} parent=11 // pred_check
          %p559 = pneg %p149
        $region26: #{_lambda_.1} parent=11 // pred_check_branch
          %561 = sbr.rel (%p559) target = $region28
        $region27: #{_lambda_.1} parent=11 // pred_region
          %s563 = ssub.s32 128, 128
          %564 = vsyncadd [#allocation9], %s563
          %s566 = sshll.u32 [#allocation10], 4
          %s567 = int_to_ptr.vmem [resolvable:$true] %s566
          %569 = dma.hbm_to_vmem [thread:$0]  %s4, 128, %s567, [#allocation9]
        $region28: #{_lambda_.1} parent=11 // pred_fallthru
          _
        // Predicated region
        $region29: #{_lambda_.1} parent=11 // pred_check
          %p570 = pneg %p170
        $region30: #{_lambda_.1} parent=11 // pred_check_branch
          %572 = sbr.rel (%p570) target = $region32
        $region31: #{_lambda_.1} parent=11 // pred_region
          %s574 = ssub.s32 128, 128
          %575 = vsyncadd [#allocation12], %s574
          %s577 = sshll.u32 [#allocation11], 4
          %s578 = int_to_ptr.vmem [resolvable:$true] %s577
          %580 = dma.hbm_to_vmem [thread:$0]  %s5, 128, %s578, [#allocation12]
        $region32: #{_lambda_.1} parent=11 // pred_fallthru
          _
        // Predicated region
        $region33: #{_lambda_.1} parent=11 // pred_check
          %p581 = pneg %p191
        $region34: #{_lambda_.1} parent=11 // pred_check_branch
          %583 = sbr.rel (%p581) target = $region36
        $region35: #{_lambda_.1} parent=11 // pred_region
          %s585 = ssub.s32 128, 128
          %586 = vsyncadd [#allocation12], %s585
          %s588 = sshll.u32 [#allocation13], 4
          %s589 = int_to_ptr.vmem [resolvable:$true] %s588
          %591 = dma.hbm_to_vmem [thread:$0]  %s6, 128, %s589, [#allocation12]
        $region36: #{_lambda_.1} parent=11 // pred_fallthru
          _
        // Predicated region
        $region37: #{_lambda_.1} parent=11 // pred_check
          %p592 = pneg %p212
        $region38: #{_lambda_.1} parent=11 // pred_check_branch
          %594 = sbr.rel (%p592) target = $region40
        $region39: #{_lambda_.1} parent=11 // pred_region
          %s596 = ssub.s32 3072, 3072
          %597 = vsyncadd [#allocation15], %s596
          %s598 = sshll.u32 [#allocation14], 4
          %s599 = int_to_ptr.vmem [resolvable:$true] %s598
          %604 = dma.hbm_to_vmem [thread:$0]  %s7, 3072, %s599, [#allocation15], 128, 128, 8
        $region40: #{_lambda_.1} parent=11 // pred_fallthru
          _
        // Predicated region
        $region41: #{_lambda_.1} parent=11 // pred_check
          %p605 = pneg %p233
        $region42: #{_lambda_.1} parent=11 // pred_check_branch
          %607 = sbr.rel (%p605) target = $region44
        $region43: #{_lambda_.1} parent=11 // pred_region
          %s609 = ssub.s32 32, 32
          %610 = vsyncadd [#allocation15], %s609
          %s611 = sshll.u32 [#allocation16], 4
          %s612 = int_to_ptr.vmem [resolvable:$true] %s611
          %617 = dma.hbm_to_vmem [thread:$0]  %s8, 32, %s612, [#allocation15], 16, 16, 1
        $region44: #{_lambda_.1} parent=11 // pred_fallthru
          _
        // Predicated region
        $region45: #{_lambda_.1} parent=11 // pred_check
          %p618 = pneg %p254
        $region46: #{_lambda_.1} parent=11 // pred_check_branch
          %620 = sbr.rel (%p618) target = $region48
        $region47: #{_lambda_.1} parent=11 // pred_region
          %s622 = ssub.s32 1024, 1024
          %623 = vsyncadd [#allocation18], %s622
          %s624 = sshll.u32 [#allocation17], 4
          %s625 = int_to_ptr.vmem [resolvable:$true] %s624
          %630 = dma.hbm_to_vmem [thread:$0]  %s9, 1024, %s625, [#allocation18], 128, 128, 8
        $region48: #{_lambda_.1} parent=11 // pred_fallthru
          _
        // Predicated region
        $region49: #{_lambda_.1} parent=11 // pred_check
          %p631 = pneg %p275
        $region50: #{_lambda_.1} parent=11 // pred_check_branch
          %633 = sbr.rel (%p631) target = $region52
        $region51: #{_lambda_.1} parent=11 // pred_region
          %s635 = ssub.s32 32, 32
          %636 = vsyncadd [#allocation18], %s635
          %s637 = sshll.u32 [#allocation19], 4
          %s638 = int_to_ptr.vmem [resolvable:$true] %s637
          %643 = dma.hbm_to_vmem [thread:$0]  %s10, 32, %s638, [#allocation18], 16, 16, 1
        $region52: #{_lambda_.1} parent=11 // pred_fallthru
          _
        // Predicated region
        $region53: #{_lambda_.1} parent=11 // pred_check
          %p644 = pneg %p296
        $region54: #{_lambda_.1} parent=11 // pred_check_branch
          %646 = sbr.rel (%p644) target = $region56
        $region55: #{_lambda_.1} parent=11 // pred_region
          _
        $region56: #{_lambda_.1} parent=11 // pred_fallthru
          _
        // Predicated region
        $region57: #{_lambda_.1} parent=11 // pred_check
          %p647 = pneg %p317
        $region58: #{_lambda_.1} parent=11 // pred_check_branch
          %649 = sbr.rel (%p647) target = $region60
        $region59: #{_lambda_.1} parent=11 // pred_region
          _
        $region60: #{_lambda_.1} parent=11 // pred_fallthru
          _
        // Predicated region
        $region61: #{_lambda_.1} parent=11 // pred_check
          %p650 = pneg %p338
        $region62: #{_lambda_.1} parent=11 // pred_check_branch
          %652 = sbr.rel (%p650) target = $region64
        $region63: #{_lambda_.1} parent=11 // pred_region
          %s654 = ssub.s32 1024, 1024
          %655 = vsyncadd [#allocation21], %s654
          %s656 = sshll.u32 [#allocation20], 4
          %s657 = int_to_ptr.vmem [resolvable:$true] %s656
          %662 = dma.hbm_to_vmem [thread:$0]  %s13, 1024, %s657, [#allocation21], 128, 128, 8
        $region64: #{_lambda_.1} parent=11 // pred_fallthru
          _
        // Predicated region
        $region65: #{_lambda_.1} parent=11 // pred_check
          %p663 = pneg %p359
        $region66: #{_lambda_.1} parent=11 // pred_check_branch
          %665 = sbr.rel (%p663) target = $region68
        $region67: #{_lambda_.1} parent=11 // pred_region
          _
        $region68: #{_lambda_.1} parent=11 // pred_fallthru
          _
        // Predicated region
        $region69: #{_lambda_.1} parent=11 // pred_check
          %p666 = pneg %p380
        $region70: #{_lambda_.1} parent=11 // pred_check_branch
          %668 = sbr.rel (%p666) target = $region72
        $region71: #{_lambda_.1} parent=11 // pred_region
          _
        $region72: #{_lambda_.1} parent=11 // pred_fallthru
          _
        // Predicated region
        $region73: #{_lambda_.1} parent=11 // pred_check
          %p669 = pneg %p401
        $region74: #{_lambda_.1} parent=11 // pred_check_branch
          %671 = sbr.rel (%p669) target = $region76
        $region75: #{_lambda_.1} parent=11 // pred_region
          _
        $region76: #{_lambda_.1} parent=11 // pred_fallthru
          _
        // Predicated region
        $region77: #{_lambda_.1} parent=11 // pred_check
          %p672 = pneg %p422
        $region78: #{_lambda_.1} parent=11 // pred_check_branch
          %674 = sbr.rel (%p672) target = $region80
        $region79: #{_lambda_.1} parent=11 // pred_region
          _
        $region80: #{_lambda_.1} parent=11 // pred_fallthru
          _
        // Predicated region
        $region81: #{_lambda_.1} parent=11 // pred_check
          %p675 = pneg %p443
        $region82: #{_lambda_.1} parent=11 // pred_check_branch
          %677 = sbr.rel (%p675) target = $region84
        $region83: #{_lambda_.1} parent=11 // pred_region
          _
        $region84: #{_lambda_.1} parent=11 // pred_fallthru
          _
        // Predicated region
        $region85: #{_lambda_.1} parent=11 // pred_check
          %p678 = pneg %p464
        $region86: #{_lambda_.1} parent=11 // pred_check_branch
          %680 = sbr.rel (%p678) target = $region88
        $region87: #{_lambda_.1} parent=11 // pred_region
          %s682 = ssub.s32 256, 256
          %683 = vsyncadd [#allocation21], %s682
          %s684 = sshll.u32 [#allocation22], 4
          %s685 = int_to_ptr.vmem [resolvable:$true] %s684
          %690 = dma.hbm_to_vmem [thread:$0]  %s19, 256, %s685, [#allocation21], 128, 128, 8
        $region88: #{_lambda_.1} parent=11 // pred_fallthru
          _
        // Predicated region
        $region89: #{_lambda_.1} parent=11 // pred_check
          %p691 = pneg %p485
        $region90: #{_lambda_.1} parent=11 // pred_check_branch
          %693 = sbr.rel (%p691) target = $region92
        $region91: #{_lambda_.1} parent=11 // pred_region
          _
        $region92: #{_lambda_.1} parent=11 // pred_fallthru
          _
      $region12: #{_lambda_.1} parent=5 // pred_fallthru
        _
      %p694 = scmp.lt.s32.totalorder %s39, 2
      // Predicated region
      $region93: #{_lambda_.1} parent=5 // pred_check
        %p695 = pneg %p694
      $region94: #{_lambda_.1} parent=5 // pred_check_branch
        %697 = sbr.rel (%p695) target = $region96
      $region95: #{_lambda_.1} parent=5 // pred_region
        // Predicated region
        $region97: #{_lambda_.1} parent=95 // pred_check
          %p698 = pneg %p59
        $region98: #{_lambda_.1} parent=95 // pred_check_branch
          %700 = sbr.rel (%p698) target = $region100
        $region99: #{_lambda_.1} parent=95 // pred_region
          %s701 = sand.u32 %s49, 1
          %s702 = scalar_lea.sflag [#allocation3], %s701
          %s703 = sand.u32 %s49, 1
          %s704 = smul.addr %s703, 8
          %s705 = scalar_lea.vmem [#allocation2], %s704
          %s707 = ssub.s32 128, 128
          %708 = vsyncadd %s702, %s707
          %s709 = smul.addr %s39, 128
          %s710 = scalar_lea.hbm %s0, %s709
          %s712 = sshll.u32 %s705, 4
          %s713 = int_to_ptr.vmem [resolvable:$true] %s712
          %715 = dma.hbm_to_vmem [thread:$0]  %s710, 128, %s713, %s702
        $region100: #{_lambda_.1} parent=95 // pred_fallthru
          _
      $region96: #{_lambda_.1} parent=5 // pred_fallthru
        _
      %p716 = scmp.le.s32.totalorder 1, %s39
      %p717 = scmp.lt.s32.totalorder %s39, 3
      %p718 = pnand %p716, %p717
      %p719 = pneg %p718
      // Predicated region
      $region101: #{_lambda_.1} parent=5 // pred_check
        _
      $region102: #{_lambda_.1} parent=5 // pred_check_branch
        %721 = sbr.rel (%p718) target = $region104
      $region103: #{_lambda_.1} parent=5 // pred_region
        %s722 = ssub.s32 %s39, 1
        %s723 = sand.u32 %s52, 1
        %s724 = scalar_lea.sflag [#allocation3], %s723
        %s725 = sand.u32 %s52, 1
        %s726 = smul.addr %s725, 8
        %s727 = scalar_lea.vmem [#allocation2], %s726
        // Predicated region
        $region105: #{_lambda_.1} parent=103 // pred_check
          %p728 = pneg %p65
        $region106: #{_lambda_.1} parent=103 // pred_check_branch
          %730 = sbr.rel (%p728) target = $region108
        $region107: #{_lambda_.1} parent=103 // pred_region
          %731 = dma.done %s724, 128
        $region108: #{_lambda_.1} parent=103 // pred_fallthru
          _
        // Predicated region
        $region109: #{_lambda_.1} parent=103 // pred_check
          %p732 = pneg %p86
        $region110: #{_lambda_.1} parent=103 // pred_check_branch
          %734 = sbr.rel (%p732) target = $region112
        $region111: #{_lambda_.1} parent=103 // pred_region
          %735 = dma.done [#allocation6], 128
        $region112: #{_lambda_.1} parent=103 // pred_fallthru
          _
        // Predicated region
        $region113: #{_lambda_.1} parent=103 // pred_check
          %p736 = pneg %p107
        $region114: #{_lambda_.1} parent=103 // pred_check_branch
          %738 = sbr.rel (%p736) target = $region116
        $region115: #{_lambda_.1} parent=103 // pred_region
          %739 = dma.done [#allocation6], 128
        $region116: #{_lambda_.1} parent=103 // pred_fallthru
          _
        // Predicated region
        $region117: #{_lambda_.1} parent=103 // pred_check
          %p740 = pneg %p128
        $region118: #{_lambda_.1} parent=103 // pred_check_branch
          %742 = sbr.rel (%p740) target = $region120
        $region119: #{_lambda_.1} parent=103 // pred_region
          %743 = dma.done [#allocation9], 128
        $region120: #{_lambda_.1} parent=103 // pred_fallthru
          _
        // Predicated region
        $region121: #{_lambda_.1} parent=103 // pred_check
          %p744 = pneg %p149
        $region122: #{_lambda_.1} parent=103 // pred_check_branch
          %746 = sbr.rel (%p744) target = $region124
        $region123: #{_lambda_.1} parent=103 // pred_region
          %747 = dma.done [#allocation9], 128
        $region124: #{_lambda_.1} parent=103 // pred_fallthru
          _
        // Predicated region
        $region125: #{_lambda_.1} parent=103 // pred_check
          %p748 = pneg %p170
        $region126: #{_lambda_.1} parent=103 // pred_check_branch
          %750 = sbr.rel (%p748) target = $region128
        $region127: #{_lambda_.1} parent=103 // pred_region
          %751 = dma.done [#allocation12], 128
        $region128: #{_lambda_.1} parent=103 // pred_fallthru
          _
        // Predicated region
        $region129: #{_lambda_.1} parent=103 // pred_check
          %p752 = pneg %p191
        $region130: #{_lambda_.1} parent=103 // pred_check_branch
          %754 = sbr.rel (%p752) target = $region132
        $region131: #{_lambda_.1} parent=103 // pred_region
          %755 = dma.done [#allocation12], 128
        $region132: #{_lambda_.1} parent=103 // pred_fallthru
          _
        // Predicated region
        $region133: #{_lambda_.1} parent=103 // pred_check
          %p756 = pneg %p212
        $region134: #{_lambda_.1} parent=103 // pred_check_branch
          %758 = sbr.rel (%p756) target = $region136
        $region135: #{_lambda_.1} parent=103 // pred_region
          %759 = dma.done [#allocation15], 3072
        $region136: #{_lambda_.1} parent=103 // pred_fallthru
          _
        // Predicated region
        $region137: #{_lambda_.1} parent=103 // pred_check
          %p760 = pneg %p233
        $region138: #{_lambda_.1} parent=103 // pred_check_branch
          %762 = sbr.rel (%p760) target = $region140
        $region139: #{_lambda_.1} parent=103 // pred_region
          %763 = dma.done [#allocation15], 32
        $region140: #{_lambda_.1} parent=103 // pred_fallthru
          _
        // Predicated region
        $region141: #{_lambda_.1} parent=103 // pred_check
          %p764 = pneg %p254
        $region142: #{_lambda_.1} parent=103 // pred_check_branch
          %766 = sbr.rel (%p764) target = $region144
        $region143: #{_lambda_.1} parent=103 // pred_region
          %767 = dma.done [#allocation18], 1024
        $region144: #{_lambda_.1} parent=103 // pred_fallthru
          _
        // Predicated region
        $region145: #{_lambda_.1} parent=103 // pred_check
          %p768 = pneg %p275
        $region146: #{_lambda_.1} parent=103 // pred_check_branch
          %770 = sbr.rel (%p768) target = $region148
        $region147: #{_lambda_.1} parent=103 // pred_region
          %771 = dma.done [#allocation18], 32
        $region148: #{_lambda_.1} parent=103 // pred_fallthru
          _
        // Predicated region
        $region149: #{_lambda_.1} parent=103 // pred_check
          %p772 = pneg %p338
        $region150: #{_lambda_.1} parent=103 // pred_check_branch
          %774 = sbr.rel (%p772) target = $region152
        $region151: #{_lambda_.1} parent=103 // pred_region
          %775 = dma.done [#allocation21], 1024
        $region152: #{_lambda_.1} parent=103 // pred_fallthru
          _
        // Predicated region
        $region153: #{_lambda_.1} parent=103 // pred_check
          %p776 = pneg %p464
        $region154: #{_lambda_.1} parent=103 // pred_check_branch
          %778 = sbr.rel (%p776) target = $region156
        $region155: #{_lambda_.1} parent=103 // pred_region
          %779 = dma.done [#allocation21], 256
        $region156: #{_lambda_.1} parent=103 // pred_fallthru
          _
        %s780 = sand.u32 %s52, 1
        %s781 = scalar_lea.sflag [#allocation3], %s780
        %s782 = sand.u32 %s52, 1
        %s783 = smul.addr %s782, 8
        %s784 = scalar_lea.vmem [#allocation2], %s783
        %p785 = pneg %p65
        %p786 = pneg %p62
        %p787 = pneg %p86
        %p788 = pneg %p83
        %p789 = pneg %p107
        %p790 = pneg %p104
        %p791 = pneg %p128
        %p792 = pneg %p125
        %p793 = pneg %p149
        %p794 = pneg %p146
        %p795 = pneg %p170
        %p796 = pneg %p167
        %p797 = pneg %p191
        %p798 = pneg %p188
        %p799 = pneg %p212
        %p800 = pneg %p209
        %p801 = pneg %p233
        %p802 = pneg %p230
        %p803 = pneg %p254
        %p804 = pneg %p251
        %p805 = pneg %p275
        %p806 = pneg %p272
        %p807 = pneg %p296
        %p808 = pneg %p293
        %p809 = pneg %p317
        %p810 = pneg %p314
        %p811 = pneg %p338
        %p812 = pneg %p335
        %p813 = pneg %p359
        %p814 = pneg %p356
        %p815 = pneg %p380
        %p816 = pneg %p377
        %p817 = pneg %p401
        %p818 = pneg %p398
        %p819 = pneg %p422
        %p820 = pneg %p419
        %p821 = pneg %p443
        %p822 = pneg %p440
        %p823 = pneg %p464
        %p824 = pneg %p461
        %p825 = pneg %p485
        %p826 = pneg %p482
        %p827 = pneg %p511
        %p828 = pneg %p508
        %s829 = sand.u32 %s498, 1
        %s830 = scalar_lea.sflag [#allocation4], %s829
        %s831 = sand.u32 %s498, 1
        %s832 = scalar_lea.vmem [#allocation23], %s831
        %v833 = vld [vmem:[%s727] sm:$0xff]
        %v834 = vld [vmem:[#allocation5] sm:$0xff]
        %v835 = vsub.f32 %v833, %v834
        %v836 = vld [vmem:[#allocation7] sm:$0xff]
        %v837 = vadd.f32 %v836, 1e-05
        %v838 = vrsqrt.pop %v837
        %v839 = vmul.f32 %v835, %v838
        %v840 = vld [vmem:[#allocation8] sm:$0xff]
        %v841 = vmul.f32 %v839, %v840
        %v842 = vld [vmem:[#allocation10] sm:$0xff]
        %v843 = vadd.f32 %v841, %v842
        %v844 = vmul.f32 %v843, 5.656854
        %v845 = vld [vmem:[#allocation11] sm:$0xff]
        %v846 = vadd.f32 %v844, %v845
        %v847 = vld [vmem:[#allocation13] sm:$0xff]
        %v848 = vld [vmem:[#allocation14] sm:$0xff]
        %v849 = vld [vmem:[#allocation14 + $0x8] sm:$0xff]
        %v850 = vld [vmem:[#allocation14 + $0x10] sm:$0xff]
        %v851 = vld [vmem:[#allocation14 + $0x18] sm:$0xff]
        %v852 = vld [vmem:[#allocation14 + $0x20] sm:$0xff]
        %v853 = vld [vmem:[#allocation14 + $0x28] sm:$0xff]
        %v854 = vld [vmem:[#allocation14 + $0x30] sm:$0xff]
        %v855 = vld [vmem:[#allocation14 + $0x38] sm:$0xff]
        %v856 = vld [vmem:[#allocation14 + $0x40] sm:$0xff]
        %v857 = vld [vmem:[#allocation14 + $0x48] sm:$0xff]
        %v858 = vld [vmem:[#allocation14 + $0x50] sm:$0xff]
        %v859 = vld [vmem:[#allocation14 + $0x58] sm:$0xff]
        %v860 = vld [vmem:[#allocation16] sm:$0x1]
        %v862 = vlaneseq
        %v863 = vshrl.u32 %v862, 7
        %v864 = vsub.s32 0, %v863
        %v865 = vrot.slane %v860, %v864
        %vm867 = vcmask 261120
        %v869 = vsel %vm867, %v846, 0
        %v872 = vsel %vm867, %v848, 0
        %v875 = vsel %vm867, %v849, 0
        %v878 = vsel %vm867, %v850, 0
        %v881 = vsel %vm867, %v851, 0
        %v884 = vsel %vm867, %v852, 0
        %v887 = vsel %vm867, %v853, 0
        %v890 = vsel %vm867, %v854, 0
        %v893 = vsel %vm867, %v855, 0
        %v896 = vsel %vm867, %v856, 0
        %v899 = vsel %vm867, %v857, 0
        %v902 = vsel %vm867, %v858, 0
        %v905 = vsel %vm867, %v859, 0
        %907 = vmatprep.subr.mxu0 0.0
        %908 = vmatpush1.xpose.msra.mxu0 %v872
        %909 = vmatprep.subr.mxu0 0.0
        %910 = vmatpush1.xpose.msra.mxu0 %v875
        %911 = vmatprep.subr.mxu0 0.0
        %912 = vmatpush1.xpose.msra.mxu0 %v878
        %913 = vmatprep.subr.mxu0 0.0
        %914 = vmatpush1.xpose.msra.mxu0 %v881
        %915 = vmatprep.subr.mxu0 0.0
        %916 = vmatpush1.xpose.msra.mxu0 %v884
        %917 = vmatprep.subr.mxu0 0.0
        %918 = vmatpush1.xpose.msra.mxu0 %v887
        %919 = vmatprep.subr.mxu0 0.0
        %920 = vmatpush1.xpose.msra.mxu0 %v890
        %921 = vmatprep.subr.mxu0 0.0
        %922 = vmatpush1.xpose.msra.mxu0 %v893
        %923 = vmatprep.subr.mxu0 0.0
        %924 = vmatpush1.xpose.msra.mxu0 %v896
        %925 = vmatprep.subr.mxu0 0.0
        %926 = vmatpush1.xpose.msra.mxu0 %v899
        %927 = vmatprep.subr.mxu0 0.0
        %928 = vmatpush1.xpose.msra.mxu0 %v902
        %929 = vmatprep.subr.mxu0 0.0
        %930 = vmatpush1.xpose.msra.mxu0 %v905
        %931 = vmatprep.subr.mxu0 0.0
        %932 = vmatpush1.xpose.msra.mxu0 0.0
        %933 = vmatprep.subr.mxu0 0.0
        %934 = vmatpush1.xpose.msra.mxu0 0.0
        %935 = vmatprep.subr.mxu0 0.0
        %936 = vmatpush1.xpose.msra.mxu0 0.0
        %937 = vmatprep.subr.mxu0 0.0
        %938 = vmatpush1.xpose.msra.mxu0 0.0
        %939 = vmatprep.subr.mxu0 0.0
        %940 = vmatpush1.xpose.msra.mxu0 0.0
        %941 = vmatprep.subr.mxu0 0.0
        %942 = vmatpush1.xpose.msra.mxu0 0.0
        %943 = vmatprep.subr.mxu0 0.0
        %944 = vmatpush1.xpose.msra.mxu0 0.0
        %945 = vmatprep.subr.mxu0 0.0
        %946 = vmatpush1.xpose.msra.mxu0 0.0
        %947 = vmatprep.subr.mxu0 0.0
        %948 = vmatpush1.xpose.msra.mxu0 0.0
        %949 = vmatprep.subr.mxu0 0.0
        %950 = vmatpush1.xpose.msra.mxu0 0.0
        %951 = vmatprep.subr.mxu0 0.0
        %952 = vmatpush1.xpose.msra.mxu0 0.0
        %953 = vmatprep.subr.mxu0 0.0
        %954 = vmatpush1.xpose.msra.mxu0 0.0
        %955 = vmatprep.subr.mxu0 0.0
        %956 = vmatpush1.xpose.msra.mxu0 0.0
        %957 = vmatprep.subr.mxu0 0.0
        %958 = vmatpush1.xpose.msra.mxu0 0.0
        %959 = vmatprep.subr.mxu0 0.0
        %960 = vmatpush1.xpose.msra.mxu0 0.0
        %961 = vmatprep.subr.mxu0 0.0
        %962 = vmatpush1.xpose.msra.mxu0 0.0
        %963 = vmatprep.subr.mxu0 0.0
        %964 = vmatpush1.xpose.msra.mxu0 0.0
        %965 = vmatprep.subr.mxu0 0.0
        %966 = vmatpush1.xpose.msra.mxu0 0.0
        %967 = vmatprep.subr.mxu0 0.0
        %968 = vmatpush1.xpose.msra.mxu0 0.0
        %969 = vmatprep.subr.mxu0 0.0
        %970 = vmatpush1.xpose.msra.mxu0 0.0
        %971 = vmatprep.mubr.f32.mxu0 0.0
        %972 = vmatmul.mubr.f32.gmra.mrb[0].mxu0 %v869
        %v973 = vpop.f32.mrb[0].mxu0
        %v974 = vadd.f32 %v865, %v973
        %v975 = vpop.f32.mrb[0].mxu0
        %976 = vdwg.mxu0
        %978 = vrot.lane.b32.xlu0 %v974, 96
        %v979 = vpop.permute.xlu0 %978
        %vm980 = vcmask 130048
        %v981 = vsel %vm980, %v974, 0
        %v983 = vsel %vm980, %v979, 0
        %985 = vmatprep.subr.mxu0 0.0
        %986 = vmatpush1.xpose.msra.mxu0 %v983
        %987 = vmatprep.subr.mxu0 0.0
        %988 = vmatpush1.xpose.msra.mxu0 0.0
        %989 = vmatprep.subr.mxu0 0.0
        %990 = vmatpush1.xpose.msra.mxu0 0.0
        %991 = vmatprep.subr.mxu0 0.0
        %992 = vmatpush1.xpose.msra.mxu0 0.0
        %993 = vmatprep.subr.mxu0 0.0
        %994 = vmatpush1.xpose.msra.mxu0 0.0
        %995 = vmatprep.subr.mxu0 0.0
        %996 = vmatpush1.xpose.msra.mxu0 0.0
        %997 = vmatprep.subr.mxu0 0.0
        %998 = vmatpush1.xpose.msra.mxu0 0.0
        %999 = vmatprep.subr.mxu0 0.0
        %1000 = vmatpush1.xpose.msra.mxu0 0.0
        %1001 = vmatprep.subr.mxu0 0.0
        %1002 = vmatpush1.xpose.msra.mxu0 0.0
        %1003 = vmatprep.subr.mxu0 0.0
        %1004 = vmatpush1.xpose.msra.mxu0 0.0
        %1005 = vmatprep.subr.mxu0 0.0
        %1006 = vmatpush1.xpose.msra.mxu0 0.0
        %1007 = vmatprep.subr.mxu0 0.0
        %1008 = vmatpush1.xpose.msra.mxu0 0.0
        %1009 = vmatprep.subr.mxu0 0.0
        %1010 = vmatpush1.xpose.msra.mxu0 0.0
        %1011 = vmatprep.subr.mxu0 0.0
        %1012 = vmatpush1.xpose.msra.mxu0 0.0
        %1013 = vmatprep.subr.mxu0 0.0
        %1014 = vmatpush1.xpose.msra.mxu0 0.0
        %1015 = vmatprep.subr.mxu0 0.0
        %1016 = vmatpush1.xpose.msra.mxu0 0.0
        %1017 = vmatprep.subr.mxu0 0.0
        %1018 = vmatpush1.xpose.msra.mxu0 0.0
        %1019 = vmatprep.subr.mxu0 0.0
        %1020 = vmatpush1.xpose.msra.mxu0 0.0
        %1021 = vmatprep.subr.mxu0 0.0
        %1022 = vmatpush1.xpose.msra.mxu0 0.0
        %1023 = vmatprep.subr.mxu0 0.0
        %1024 = vmatpush1.xpose.msra.mxu0 0.0
        %1025 = vmatprep.subr.mxu0 0.0
        %1026 = vmatpush1.xpose.msra.mxu0 0.0
        %1027 = vmatprep.subr.mxu0 0.0
        %1028 = vmatpush1.xpose.msra.mxu0 0.0
        %1029 = vmatprep.subr.mxu0 0.0
        %1030 = vmatpush1.xpose.msra.mxu0 0.0
        %1031 = vmatprep.subr.mxu0 0.0
        %1032 = vmatpush1.xpose.msra.mxu0 0.0
        %1033 = vmatprep.subr.mxu0 0.0
        %1034 = vmatpush1.xpose.msra.mxu0 0.0
        %1035 = vmatprep.subr.mxu0 0.0
        %1036 = vmatpush1.xpose.msra.mxu0 0.0
        %1037 = vmatprep.subr.mxu0 0.0
        %1038 = vmatpush1.xpose.msra.mxu0 0.0
        %1039 = vmatprep.subr.mxu0 0.0
        %1040 = vmatpush1.xpose.msra.mxu0 0.0
        %1041 = vmatprep.subr.mxu0 0.0
        %1042 = vmatpush1.xpose.msra.mxu0 0.0
        %1043 = vmatprep.subr.mxu0 0.0
        %1044 = vmatpush1.xpose.msra.mxu0 0.0
        %1045 = vmatprep.subr.mxu0 0.0
        %1046 = vmatpush1.xpose.msra.mxu0 0.0
        %1047 = vmatprep.subr.mxu0 0.0
        %1048 = vmatpush1.xpose.msra.mxu0 0.0
        %1049 = vmatprep.mubr.f32.mxu0 0.0
        %1050 = vmatmul.mubr.f32.gmra.mrb[0].mxu0 %v981
        %v1051 = vpop.f32.mrb[0].mxu0
        %v1052 = vadd.f32 %v847, %v1051
        %v1053 = vpop.f32.mrb[0].mxu0
        %1054 = vdwg.mxu0
        %vm1055 = vcmask 64512
        %v1056 = vsel %vm1055, %v1052, -inf
        %1057 = vmax.xlane.f32.xlu0 %v1056
        %v1058 = vpop.xlane.xlu0 %1057
        %v1059 = vsub.f32 %v1052, %v1058
        %v1060 = vmul.f32 %v1059, 1.442695
        %v1061 = vpow.pop %v1060
        %v1062 = vsel %vm1055, %v1061, 0.0
        %1063 = vadd.xlane.f32.xlu0 %v1062
        %v1064 = vpop.xlane.xlu0 %1063
        %v1065 = vrcp.pop %v1064
        %v1066 = vmul.f32 %v1061, %v1065
        %1067 = vrot.lane.b32.xlu0 %v974, 64
        %v1068 = vpop.permute.xlu0 %1067
        %v1071 = vsel %vm1055, %v1066, 0
        %1073 = vmatprep.subr.mxu0 0.0
        %1074 = vmatpush1.msra.mxu0 %v1068
        %1075 = vmatprep.subr.mxu0 0.0
        %1076 = vmatpush1.msra.mxu0 0.0
        %1077 = vmatprep.subr.mxu0 0.0
        %1078 = vmatpush1.msra.mxu0 0.0
        %1079 = vmatprep.subr.mxu0 0.0
        %1080 = vmatpush1.msra.mxu0 0.0
        %1081 = vmatprep.subr.mxu0 0.0
        %1082 = vmatpush1.msra.mxu0 0.0
        %1083 = vmatprep.subr.mxu0 0.0
        %1084 = vmatpush1.msra.mxu0 0.0
        %1085 = vmatprep.subr.mxu0 0.0
        %1086 = vmatpush1.msra.mxu0 0.0
        %1087 = vmatprep.subr.mxu0 0.0
        %1088 = vmatpush1.msra.mxu0 0.0
        %1089 = vmatprep.subr.mxu0 0.0
        %1090 = vmatpush1.msra.mxu0 0.0
        %1091 = vmatprep.subr.mxu0 0.0
        %1092 = vmatpush1.msra.mxu0 0.0
        %1093 = vmatprep.subr.mxu0 0.0
        %1094 = vmatpush1.msra.mxu0 0.0
        %1095 = vmatprep.subr.mxu0 0.0
        %1096 = vmatpush1.msra.mxu0 0.0
        %1097 = vmatprep.subr.mxu0 0.0
        %1098 = vmatpush1.msra.mxu0 0.0
        %1099 = vmatprep.subr.mxu0 0.0
        %1100 = vmatpush1.msra.mxu0 0.0
        %1101 = vmatprep.subr.mxu0 0.0
        %1102 = vmatpush1.msra.mxu0 0.0
        %1103 = vmatprep.subr.mxu0 0.0
        %1104 = vmatpush1.msra.mxu0 0.0
        %1105 = vmatprep.subr.mxu0 0.0
        %1106 = vmatpush1.msra.mxu0 0.0
        %1107 = vmatprep.subr.mxu0 0.0
        %1108 = vmatpush1.msra.mxu0 0.0
        %1109 = vmatprep.subr.mxu0 0.0
        %1110 = vmatpush1.msra.mxu0 0.0
        %1111 = vmatprep.subr.mxu0 0.0
        %1112 = vmatpush1.msra.mxu0 0.0
        %1113 = vmatprep.subr.mxu0 0.0
        %1114 = vmatpush1.msra.mxu0 0.0
        %1115 = vmatprep.subr.mxu0 0.0
        %1116 = vmatpush1.msra.mxu0 0.0
        %1117 = vmatprep.subr.mxu0 0.0
        %1118 = vmatpush1.msra.mxu0 0.0
        %1119 = vmatprep.subr.mxu0 0.0
        %1120 = vmatpush1.msra.mxu0 0.0
        %1121 = vmatprep.subr.mxu0 0.0
        %1122 = vmatpush1.msra.mxu0 0.0
        %1123 = vmatprep.subr.mxu0 0.0
        %1124 = vmatpush1.msra.mxu0 0.0
        %1125 = vmatprep.subr.mxu0 0.0
        %1126 = vmatpush1.msra.mxu0 0.0
        %1127 = vmatprep.subr.mxu0 0.0
        %1128 = vmatpush1.msra.mxu0 0.0
        %1129 = vmatprep.subr.mxu0 0.0
        %1130 = vmatpush1.msra.mxu0 0.0
        %1131 = vmatprep.subr.mxu0 0.0
        %1132 = vmatpush1.msra.mxu0 0.0
        %1133 = vmatprep.subr.mxu0 0.0
        %1134 = vmatpush1.msra.mxu0 0.0
        %1135 = vmatprep.subr.mxu0 0.0
        %1136 = vmatpush1.msra.mxu0 0.0
        %1137 = vmatprep.mubr.f32.mxu0 0.0
        %1138 = vmatmul.mubr.f32.gmra.mrb[0].mxu0 %v1071
        %v1139 = vpop.f32.mrb[0].mxu0
        %v1140 = vadd.f32 0.0, %v1139
        %v1141 = vpop.f32.mrb[0].mxu0
        %1142 = vdwg.mxu0
        %1143 = vrot.lane.b32.xlu0 %v974, 112
        %v1144 = vpop.permute.xlu0 %1143
        %1145 = vrot.lane.b32.xlu0 %v974, 80
        %v1146 = vpop.permute.xlu0 %1145
        %v1147 = vsel %vm980, %v1144, 0
        %v1149 = vsel %vm980, %v1146, 0
        %1151 = vmatprep.subr.mxu0 0.0
        %1152 = vmatpush1.xpose.msra.mxu0 %v1149
        %1153 = vmatprep.subr.mxu0 0.0
        %1154 = vmatpush1.xpose.msra.mxu0 0.0
        %1155 = vmatprep.subr.mxu0 0.0
        %1156 = vmatpush1.xpose.msra.mxu0 0.0
        %1157 = vmatprep.subr.mxu0 0.0
        %1158 = vmatpush1.xpose.msra.mxu0 0.0
        %1159 = vmatprep.subr.mxu0 0.0
        %1160 = vmatpush1.xpose.msra.mxu0 0.0
        %1161 = vmatprep.subr.mxu0 0.0
        %1162 = vmatpush1.xpose.msra.mxu0 0.0
        %1163 = vmatprep.subr.mxu0 0.0
        %1164 = vmatpush1.xpose.msra.mxu0 0.0
        %1165 = vmatprep.subr.mxu0 0.0
        %1166 = vmatpush1.xpose.msra.mxu0 0.0
        %1167 = vmatprep.subr.mxu0 0.0
        %1168 = vmatpush1.xpose.msra.mxu0 0.0
        %1169 = vmatprep.subr.mxu0 0.0
        %1170 = vmatpush1.xpose.msra.mxu0 0.0
        %1171 = vmatprep.subr.mxu0 0.0
        %1172 = vmatpush1.xpose.msra.mxu0 0.0
        %1173 = vmatprep.subr.mxu0 0.0
        %1174 = vmatpush1.xpose.msra.mxu0 0.0
        %1175 = vmatprep.subr.mxu0 0.0
        %1176 = vmatpush1.xpose.msra.mxu0 0.0
        %1177 = vmatprep.subr.mxu0 0.0
        %1178 = vmatpush1.xpose.msra.mxu0 0.0
        %1179 = vmatprep.subr.mxu0 0.0
        %1180 = vmatpush1.xpose.msra.mxu0 0.0
        %1181 = vmatprep.subr.mxu0 0.0
        %1182 = vmatpush1.xpose.msra.mxu0 0.0
        %1183 = vmatprep.subr.mxu0 0.0
        %1184 = vmatpush1.xpose.msra.mxu0 0.0
        %1185 = vmatprep.subr.mxu0 0.0
        %1186 = vmatpush1.xpose.msra.mxu0 0.0
        %1187 = vmatprep.subr.mxu0 0.0
        %1188 = vmatpush1.xpose.msra.mxu0 0.0
        %1189 = vmatprep.subr.mxu0 0.0
        %1190 = vmatpush1.xpose.msra.mxu0 0.0
        %1191 = vmatprep.subr.mxu0 0.0
        %1192 = vmatpush1.xpose.msra.mxu0 0.0
        %1193 = vmatprep.subr.mxu0 0.0
        %1194 = vmatpush1.xpose.msra.mxu0 0.0
        %1195 = vmatprep.subr.mxu0 0.0
        %1196 = vmatpush1.xpose.msra.mxu0 0.0
        %1197 = vmatprep.subr.mxu0 0.0
        %1198 = vmatpush1.xpose.msra.mxu0 0.0
        %1199 = vmatprep.subr.mxu0 0.0
        %1200 = vmatpush1.xpose.msra.mxu0 0.0
        %1201 = vmatprep.subr.mxu0 0.0
        %1202 = vmatpush1.xpose.msra.mxu0 0.0
        %1203 = vmatprep.subr.mxu0 0.0
        %1204 = vmatpush1.xpose.msra.mxu0 0.0
        %1205 = vmatprep.subr.mxu0 0.0
        %1206 = vmatpush1.xpose.msra.mxu0 0.0
        %1207 = vmatprep.subr.mxu0 0.0
        %1208 = vmatpush1.xpose.msra.mxu0 0.0
        %1209 = vmatprep.subr.mxu0 0.0
        %1210 = vmatpush1.xpose.msra.mxu0 0.0
        %1211 = vmatprep.subr.mxu0 0.0
        %1212 = vmatpush1.xpose.msra.mxu0 0.0
        %1213 = vmatprep.subr.mxu0 0.0
        %1214 = vmatpush1.xpose.msra.mxu0 0.0
        %1215 = vmatprep.mubr.f32.mxu0 0.0
        %1216 = vmatmul.mubr.f32.gmra.mrb[0].mxu0 %v1147
        %v1217 = vpop.f32.mrb[0].mxu0
        %v1218 = vadd.f32 %v847, %v1217
        %v1219 = vpop.f32.mrb[0].mxu0
        %1220 = vdwg.mxu0
        %v1221 = vsel %vm1055, %v1218, -inf
        %1222 = vmax.xlane.f32.xlu0 %v1221
        %v1223 = vpop.xlane.xlu0 %1222
        %v1224 = vsub.f32 %v1218, %v1223
        %v1225 = vmul.f32 %v1224, 1.442695
        %v1226 = vpow.pop %v1225
        %v1227 = vsel %vm1055, %v1226, 0.0
        %1228 = vadd.xlane.f32.xlu0 %v1227
        %v1229 = vpop.xlane.xlu0 %1228
        %v1230 = vrcp.pop %v1229
        %v1231 = vmul.f32 %v1226, %v1230
        %1232 = vrot.lane.b32.xlu0 %v974, 48
        %v1233 = vpop.permute.xlu0 %1232
        %v1236 = vsel %vm1055, %v1231, 0
        %1238 = vmatprep.subr.mxu0 0.0
        %1239 = vmatpush1.msra.mxu0 %v1233
        %1240 = vmatprep.subr.mxu0 0.0
        %1241 = vmatpush1.msra.mxu0 0.0
        %1242 = vmatprep.subr.mxu0 0.0
        %1243 = vmatpush1.msra.mxu0 0.0
        %1244 = vmatprep.subr.mxu0 0.0
        %1245 = vmatpush1.msra.mxu0 0.0
        %1246 = vmatprep.subr.mxu0 0.0
        %1247 = vmatpush1.msra.mxu0 0.0
        %1248 = vmatprep.subr.mxu0 0.0
        %1249 = vmatpush1.msra.mxu0 0.0
        %1250 = vmatprep.subr.mxu0 0.0
        %1251 = vmatpush1.msra.mxu0 0.0
        %1252 = vmatprep.subr.mxu0 0.0
        %1253 = vmatpush1.msra.mxu0 0.0
        %1254 = vmatprep.subr.mxu0 0.0
        %1255 = vmatpush1.msra.mxu0 0.0
        %1256 = vmatprep.subr.mxu0 0.0
        %1257 = vmatpush1.msra.mxu0 0.0
        %1258 = vmatprep.subr.mxu0 0.0
        %1259 = vmatpush1.msra.mxu0 0.0
        %1260 = vmatprep.subr.mxu0 0.0
        %1261 = vmatpush1.msra.mxu0 0.0
        %1262 = vmatprep.subr.mxu0 0.0
        %1263 = vmatpush1.msra.mxu0 0.0
        %1264 = vmatprep.subr.mxu0 0.0
        %1265 = vmatpush1.msra.mxu0 0.0
        %1266 = vmatprep.subr.mxu0 0.0
        %1267 = vmatpush1.msra.mxu0 0.0
        %1268 = vmatprep.subr.mxu0 0.0
        %1269 = vmatpush1.msra.mxu0 0.0
        %1270 = vmatprep.subr.mxu0 0.0
        %1271 = vmatpush1.msra.mxu0 0.0
        %1272 = vmatprep.subr.mxu0 0.0
        %1273 = vmatpush1.msra.mxu0 0.0
        %1274 = vmatprep.subr.mxu0 0.0
        %1275 = vmatpush1.msra.mxu0 0.0
        %1276 = vmatprep.subr.mxu0 0.0
        %1277 = vmatpush1.msra.mxu0 0.0
        %1278 = vmatprep.subr.mxu0 0.0
        %1279 = vmatpush1.msra.mxu0 0.0
        %1280 = vmatprep.subr.mxu0 0.0
        %1281 = vmatpush1.msra.mxu0 0.0
        %1282 = vmatprep.subr.mxu0 0.0
        %1283 = vmatpush1.msra.mxu0 0.0
        %1284 = vmatprep.subr.mxu0 0.0
        %1285 = vmatpush1.msra.mxu0 0.0
        %1286 = vmatprep.subr.mxu0 0.0
        %1287 = vmatpush1.msra.mxu0 0.0
        %1288 = vmatprep.subr.mxu0 0.0
        %1289 = vmatpush1.msra.mxu0 0.0
        %1290 = vmatprep.subr.mxu0 0.0
        %1291 = vmatpush1.msra.mxu0 0.0
        %1292 = vmatprep.subr.mxu0 0.0
        %1293 = vmatpush1.msra.mxu0 0.0
        %1294 = vmatprep.subr.mxu0 0.0
        %1295 = vmatpush1.msra.mxu0 0.0
        %1296 = vmatprep.subr.mxu0 0.0
        %1297 = vmatpush1.msra.mxu0 0.0
        %1298 = vmatprep.subr.mxu0 0.0
        %1299 = vmatpush1.msra.mxu0 0.0
        %1300 = vmatprep.subr.mxu0 0.0
        %1301 = vmatpush1.msra.mxu0 0.0
        %1302 = vmatprep.mubr.f32.mxu0 0.0
        %1303 = vmatmul.mubr.f32.gmra.mrb[0].mxu0 %v1236
        %v1304 = vpop.f32.mrb[0].mxu0
        %v1305 = vadd.f32 0.0, %v1304
        %v1306 = vpop.f32.mrb[0].mxu0
        %1307 = vdwg.mxu0
        %1309 = vrot.lane.b32.xlu0 %v1305, 16
        %v1310 = vpop.permute.xlu0 %1309
        %v1312 = vsel %vm980, %v1140, %v1310
        %v1313 = vld [vmem:[#allocation17] sm:$0xff]
        %v1314 = vld [vmem:[#allocation17 + $0x8] sm:$0xff]
        %v1315 = vld [vmem:[#allocation17 + $0x10] sm:$0xff]
        %v1316 = vld [vmem:[#allocation17 + $0x18] sm:$0xff]
        %v1317 = vld [vmem:[#allocation19] sm:$0x1]
        %v1319 = vlaneseq
        %v1320 = vshrl.u32 %v1319, 7
        %v1321 = vsub.s32 0, %v1320
        %v1322 = vrot.slane %v1317, %v1321
        %v1325 = vsel %vm867, %v1312, 0
        %v1328 = vsel %vm867, %v1313, 0
        %v1331 = vsel %vm867, %v1314, 0
        %v1334 = vsel %vm867, %v1315, 0
        %v1337 = vsel %vm867, %v1316, 0
        %1339 = vmatprep.subr.mxu0 0.0
        %1340 = vmatpush1.xpose.msra.mxu0 %v1328
        %1341 = vmatprep.subr.mxu0 0.0
        %1342 = vmatpush1.xpose.msra.mxu0 %v1331
        %1343 = vmatprep.subr.mxu0 0.0
        %1344 = vmatpush1.xpose.msra.mxu0 %v1334
        %1345 = vmatprep.subr.mxu0 0.0
        %1346 = vmatpush1.xpose.msra.mxu0 %v1337
        %1347 = vmatprep.subr.mxu0 0.0
        %1348 = vmatpush1.xpose.msra.mxu0 0.0
        %1349 = vmatprep.subr.mxu0 0.0
        %1350 = vmatpush1.xpose.msra.mxu0 0.0
        %1351 = vmatprep.subr.mxu0 0.0
        %1352 = vmatpush1.xpose.msra.mxu0 0.0
        %1353 = vmatprep.subr.mxu0 0.0
        %1354 = vmatpush1.xpose.msra.mxu0 0.0
        %1355 = vmatprep.subr.mxu0 0.0
        %1356 = vmatpush1.xpose.msra.mxu0 0.0
        %1357 = vmatprep.subr.mxu0 0.0
        %1358 = vmatpush1.xpose.msra.mxu0 0.0
        %1359 = vmatprep.subr.mxu0 0.0
        %1360 = vmatpush1.xpose.msra.mxu0 0.0
        %1361 = vmatprep.subr.mxu0 0.0
        %1362 = vmatpush1.xpose.msra.mxu0 0.0
        %1363 = vmatprep.subr.mxu0 0.0
        %1364 = vmatpush1.xpose.msra.mxu0 0.0
        %1365 = vmatprep.subr.mxu0 0.0
        %1366 = vmatpush1.xpose.msra.mxu0 0.0
        %1367 = vmatprep.subr.mxu0 0.0
        %1368 = vmatpush1.xpose.msra.mxu0 0.0
        %1369 = vmatprep.subr.mxu0 0.0
        %1370 = vmatpush1.xpose.msra.mxu0 0.0
        %1371 = vmatprep.subr.mxu0 0.0
        %1372 = vmatpush1.xpose.msra.mxu0 0.0
        %1373 = vmatprep.subr.mxu0 0.0
        %1374 = vmatpush1.xpose.msra.mxu0 0.0
        %1375 = vmatprep.subr.mxu0 0.0
        %1376 = vmatpush1.xpose.msra.mxu0 0.0
        %1377 = vmatprep.subr.mxu0 0.0
        %1378 = vmatpush1.xpose.msra.mxu0 0.0
        %1379 = vmatprep.subr.mxu0 0.0
        %1380 = vmatpush1.xpose.msra.mxu0 0.0
        %1381 = vmatprep.subr.mxu0 0.0
        %1382 = vmatpush1.xpose.msra.mxu0 0.0
        %1383 = vmatprep.subr.mxu0 0.0
        %1384 = vmatpush1.xpose.msra.mxu0 0.0
        %1385 = vmatprep.subr.mxu0 0.0
        %1386 = vmatpush1.xpose.msra.mxu0 0.0
        %1387 = vmatprep.subr.mxu0 0.0
        %1388 = vmatpush1.xpose.msra.mxu0 0.0
        %1389 = vmatprep.subr.mxu0 0.0
        %1390 = vmatpush1.xpose.msra.mxu0 0.0
        %1391 = vmatprep.subr.mxu0 0.0
        %1392 = vmatpush1.xpose.msra.mxu0 0.0
        %1393 = vmatprep.subr.mxu0 0.0
        %1394 = vmatpush1.xpose.msra.mxu0 0.0
        %1395 = vmatprep.subr.mxu0 0.0
        %1396 = vmatpush1.xpose.msra.mxu0 0.0
        %1397 = vmatprep.subr.mxu0 0.0
        %1398 = vmatpush1.xpose.msra.mxu0 0.0
        %1399 = vmatprep.subr.mxu0 0.0
        %1400 = vmatpush1.xpose.msra.mxu0 0.0
        %1401 = vmatprep.subr.mxu0 0.0
        %1402 = vmatpush1.xpose.msra.mxu0 0.0
        %1403 = vmatprep.mubr.f32.mxu0 0.0
        %1404 = vmatmul.mubr.f32.gmra.mrb[0].mxu0 %v1325
        %v1405 = vpop.f32.mrb[0].mxu0
        %v1406 = vadd.f32 %v1322, %v1405
        %v1407 = vpop.f32.mrb[0].mxu0
        %1408 = vdwg.mxu0
        %v1409 = vadd.f32 %v846, %v1406
        %v1410 = vld [vmem:[%s11] sm:$0x1]
        %v1411 = vld [vmem:[%s12] sm:$0x1]
        %v1412 = vsel %vm867, %v1409, 0.0
        %1413 = vadd.xlane.f32.xlu0 %v1412
        %v1414 = vpop.xlane.xlu0 %1413
        %v1415 = vrcp.pop 32.0
        %v1416 = vmul.f32 %v1414, %v1415
        %v1417 = vsub.f32 %v1409, %v1416
        %v1418 = vmul.f32 %v1417, %v1417
        %v1419 = vsel %vm867, %v1418, 0.0
        %1420 = vadd.xlane.f32.xlu0 %v1419
        %v1421 = vpop.xlane.xlu0 %1420
        %v1422 = vmul.f32 %v1421, %v1415
        %v1423 = vadd.f32 %v1422, 1e-05
        %v1424 = vrsqrt.pop %v1423
        %v1425 = vmul.f32 %v1417, %v1424
        %v1427 = vlaneseq
        %v1428 = vshrl.u32 %v1427, 7
        %v1429 = vsub.s32 0, %v1428
        %v1430 = vrot.slane %v1410, %v1429
        %v1432 = vmul.f32 %v1425, %v1430
        %v1434 = vlaneseq
        %v1435 = vshrl.u32 %v1434, 7
        %v1436 = vsub.s32 0, %v1435
        %v1437 = vrot.slane %v1411, %v1436
        %v1439 = vadd.f32 %v1432, %v1437
        %v1440 = vld [vmem:[#allocation20] sm:$0xff]
        %v1441 = vld [vmem:[#allocation20 + $0x8] sm:$0xff]
        %v1442 = vld [vmem:[#allocation20 + $0x10] sm:$0xff]
        %v1443 = vld [vmem:[#allocation20 + $0x18] sm:$0xff]
        %v1444 = vld [vmem:[%s14] sm:$0x1]
        %v1446 = vlaneseq
        %v1447 = vshrl.u32 %v1446, 7
        %v1448 = vsub.s32 0, %v1447
        %v1449 = vrot.slane %v1444, %v1448
        %v1452 = vsel %vm867, %v1439, 0
        %v1455 = vsel %vm867, %v1440, 0
        %v1458 = vsel %vm867, %v1441, 0
        %v1461 = vsel %vm867, %v1442, 0
        %v1464 = vsel %vm867, %v1443, 0
        %1466 = vmatprep.subr.mxu0 0.0
        %1467 = vmatpush1.xpose.msra.mxu0 %v1455
        %1468 = vmatprep.subr.mxu0 0.0
        %1469 = vmatpush1.xpose.msra.mxu0 %v1458
        %1470 = vmatprep.subr.mxu0 0.0
        %1471 = vmatpush1.xpose.msra.mxu0 %v1461
        %1472 = vmatprep.subr.mxu0 0.0
        %1473 = vmatpush1.xpose.msra.mxu0 %v1464
        %1474 = vmatprep.subr.mxu0 0.0
        %1475 = vmatpush1.xpose.msra.mxu0 0.0
        %1476 = vmatprep.subr.mxu0 0.0
        %1477 = vmatpush1.xpose.msra.mxu0 0.0
        %1478 = vmatprep.subr.mxu0 0.0
        %1479 = vmatpush1.xpose.msra.mxu0 0.0
        %1480 = vmatprep.subr.mxu0 0.0
        %1481 = vmatpush1.xpose.msra.mxu0 0.0
        %1482 = vmatprep.subr.mxu0 0.0
        %1483 = vmatpush1.xpose.msra.mxu0 0.0
        %1484 = vmatprep.subr.mxu0 0.0
        %1485 = vmatpush1.xpose.msra.mxu0 0.0
        %1486 = vmatprep.subr.mxu0 0.0
        %1487 = vmatpush1.xpose.msra.mxu0 0.0
        %1488 = vmatprep.subr.mxu0 0.0
        %1489 = vmatpush1.xpose.msra.mxu0 0.0
        %1490 = vmatprep.subr.mxu0 0.0
        %1491 = vmatpush1.xpose.msra.mxu0 0.0
        %1492 = vmatprep.subr.mxu0 0.0
        %1493 = vmatpush1.xpose.msra.mxu0 0.0
        %1494 = vmatprep.subr.mxu0 0.0
        %1495 = vmatpush1.xpose.msra.mxu0 0.0
        %1496 = vmatprep.subr.mxu0 0.0
        %1497 = vmatpush1.xpose.msra.mxu0 0.0
        %1498 = vmatprep.subr.mxu0 0.0
        %1499 = vmatpush1.xpose.msra.mxu0 0.0
        %1500 = vmatprep.subr.mxu0 0.0
        %1501 = vmatpush1.xpose.msra.mxu0 0.0
        %1502 = vmatprep.subr.mxu0 0.0
        %1503 = vmatpush1.xpose.msra.mxu0 0.0
        %1504 = vmatprep.subr.mxu0 0.0
        %1505 = vmatpush1.xpose.msra.mxu0 0.0
        %1506 = vmatprep.subr.mxu0 0.0
        %1507 = vmatpush1.xpose.msra.mxu0 0.0
        %1508 = vmatprep.subr.mxu0 0.0
        %1509 = vmatpush1.xpose.msra.mxu0 0.0
        %1510 = vmatprep.subr.mxu0 0.0
        %1511 = vmatpush1.xpose.msra.mxu0 0.0
        %1512 = vmatprep.subr.mxu0 0.0
        %1513 = vmatpush1.xpose.msra.mxu0 0.0
        %1514 = vmatprep.subr.mxu0 0.0
        %1515 = vmatpush1.xpose.msra.mxu0 0.0
        %1516 = vmatprep.subr.mxu0 0.0
        %1517 = vmatpush1.xpose.msra.mxu0 0.0
        %1518 = vmatprep.subr.mxu0 0.0
        %1519 = vmatpush1.xpose.msra.mxu0 0.0
        %1520 = vmatprep.subr.mxu0 0.0
        %1521 = vmatpush1.xpose.msra.mxu0 0.0
        %1522 = vmatprep.subr.mxu0 0.0
        %1523 = vmatpush1.xpose.msra.mxu0 0.0
        %1524 = vmatprep.subr.mxu0 0.0
        %1525 = vmatpush1.xpose.msra.mxu0 0.0
        %1526 = vmatprep.subr.mxu0 0.0
        %1527 = vmatpush1.xpose.msra.mxu0 0.0
        %1528 = vmatprep.subr.mxu0 0.0
        %1529 = vmatpush1.xpose.msra.mxu0 0.0
        %1530 = vmatprep.mubr.f32.mxu0 0.0
        %1531 = vmatmul.mubr.f32.gmra.mrb[0].mxu0 %v1452
        %v1532 = vpop.f32.mrb[0].mxu0
        %v1533 = vadd.f32 %v1449, %v1532
        %v1534 = vpop.f32.mrb[0].mxu0
        %1535 = vdwg.mxu0
        %v1536 = vmax.f32 %v1533, 0.0
        %v1537 = vld [vmem:[%s15] sm:$0xff]
        %v1538 = vld [vmem:[%s15 + $0x8] sm:$0xff]
        %v1539 = vld [vmem:[%s15 + $0x10] sm:$0xff]
        %v1540 = vld [vmem:[%s15 + $0x18] sm:$0xff]
        %v1541 = vld [vmem:[%s16] sm:$0x1]
        %v1543 = vlaneseq
        %v1544 = vshrl.u32 %v1543, 7
        %v1545 = vsub.s32 0, %v1544
        %v1546 = vrot.slane %v1541, %v1545
        %v1549 = vsel %vm867, %v1536, 0
        %v1552 = vsel %vm867, %v1537, 0
        %v1555 = vsel %vm867, %v1538, 0
        %v1558 = vsel %vm867, %v1539, 0
        %v1561 = vsel %vm867, %v1540, 0
        %1563 = vmatprep.subr.mxu0 0.0
        %1564 = vmatpush1.xpose.msra.mxu0 %v1552
        %1565 = vmatprep.subr.mxu0 0.0
        %1566 = vmatpush1.xpose.msra.mxu0 %v1555
        %1567 = vmatprep.subr.mxu0 0.0
        %1568 = vmatpush1.xpose.msra.mxu0 %v1558
        %1569 = vmatprep.subr.mxu0 0.0
        %1570 = vmatpush1.xpose.msra.mxu0 %v1561
        %1571 = vmatprep.subr.mxu0 0.0
        %1572 = vmatpush1.xpose.msra.mxu0 0.0
        %1573 = vmatprep.subr.mxu0 0.0
        %1574 = vmatpush1.xpose.msra.mxu0 0.0
        %1575 = vmatprep.subr.mxu0 0.0
        %1576 = vmatpush1.xpose.msra.mxu0 0.0
        %1577 = vmatprep.subr.mxu0 0.0
        %1578 = vmatpush1.xpose.msra.mxu0 0.0
        %1579 = vmatprep.subr.mxu0 0.0
        %1580 = vmatpush1.xpose.msra.mxu0 0.0
        %1581 = vmatprep.subr.mxu0 0.0
        %1582 = vmatpush1.xpose.msra.mxu0 0.0
        %1583 = vmatprep.subr.mxu0 0.0
        %1584 = vmatpush1.xpose.msra.mxu0 0.0
        %1585 = vmatprep.subr.mxu0 0.0
        %1586 = vmatpush1.xpose.msra.mxu0 0.0
        %1587 = vmatprep.subr.mxu0 0.0
        %1588 = vmatpush1.xpose.msra.mxu0 0.0
        %1589 = vmatprep.subr.mxu0 0.0
        %1590 = vmatpush1.xpose.msra.mxu0 0.0
        %1591 = vmatprep.subr.mxu0 0.0
        %1592 = vmatpush1.xpose.msra.mxu0 0.0
        %1593 = vmatprep.subr.mxu0 0.0
        %1594 = vmatpush1.xpose.msra.mxu0 0.0
        %1595 = vmatprep.subr.mxu0 0.0
        %1596 = vmatpush1.xpose.msra.mxu0 0.0
        %1597 = vmatprep.subr.mxu0 0.0
        %1598 = vmatpush1.xpose.msra.mxu0 0.0
        %1599 = vmatprep.subr.mxu0 0.0
        %1600 = vmatpush1.xpose.msra.mxu0 0.0
        %1601 = vmatprep.subr.mxu0 0.0
        %1602 = vmatpush1.xpose.msra.mxu0 0.0
        %1603 = vmatprep.subr.mxu0 0.0
        %1604 = vmatpush1.xpose.msra.mxu0 0.0
        %1605 = vmatprep.subr.mxu0 0.0
        %1606 = vmatpush1.xpose.msra.mxu0 0.0
        %1607 = vmatprep.subr.mxu0 0.0
        %1608 = vmatpush1.xpose.msra.mxu0 0.0
        %1609 = vmatprep.subr.mxu0 0.0
        %1610 = vmatpush1.xpose.msra.mxu0 0.0
        %1611 = vmatprep.subr.mxu0 0.0
        %1612 = vmatpush1.xpose.msra.mxu0 0.0
        %1613 = vmatprep.subr.mxu0 0.0
        %1614 = vmatpush1.xpose.msra.mxu0 0.0
        %1615 = vmatprep.subr.mxu0 0.0
        %1616 = vmatpush1.xpose.msra.mxu0 0.0
        %1617 = vmatprep.subr.mxu0 0.0
        %1618 = vmatpush1.xpose.msra.mxu0 0.0
        %1619 = vmatprep.subr.mxu0 0.0
        %1620 = vmatpush1.xpose.msra.mxu0 0.0
        %1621 = vmatprep.subr.mxu0 0.0
        %1622 = vmatpush1.xpose.msra.mxu0 0.0
        %1623 = vmatprep.subr.mxu0 0.0
        %1624 = vmatpush1.xpose.msra.mxu0 0.0
        %1625 = vmatprep.subr.mxu0 0.0
        %1626 = vmatpush1.xpose.msra.mxu0 0.0
        %1627 = vmatprep.mubr.f32.mxu0 0.0
        %1628 = vmatmul.mubr.f32.gmra.mrb[0].mxu0 %v1549
        %v1629 = vpop.f32.mrb[0].mxu0
        %v1630 = vadd.f32 %v1546, %v1629
        %v1631 = vpop.f32.mrb[0].mxu0
        %1632 = vdwg.mxu0
        %v1633 = vadd.f32 %v1439, %v1630
        %v1634 = vld [vmem:[%s17] sm:$0x1]
        %v1635 = vld [vmem:[%s18] sm:$0x1]
        %v1636 = vsel %vm867, %v1633, 0.0
        %1637 = vadd.xlane.f32.xlu0 %v1636
        %v1638 = vpop.xlane.xlu0 %1637
        %v1639 = vmul.f32 %v1638, %v1415
        %v1640 = vsub.f32 %v1633, %v1639
        %v1641 = vmul.f32 %v1640, %v1640
        %v1642 = vsel %vm867, %v1641, 0.0
        %1643 = vadd.xlane.f32.xlu0 %v1642
        %v1644 = vpop.xlane.xlu0 %1643
        %v1645 = vmul.f32 %v1644, %v1415
        %v1646 = vadd.f32 %v1645, 1e-05
        %v1647 = vrsqrt.pop %v1646
        %v1648 = vmul.f32 %v1640, %v1647
        %v1650 = vlaneseq
        %v1651 = vshrl.u32 %v1650, 7
        %v1652 = vsub.s32 0, %v1651
        %v1653 = vrot.slane %v1634, %v1652
        %v1655 = vmul.f32 %v1648, %v1653
        %v1657 = vlaneseq
        %v1658 = vshrl.u32 %v1657, 7
        %v1659 = vsub.s32 0, %v1658
        %v1660 = vrot.slane %v1635, %v1659
        %v1662 = vadd.f32 %v1655, %v1660
        %s1663 = scalar_lea.vmem [#allocation14], 96
        %v1664 = vld [vmem:[%s1663] sm:$0xff]
        %v1665 = vld [vmem:[%s1663 + $0x8] sm:$0xff]
        %v1666 = vld [vmem:[%s1663 + $0x10] sm:$0xff]
        %v1667 = vld [vmem:[%s1663 + $0x18] sm:$0xff]
        %v1668 = vld [vmem:[%s1663 + $0x20] sm:$0xff]
        %v1669 = vld [vmem:[%s1663 + $0x28] sm:$0xff]
        %v1670 = vld [vmem:[%s1663 + $0x30] sm:$0xff]
        %v1671 = vld [vmem:[%s1663 + $0x38] sm:$0xff]
        %v1672 = vld [vmem:[%s1663 + $0x40] sm:$0xff]
        %v1673 = vld [vmem:[%s1663 + $0x48] sm:$0xff]
        %v1674 = vld [vmem:[%s1663 + $0x50] sm:$0xff]
        %v1675 = vld [vmem:[%s1663 + $0x58] sm:$0xff]
        %s1676 = scalar_lea.vmem [#allocation16], 1
        %v1677 = vld [vmem:[%s1676] sm:$0x1]
        %v1679 = vlaneseq
        %v1680 = vshrl.u32 %v1679, 7
        %v1681 = vsub.s32 0, %v1680
        %v1682 = vrot.slane %v1677, %v1681
        %v1685 = vsel %vm867, %v1662, 0
        %v1688 = vsel %vm867, %v1664, 0
        %v1691 = vsel %vm867, %v1665, 0
        %v1694 = vsel %vm867, %v1666, 0
        %v1697 = vsel %vm867, %v1667, 0
        %v1700 = vsel %vm867, %v1668, 0
        %v1703 = vsel %vm867, %v1669, 0
        %v1706 = vsel %vm867, %v1670, 0
        %v1709 = vsel %vm867, %v1671, 0
        %v1712 = vsel %vm867, %v1672, 0
        %v1715 = vsel %vm867, %v1673, 0
        %v1718 = vsel %vm867, %v1674, 0
        %v1721 = vsel %vm867, %v1675, 0
        %1723 = vmatprep.subr.mxu0 0.0
        %1724 = vmatpush1.xpose.msra.mxu0 %v1688
        %1725 = vmatprep.subr.mxu0 0.0
        %1726 = vmatpush1.xpose.msra.mxu0 %v1691
        %1727 = vmatprep.subr.mxu0 0.0
        %1728 = vmatpush1.xpose.msra.mxu0 %v1694
        %1729 = vmatprep.subr.mxu0 0.0
        %1730 = vmatpush1.xpose.msra.mxu0 %v1697
        %1731 = vmatprep.subr.mxu0 0.0
        %1732 = vmatpush1.xpose.msra.mxu0 %v1700
        %1733 = vmatprep.subr.mxu0 0.0
        %1734 = vmatpush1.xpose.msra.mxu0 %v1703
        %1735 = vmatprep.subr.mxu0 0.0
        %1736 = vmatpush1.xpose.msra.mxu0 %v1706
        %1737 = vmatprep.subr.mxu0 0.0
        %1738 = vmatpush1.xpose.msra.mxu0 %v1709
        %1739 = vmatprep.subr.mxu0 0.0
        %1740 = vmatpush1.xpose.msra.mxu0 %v1712
        %1741 = vmatprep.subr.mxu0 0.0
        %1742 = vmatpush1.xpose.msra.mxu0 %v1715
        %1743 = vmatprep.subr.mxu0 0.0
        %1744 = vmatpush1.xpose.msra.mxu0 %v1718
        %1745 = vmatprep.subr.mxu0 0.0
        %1746 = vmatpush1.xpose.msra.mxu0 %v1721
        %1747 = vmatprep.subr.mxu0 0.0
        %1748 = vmatpush1.xpose.msra.mxu0 0.0
        %1749 = vmatprep.subr.mxu0 0.0
        %1750 = vmatpush1.xpose.msra.mxu0 0.0
        %1751 = vmatprep.subr.mxu0 0.0
        %1752 = vmatpush1.xpose.msra.mxu0 0.0
        %1753 = vmatprep.subr.mxu0 0.0
        %1754 = vmatpush1.xpose.msra.mxu0 0.0
        %1755 = vmatprep.subr.mxu0 0.0
        %1756 = vmatpush1.xpose.msra.mxu0 0.0
        %1757 = vmatprep.subr.mxu0 0.0
        %1758 = vmatpush1.xpose.msra.mxu0 0.0
        %1759 = vmatprep.subr.mxu0 0.0
        %1760 = vmatpush1.xpose.msra.mxu0 0.0
        %1761 = vmatprep.subr.mxu0 0.0
        %1762 = vmatpush1.xpose.msra.mxu0 0.0
        %1763 = vmatprep.subr.mxu0 0.0
        %1764 = vmatpush1.xpose.msra.mxu0 0.0
        %1765 = vmatprep.subr.mxu0 0.0
        %1766 = vmatpush1.xpose.msra.mxu0 0.0
        %1767 = vmatprep.subr.mxu0 0.0
        %1768 = vmatpush1.xpose.msra.mxu0 0.0
        %1769 = vmatprep.subr.mxu0 0.0
        %1770 = vmatpush1.xpose.msra.mxu0 0.0
        %1771 = vmatprep.subr.mxu0 0.0
        %1772 = vmatpush1.xpose.msra.mxu0 0.0
        %1773 = vmatprep.subr.mxu0 0.0
        %1774 = vmatpush1.xpose.msra.mxu0 0.0
        %1775 = vmatprep.subr.mxu0 0.0
        %1776 = vmatpush1.xpose.msra.mxu0 0.0
        %1777 = vmatprep.subr.mxu0 0.0
        %1778 = vmatpush1.xpose.msra.mxu0 0.0
        %1779 = vmatprep.subr.mxu0 0.0
        %1780 = vmatpush1.xpose.msra.mxu0 0.0
        %1781 = vmatprep.subr.mxu0 0.0
        %1782 = vmatpush1.xpose.msra.mxu0 0.0
        %1783 = vmatprep.subr.mxu0 0.0
        %1784 = vmatpush1.xpose.msra.mxu0 0.0
        %1785 = vmatprep.subr.mxu0 0.0
        %1786 = vmatpush1.xpose.msra.mxu0 0.0
        %1787 = vmatprep.mubr.f32.mxu0 0.0
        %1788 = vmatmul.mubr.f32.gmra.mrb[0].mxu0 %v1685
        %v1789 = vpop.f32.mrb[0].mxu0
        %v1790 = vadd.f32 %v1682, %v1789
        %v1791 = vpop.f32.mrb[0].mxu0
        %1792 = vdwg.mxu0
        %1794 = vrot.lane.b32.xlu0 %v1790, 96
        %v1795 = vpop.permute.xlu0 %1794
        %v1796 = vsel %vm980, %v1790, 0
        %v1798 = vsel %vm980, %v1795, 0
        %1800 = vmatprep.subr.mxu0 0.0
        %1801 = vmatpush1.xpose.msra.mxu0 %v1798
        %1802 = vmatprep.subr.mxu0 0.0
        %1803 = vmatpush1.xpose.msra.mxu0 0.0
        %1804 = vmatprep.subr.mxu0 0.0
        %1805 = vmatpush1.xpose.msra.mxu0 0.0
        %1806 = vmatprep.subr.mxu0 0.0
        %1807 = vmatpush1.xpose.msra.mxu0 0.0
        %1808 = vmatprep.subr.mxu0 0.0
        %1809 = vmatpush1.xpose.msra.mxu0 0.0
        %1810 = vmatprep.subr.mxu0 0.0
        %1811 = vmatpush1.xpose.msra.mxu0 0.0
        %1812 = vmatprep.subr.mxu0 0.0
        %1813 = vmatpush1.xpose.msra.mxu0 0.0
        %1814 = vmatprep.subr.mxu0 0.0
        %1815 = vmatpush1.xpose.msra.mxu0 0.0
        %1816 = vmatprep.subr.mxu0 0.0
        %1817 = vmatpush1.xpose.msra.mxu0 0.0
        %1818 = vmatprep.subr.mxu0 0.0
        %1819 = vmatpush1.xpose.msra.mxu0 0.0
        %1820 = vmatprep.subr.mxu0 0.0
        %1821 = vmatpush1.xpose.msra.mxu0 0.0
        %1822 = vmatprep.subr.mxu0 0.0
        %1823 = vmatpush1.xpose.msra.mxu0 0.0
        %1824 = vmatprep.subr.mxu0 0.0
        %1825 = vmatpush1.xpose.msra.mxu0 0.0
        %1826 = vmatprep.subr.mxu0 0.0
        %1827 = vmatpush1.xpose.msra.mxu0 0.0
        %1828 = vmatprep.subr.mxu0 0.0
        %1829 = vmatpush1.xpose.msra.mxu0 0.0
        %1830 = vmatprep.subr.mxu0 0.0
        %1831 = vmatpush1.xpose.msra.mxu0 0.0
        %1832 = vmatprep.subr.mxu0 0.0
        %1833 = vmatpush1.xpose.msra.mxu0 0.0
        %1834 = vmatprep.subr.mxu0 0.0
        %1835 = vmatpush1.xpose.msra.mxu0 0.0
        %1836 = vmatprep.subr.mxu0 0.0
        %1837 = vmatpush1.xpose.msra.mxu0 0.0
        %1838 = vmatprep.subr.mxu0 0.0
        %1839 = vmatpush1.xpose.msra.mxu0 0.0
        %1840 = vmatprep.subr.mxu0 0.0
        %1841 = vmatpush1.xpose.msra.mxu0 0.0
        %1842 = vmatprep.subr.mxu0 0.0
        %1843 = vmatpush1.xpose.msra.mxu0 0.0
        %1844 = vmatprep.subr.mxu0 0.0
        %1845 = vmatpush1.xpose.msra.mxu0 0.0
        %1846 = vmatprep.subr.mxu0 0.0
        %1847 = vmatpush1.xpose.msra.mxu0 0.0
        %1848 = vmatprep.subr.mxu0 0.0
        %1849 = vmatpush1.xpose.msra.mxu0 0.0
        %1850 = vmatprep.subr.mxu0 0.0
        %1851 = vmatpush1.xpose.msra.mxu0 0.0
        %1852 = vmatprep.subr.mxu0 0.0
        %1853 = vmatpush1.xpose.msra.mxu0 0.0
        %1854 = vmatprep.subr.mxu0 0.0
        %1855 = vmatpush1.xpose.msra.mxu0 0.0
        %1856 = vmatprep.subr.mxu0 0.0
        %1857 = vmatpush1.xpose.msra.mxu0 0.0
        %1858 = vmatprep.subr.mxu0 0.0
        %1859 = vmatpush1.xpose.msra.mxu0 0.0
        %1860 = vmatprep.subr.mxu0 0.0
        %1861 = vmatpush1.xpose.msra.mxu0 0.0
        %1862 = vmatprep.subr.mxu0 0.0
        %1863 = vmatpush1.xpose.msra.mxu0 0.0
        %1864 = vmatprep.mubr.f32.mxu0 0.0
        %1865 = vmatmul.mubr.f32.gmra.mrb[0].mxu0 %v1796
        %v1866 = vpop.f32.mrb[0].mxu0
        %v1867 = vadd.f32 %v847, %v1866
        %v1868 = vpop.f32.mrb[0].mxu0
        %1869 = vdwg.mxu0
        %v1870 = vsel %vm1055, %v1867, -inf
        %1871 = vmax.xlane.f32.xlu0 %v1870
        %v1872 = vpop.xlane.xlu0 %1871
        %v1873 = vsub.f32 %v1867, %v1872
        %v1874 = vmul.f32 %v1873, 1.442695
        %v1875 = vpow.pop %v1874
        %v1876 = vsel %vm1055, %v1875, 0.0
        %1877 = vadd.xlane.f32.xlu0 %v1876
        %v1878 = vpop.xlane.xlu0 %1877
        %v1879 = vrcp.pop %v1878
        %v1880 = vmul.f32 %v1875, %v1879
        %1881 = vrot.lane.b32.xlu0 %v1790, 64
        %v1882 = vpop.permute.xlu0 %1881
        %v1885 = vsel %vm1055, %v1880, 0
        %1887 = vmatprep.subr.mxu0 0.0
        %1888 = vmatpush1.msra.mxu0 %v1882
        %1889 = vmatprep.subr.mxu0 0.0
        %1890 = vmatpush1.msra.mxu0 0.0
        %1891 = vmatprep.subr.mxu0 0.0
        %1892 = vmatpush1.msra.mxu0 0.0
        %1893 = vmatprep.subr.mxu0 0.0
        %1894 = vmatpush1.msra.mxu0 0.0
        %1895 = vmatprep.subr.mxu0 0.0
        %1896 = vmatpush1.msra.mxu0 0.0
        %1897 = vmatprep.subr.mxu0 0.0
        %1898 = vmatpush1.msra.mxu0 0.0
        %1899 = vmatprep.subr.mxu0 0.0
        %1900 = vmatpush1.msra.mxu0 0.0
        %1901 = vmatprep.subr.mxu0 0.0
        %1902 = vmatpush1.msra.mxu0 0.0
        %1903 = vmatprep.subr.mxu0 0.0
        %1904 = vmatpush1.msra.mxu0 0.0
        %1905 = vmatprep.subr.mxu0 0.0
        %1906 = vmatpush1.msra.mxu0 0.0
        %1907 = vmatprep.subr.mxu0 0.0
        %1908 = vmatpush1.msra.mxu0 0.0
        %1909 = vmatprep.subr.mxu0 0.0
        %1910 = vmatpush1.msra.mxu0 0.0
        %1911 = vmatprep.subr.mxu0 0.0
        %1912 = vmatpush1.msra.mxu0 0.0
        %1913 = vmatprep.subr.mxu0 0.0
        %1914 = vmatpush1.msra.mxu0 0.0
        %1915 = vmatprep.subr.mxu0 0.0
        %1916 = vmatpush1.msra.mxu0 0.0
        %1917 = vmatprep.subr.mxu0 0.0
        %1918 = vmatpush1.msra.mxu0 0.0
        %1919 = vmatprep.subr.mxu0 0.0
        %1920 = vmatpush1.msra.mxu0 0.0
        %1921 = vmatprep.subr.mxu0 0.0
        %1922 = vmatpush1.msra.mxu0 0.0
        %1923 = vmatprep.subr.mxu0 0.0
        %1924 = vmatpush1.msra.mxu0 0.0
        %1925 = vmatprep.subr.mxu0 0.0
        %1926 = vmatpush1.msra.mxu0 0.0
        %1927 = vmatprep.subr.mxu0 0.0
        %1928 = vmatpush1.msra.mxu0 0.0
        %1929 = vmatprep.subr.mxu0 0.0
        %1930 = vmatpush1.msra.mxu0 0.0
        %1931 = vmatprep.subr.mxu0 0.0
        %1932 = vmatpush1.msra.mxu0 0.0
        %1933 = vmatprep.subr.mxu0 0.0
        %1934 = vmatpush1.msra.mxu0 0.0
        %1935 = vmatprep.subr.mxu0 0.0
        %1936 = vmatpush1.msra.mxu0 0.0
        %1937 = vmatprep.subr.mxu0 0.0
        %1938 = vmatpush1.msra.mxu0 0.0
        %1939 = vmatprep.subr.mxu0 0.0
        %1940 = vmatpush1.msra.mxu0 0.0
        %1941 = vmatprep.subr.mxu0 0.0
        %1942 = vmatpush1.msra.mxu0 0.0
        %1943 = vmatprep.subr.mxu0 0.0
        %1944 = vmatpush1.msra.mxu0 0.0
        %1945 = vmatprep.subr.mxu0 0.0
        %1946 = vmatpush1.msra.mxu0 0.0
        %1947 = vmatprep.subr.mxu0 0.0
        %1948 = vmatpush1.msra.mxu0 0.0
        %1949 = vmatprep.subr.mxu0 0.0
        %1950 = vmatpush1.msra.mxu0 0.0
        %1951 = vmatprep.mubr.f32.mxu0 0.0
        %1952 = vmatmul.mubr.f32.gmra.mrb[0].mxu0 %v1885
        %v1953 = vpop.f32.mrb[0].mxu0
        %v1954 = vadd.f32 0.0, %v1953
        %v1955 = vpop.f32.mrb[0].mxu0
        %1956 = vdwg.mxu0
        %1957 = vrot.lane.b32.xlu0 %v1790, 112
        %v1958 = vpop.permute.xlu0 %1957
        %1959 = vrot.lane.b32.xlu0 %v1790, 80
        %v1960 = vpop.permute.xlu0 %1959
        %v1961 = vsel %vm980, %v1958, 0
        %v1963 = vsel %vm980, %v1960, 0
        %1965 = vmatprep.subr.mxu0 0.0
        %1966 = vmatpush1.xpose.msra.mxu0 %v1963
        %1967 = vmatprep.subr.mxu0 0.0
        %1968 = vmatpush1.xpose.msra.mxu0 0.0
        %1969 = vmatprep.subr.mxu0 0.0
        %1970 = vmatpush1.xpose.msra.mxu0 0.0
        %1971 = vmatprep.subr.mxu0 0.0
        %1972 = vmatpush1.xpose.msra.mxu0 0.0
        %1973 = vmatprep.subr.mxu0 0.0
        %1974 = vmatpush1.xpose.msra.mxu0 0.0
        %1975 = vmatprep.subr.mxu0 0.0
        %1976 = vmatpush1.xpose.msra.mxu0 0.0
        %1977 = vmatprep.subr.mxu0 0.0
        %1978 = vmatpush1.xpose.msra.mxu0 0.0
        %1979 = vmatprep.subr.mxu0 0.0
        %1980 = vmatpush1.xpose.msra.mxu0 0.0
        %1981 = vmatprep.subr.mxu0 0.0
        %1982 = vmatpush1.xpose.msra.mxu0 0.0
        %1983 = vmatprep.subr.mxu0 0.0
        %1984 = vmatpush1.xpose.msra.mxu0 0.0
        %1985 = vmatprep.subr.mxu0 0.0
        %1986 = vmatpush1.xpose.msra.mxu0 0.0
        %1987 = vmatprep.subr.mxu0 0.0
        %1988 = vmatpush1.xpose.msra.mxu0 0.0
        %1989 = vmatprep.subr.mxu0 0.0
        %1990 = vmatpush1.xpose.msra.mxu0 0.0
        %1991 = vmatprep.subr.mxu0 0.0
        %1992 = vmatpush1.xpose.msra.mxu0 0.0
        %1993 = vmatprep.subr.mxu0 0.0
        %1994 = vmatpush1.xpose.msra.mxu0 0.0
        %1995 = vmatprep.subr.mxu0 0.0
        %1996 = vmatpush1.xpose.msra.mxu0 0.0
        %1997 = vmatprep.subr.mxu0 0.0
        %1998 = vmatpush1.xpose.msra.mxu0 0.0
        %1999 = vmatprep.subr.mxu0 0.0
        %2000 = vmatpush1.xpose.msra.mxu0 0.0
        %2001 = vmatprep.subr.mxu0 0.0
        %2002 = vmatpush1.xpose.msra.mxu0 0.0
        %2003 = vmatprep.subr.mxu0 0.0
        %2004 = vmatpush1.xpose.msra.mxu0 0.0
        %2005 = vmatprep.subr.mxu0 0.0
        %2006 = vmatpush1.xpose.msra.mxu0 0.0
        %2007 = vmatprep.subr.mxu0 0.0
        %2008 = vmatpush1.xpose.msra.mxu0 0.0
        %2009 = vmatprep.subr.mxu0 0.0
        %2010 = vmatpush1.xpose.msra.mxu0 0.0
        %2011 = vmatprep.subr.mxu0 0.0
        %2012 = vmatpush1.xpose.msra.mxu0 0.0
        %2013 = vmatprep.subr.mxu0 0.0
        %2014 = vmatpush1.xpose.msra.mxu0 0.0
        %2015 = vmatprep.subr.mxu0 0.0
        %2016 = vmatpush1.xpose.msra.mxu0 0.0
        %2017 = vmatprep.subr.mxu0 0.0
        %2018 = vmatpush1.xpose.msra.mxu0 0.0
        %2019 = vmatprep.subr.mxu0 0.0
        %2020 = vmatpush1.xpose.msra.mxu0 0.0
        %2021 = vmatprep.subr.mxu0 0.0
        %2022 = vmatpush1.xpose.msra.mxu0 0.0
        %2023 = vmatprep.subr.mxu0 0.0
        %2024 = vmatpush1.xpose.msra.mxu0 0.0
        %2025 = vmatprep.subr.mxu0 0.0
        %2026 = vmatpush1.xpose.msra.mxu0 0.0
        %2027 = vmatprep.subr.mxu0 0.0
        %2028 = vmatpush1.xpose.msra.mxu0 0.0
        %2029 = vmatprep.mubr.f32.mxu0 0.0
        %2030 = vmatmul.mubr.f32.gmra.mrb[0].mxu0 %v1961
        %v2031 = vpop.f32.mrb[0].mxu0
        %v2032 = vadd.f32 %v847, %v2031
        %v2033 = vpop.f32.mrb[0].mxu0
        %2034 = vdwg.mxu0
        %v2035 = vsel %vm1055, %v2032, -inf
        %2036 = vmax.xlane.f32.xlu0 %v2035
        %v2037 = vpop.xlane.xlu0 %2036
        %v2038 = vsub.f32 %v2032, %v2037
        %v2039 = vmul.f32 %v2038, 1.442695
        %v2040 = vpow.pop %v2039
        %v2041 = vsel %vm1055, %v2040, 0.0
        %2042 = vadd.xlane.f32.xlu0 %v2041
        %v2043 = vpop.xlane.xlu0 %2042
        %v2044 = vrcp.pop %v2043
        %v2045 = vmul.f32 %v2040, %v2044
        %2046 = vrot.lane.b32.xlu0 %v1790, 48
        %v2047 = vpop.permute.xlu0 %2046
        %v2050 = vsel %vm1055, %v2045, 0
        %2052 = vmatprep.subr.mxu0 0.0
        %2053 = vmatpush1.msra.mxu0 %v2047
        %2054 = vmatprep.subr.mxu0 0.0
        %2055 = vmatpush1.msra.mxu0 0.0
        %2056 = vmatprep.subr.mxu0 0.0
        %2057 = vmatpush1.msra.mxu0 0.0
        %2058 = vmatprep.subr.mxu0 0.0
        %2059 = vmatpush1.msra.mxu0 0.0
        %2060 = vmatprep.subr.mxu0 0.0
        %2061 = vmatpush1.msra.mxu0 0.0
        %2062 = vmatprep.subr.mxu0 0.0
        %2063 = vmatpush1.msra.mxu0 0.0
        %2064 = vmatprep.subr.mxu0 0.0
        %2065 = vmatpush1.msra.mxu0 0.0
        %2066 = vmatprep.subr.mxu0 0.0
        %2067 = vmatpush1.msra.mxu0 0.0
        %2068 = vmatprep.subr.mxu0 0.0
        %2069 = vmatpush1.msra.mxu0 0.0
        %2070 = vmatprep.subr.mxu0 0.0
        %2071 = vmatpush1.msra.mxu0 0.0
        %2072 = vmatprep.subr.mxu0 0.0
        %2073 = vmatpush1.msra.mxu0 0.0
        %2074 = vmatprep.subr.mxu0 0.0
        %2075 = vmatpush1.msra.mxu0 0.0
        %2076 = vmatprep.subr.mxu0 0.0
        %2077 = vmatpush1.msra.mxu0 0.0
        %2078 = vmatprep.subr.mxu0 0.0
        %2079 = vmatpush1.msra.mxu0 0.0
        %2080 = vmatprep.subr.mxu0 0.0
        %2081 = vmatpush1.msra.mxu0 0.0
        %2082 = vmatprep.subr.mxu0 0.0
        %2083 = vmatpush1.msra.mxu0 0.0
        %2084 = vmatprep.subr.mxu0 0.0
        %2085 = vmatpush1.msra.mxu0 0.0
        %2086 = vmatprep.subr.mxu0 0.0
        %2087 = vmatpush1.msra.mxu0 0.0
        %2088 = vmatprep.subr.mxu0 0.0
        %2089 = vmatpush1.msra.mxu0 0.0
        %2090 = vmatprep.subr.mxu0 0.0
        %2091 = vmatpush1.msra.mxu0 0.0
        %2092 = vmatprep.subr.mxu0 0.0
        %2093 = vmatpush1.msra.mxu0 0.0
        %2094 = vmatprep.subr.mxu0 0.0
        %2095 = vmatpush1.msra.mxu0 0.0
        %2096 = vmatprep.subr.mxu0 0.0
        %2097 = vmatpush1.msra.mxu0 0.0
        %2098 = vmatprep.subr.mxu0 0.0
        %2099 = vmatpush1.msra.mxu0 0.0
        %2100 = vmatprep.subr.mxu0 0.0
        %2101 = vmatpush1.msra.mxu0 0.0
        %2102 = vmatprep.subr.mxu0 0.0
        %2103 = vmatpush1.msra.mxu0 0.0
        %2104 = vmatprep.subr.mxu0 0.0
        %2105 = vmatpush1.msra.mxu0 0.0
        %2106 = vmatprep.subr.mxu0 0.0
        %2107 = vmatpush1.msra.mxu0 0.0
        %2108 = vmatprep.subr.mxu0 0.0
        %2109 = vmatpush1.msra.mxu0 0.0
        %2110 = vmatprep.subr.mxu0 0.0
        %2111 = vmatpush1.msra.mxu0 0.0
        %2112 = vmatprep.subr.mxu0 0.0
        %2113 = vmatpush1.msra.mxu0 0.0
        %2114 = vmatprep.subr.mxu0 0.0
        %2115 = vmatpush1.msra.mxu0 0.0
        %2116 = vmatprep.mubr.f32.mxu0 0.0
        %2117 = vmatmul.mubr.f32.gmra.mrb[0].mxu0 %v2050
        %v2118 = vpop.f32.mrb[0].mxu0
        %v2119 = vadd.f32 0.0, %v2118
        %v2120 = vpop.f32.mrb[0].mxu0
        %2121 = vdwg.mxu0
        %2123 = vrot.lane.b32.xlu0 %v2119, 16
        %v2124 = vpop.permute.xlu0 %2123
        %v2126 = vsel %vm980, %v1954, %v2124
        %s2127 = scalar_lea.vmem [#allocation17], 32
        %v2128 = vld [vmem:[%s2127] sm:$0xff]
        %v2129 = vld [vmem:[%s2127 + $0x8] sm:$0xff]
        %v2130 = vld [vmem:[%s2127 + $0x10] sm:$0xff]
        %v2131 = vld [vmem:[%s2127 + $0x18] sm:$0xff]
        %s2132 = scalar_lea.vmem [#allocation19], 1
        %v2133 = vld [vmem:[%s2132] sm:$0x1]
        %v2135 = vlaneseq
        %v2136 = vshrl.u32 %v2135, 7
        %v2137 = vsub.s32 0, %v2136
        %v2138 = vrot.slane %v2133, %v2137
        %v2141 = vsel %vm867, %v2126, 0
        %v2144 = vsel %vm867, %v2128, 0
        %v2147 = vsel %vm867, %v2129, 0
        %v2150 = vsel %vm867, %v2130, 0
        %v2153 = vsel %vm867, %v2131, 0
        %2155 = vmatprep.subr.mxu0 0.0
        %2156 = vmatpush1.xpose.msra.mxu0 %v2144
        %2157 = vmatprep.subr.mxu0 0.0
        %2158 = vmatpush1.xpose.msra.mxu0 %v2147
        %2159 = vmatprep.subr.mxu0 0.0
        %2160 = vmatpush1.xpose.msra.mxu0 %v2150
        %2161 = vmatprep.subr.mxu0 0.0
        %2162 = vmatpush1.xpose.msra.mxu0 %v2153
        %2163 = vmatprep.subr.mxu0 0.0
        %2164 = vmatpush1.xpose.msra.mxu0 0.0
        %2165 = vmatprep.subr.mxu0 0.0
        %2166 = vmatpush1.xpose.msra.mxu0 0.0
        %2167 = vmatprep.subr.mxu0 0.0
        %2168 = vmatpush1.xpose.msra.mxu0 0.0
        %2169 = vmatprep.subr.mxu0 0.0
        %2170 = vmatpush1.xpose.msra.mxu0 0.0
        %2171 = vmatprep.subr.mxu0 0.0
        %2172 = vmatpush1.xpose.msra.mxu0 0.0
        %2173 = vmatprep.subr.mxu0 0.0
        %2174 = vmatpush1.xpose.msra.mxu0 0.0
        %2175 = vmatprep.subr.mxu0 0.0
        %2176 = vmatpush1.xpose.msra.mxu0 0.0
        %2177 = vmatprep.subr.mxu0 0.0
        %2178 = vmatpush1.xpose.msra.mxu0 0.0
        %2179 = vmatprep.subr.mxu0 0.0
        %2180 = vmatpush1.xpose.msra.mxu0 0.0
        %2181 = vmatprep.subr.mxu0 0.0
        %2182 = vmatpush1.xpose.msra.mxu0 0.0
        %2183 = vmatprep.subr.mxu0 0.0
        %2184 = vmatpush1.xpose.msra.mxu0 0.0
        %2185 = vmatprep.subr.mxu0 0.0
        %2186 = vmatpush1.xpose.msra.mxu0 0.0
        %2187 = vmatprep.subr.mxu0 0.0
        %2188 = vmatpush1.xpose.msra.mxu0 0.0
        %2189 = vmatprep.subr.mxu0 0.0
        %2190 = vmatpush1.xpose.msra.mxu0 0.0
        %2191 = vmatprep.subr.mxu0 0.0
        %2192 = vmatpush1.xpose.msra.mxu0 0.0
        %2193 = vmatprep.subr.mxu0 0.0
        %2194 = vmatpush1.xpose.msra.mxu0 0.0
        %2195 = vmatprep.subr.mxu0 0.0
        %2196 = vmatpush1.xpose.msra.mxu0 0.0
        %2197 = vmatprep.subr.mxu0 0.0
        %2198 = vmatpush1.xpose.msra.mxu0 0.0
        %2199 = vmatprep.subr.mxu0 0.0
        %2200 = vmatpush1.xpose.msra.mxu0 0.0
        %2201 = vmatprep.subr.mxu0 0.0
        %2202 = vmatpush1.xpose.msra.mxu0 0.0
        %2203 = vmatprep.subr.mxu0 0.0
        %2204 = vmatpush1.xpose.msra.mxu0 0.0
        %2205 = vmatprep.subr.mxu0 0.0
        %2206 = vmatpush1.xpose.msra.mxu0 0.0
        %2207 = vmatprep.subr.mxu0 0.0
        %2208 = vmatpush1.xpose.msra.mxu0 0.0
        %2209 = vmatprep.subr.mxu0 0.0
        %2210 = vmatpush1.xpose.msra.mxu0 0.0
        %2211 = vmatprep.subr.mxu0 0.0
        %2212 = vmatpush1.xpose.msra.mxu0 0.0
        %2213 = vmatprep.subr.mxu0 0.0
        %2214 = vmatpush1.xpose.msra.mxu0 0.0
        %2215 = vmatprep.subr.mxu0 0.0
        %2216 = vmatpush1.xpose.msra.mxu0 0.0
        %2217 = vmatprep.subr.mxu0 0.0
        %2218 = vmatpush1.xpose.msra.mxu0 0.0
        %2219 = vmatprep.mubr.f32.mxu0 0.0
        %2220 = vmatmul.mubr.f32.gmra.mrb[0].mxu0 %v2141
        %v2221 = vpop.f32.mrb[0].mxu0
        %v2222 = vadd.f32 %v2138, %v2221
        %v2223 = vpop.f32.mrb[0].mxu0
        %2224 = vdwg.mxu0
        %v2225 = vadd.f32 %v1662, %v2222
        %s2226 = scalar_lea.vmem %s11, 1
        %v2227 = vld [vmem:[%s2226] sm:$0x1]
        %s2228 = scalar_lea.vmem %s12, 1
        %v2229 = vld [vmem:[%s2228] sm:$0x1]
        %v2230 = vsel %vm867, %v2225, 0.0
        %2231 = vadd.xlane.f32.xlu0 %v2230
        %v2232 = vpop.xlane.xlu0 %2231
        %v2233 = vmul.f32 %v2232, %v1415
        %v2234 = vsub.f32 %v2225, %v2233
        %v2235 = vmul.f32 %v2234, %v2234
        %v2236 = vsel %vm867, %v2235, 0.0
        %2237 = vadd.xlane.f32.xlu0 %v2236
        %v2238 = vpop.xlane.xlu0 %2237
        %v2239 = vmul.f32 %v2238, %v1415
        %v2240 = vadd.f32 %v2239, 1e-05
        %v2241 = vrsqrt.pop %v2240
        %v2242 = vmul.f32 %v2234, %v2241
        %v2244 = vlaneseq
        %v2245 = vshrl.u32 %v2244, 7
        %v2246 = vsub.s32 0, %v2245
        %v2247 = vrot.slane %v2227, %v2246
        %v2249 = vmul.f32 %v2242, %v2247
        %v2251 = vlaneseq
        %v2252 = vshrl.u32 %v2251, 7
        %v2253 = vsub.s32 0, %v2252
        %v2254 = vrot.slane %v2229, %v2253
        %v2256 = vadd.f32 %v2249, %v2254
        %s2257 = scalar_lea.vmem [#allocation20], 32
        %v2258 = vld [vmem:[%s2257] sm:$0xff]
        %v2259 = vld [vmem:[%s2257 + $0x8] sm:$0xff]
        %v2260 = vld [vmem:[%s2257 + $0x10] sm:$0xff]
        %v2261 = vld [vmem:[%s2257 + $0x18] sm:$0xff]
        %s2262 = scalar_lea.vmem %s14, 1
        %v2263 = vld [vmem:[%s2262] sm:$0x1]
        %v2265 = vlaneseq
        %v2266 = vshrl.u32 %v2265, 7
        %v2267 = vsub.s32 0, %v2266
        %v2268 = vrot.slane %v2263, %v2267
        %v2271 = vsel %vm867, %v2256, 0
        %v2274 = vsel %vm867, %v2258, 0
        %v2277 = vsel %vm867, %v2259, 0
        %v2280 = vsel %vm867, %v2260, 0
        %v2283 = vsel %vm867, %v2261, 0
        %2285 = vmatprep.subr.mxu0 0.0
        %2286 = vmatpush1.xpose.msra.mxu0 %v2274
        %2287 = vmatprep.subr.mxu0 0.0
        %2288 = vmatpush1.xpose.msra.mxu0 %v2277
        %2289 = vmatprep.subr.mxu0 0.0
        %2290 = vmatpush1.xpose.msra.mxu0 %v2280
        %2291 = vmatprep.subr.mxu0 0.0
        %2292 = vmatpush1.xpose.msra.mxu0 %v2283
        %2293 = vmatprep.subr.mxu0 0.0
        %2294 = vmatpush1.xpose.msra.mxu0 0.0
        %2295 = vmatprep.subr.mxu0 0.0
        %2296 = vmatpush1.xpose.msra.mxu0 0.0
        %2297 = vmatprep.subr.mxu0 0.0
        %2298 = vmatpush1.xpose.msra.mxu0 0.0
        %2299 = vmatprep.subr.mxu0 0.0
        %2300 = vmatpush1.xpose.msra.mxu0 0.0
        %2301 = vmatprep.subr.mxu0 0.0
        %2302 = vmatpush1.xpose.msra.mxu0 0.0
        %2303 = vmatprep.subr.mxu0 0.0
        %2304 = vmatpush1.xpose.msra.mxu0 0.0
        %2305 = vmatprep.subr.mxu0 0.0
        %2306 = vmatpush1.xpose.msra.mxu0 0.0
        %2307 = vmatprep.subr.mxu0 0.0
        %2308 = vmatpush1.xpose.msra.mxu0 0.0
        %2309 = vmatprep.subr.mxu0 0.0
        %2310 = vmatpush1.xpose.msra.mxu0 0.0
        %2311 = vmatprep.subr.mxu0 0.0
        %2312 = vmatpush1.xpose.msra.mxu0 0.0
        %2313 = vmatprep.subr.mxu0 0.0
        %2314 = vmatpush1.xpose.msra.mxu0 0.0
        %2315 = vmatprep.subr.mxu0 0.0
        %2316 = vmatpush1.xpose.msra.mxu0 0.0
        %2317 = vmatprep.subr.mxu0 0.0
        %2318 = vmatpush1.xpose.msra.mxu0 0.0
        %2319 = vmatprep.subr.mxu0 0.0
        %2320 = vmatpush1.xpose.msra.mxu0 0.0
        %2321 = vmatprep.subr.mxu0 0.0
        %2322 = vmatpush1.xpose.msra.mxu0 0.0
        %2323 = vmatprep.subr.mxu0 0.0
        %2324 = vmatpush1.xpose.msra.mxu0 0.0
        %2325 = vmatprep.subr.mxu0 0.0
        %2326 = vmatpush1.xpose.msra.mxu0 0.0
        %2327 = vmatprep.subr.mxu0 0.0
        %2328 = vmatpush1.xpose.msra.mxu0 0.0
        %2329 = vmatprep.subr.mxu0 0.0
        %2330 = vmatpush1.xpose.msra.mxu0 0.0
        %2331 = vmatprep.subr.mxu0 0.0
        %2332 = vmatpush1.xpose.msra.mxu0 0.0
        %2333 = vmatprep.subr.mxu0 0.0
        %2334 = vmatpush1.xpose.msra.mxu0 0.0
        %2335 = vmatprep.subr.mxu0 0.0
        %2336 = vmatpush1.xpose.msra.mxu0 0.0
        %2337 = vmatprep.subr.mxu0 0.0
        %2338 = vmatpush1.xpose.msra.mxu0 0.0
        %2339 = vmatprep.subr.mxu0 0.0
        %2340 = vmatpush1.xpose.msra.mxu0 0.0
        %2341 = vmatprep.subr.mxu0 0.0
        %2342 = vmatpush1.xpose.msra.mxu0 0.0
        %2343 = vmatprep.subr.mxu0 0.0
        %2344 = vmatpush1.xpose.msra.mxu0 0.0
        %2345 = vmatprep.subr.mxu0 0.0
        %2346 = vmatpush1.xpose.msra.mxu0 0.0
        %2347 = vmatprep.subr.mxu0 0.0
        %2348 = vmatpush1.xpose.msra.mxu0 0.0
        %2349 = vmatprep.mubr.f32.mxu0 0.0
        %2350 = vmatmul.mubr.f32.gmra.mrb[0].mxu0 %v2271
        %v2351 = vpop.f32.mrb[0].mxu0
        %v2352 = vadd.f32 %v2268, %v2351
        %v2353 = vpop.f32.mrb[0].mxu0
        %2354 = vdwg.mxu0
        %v2355 = vmax.f32 %v2352, 0.0
        %s2356 = scalar_lea.vmem %s15, 32
        %v2357 = vld [vmem:[%s2356] sm:$0xff]
        %v2358 = vld [vmem:[%s2356 + $0x8] sm:$0xff]
        %v2359 = vld [vmem:[%s2356 + $0x10] sm:$0xff]
        %v2360 = vld [vmem:[%s2356 + $0x18] sm:$0xff]
        %s2361 = scalar_lea.vmem %s16, 1
        %v2362 = vld [vmem:[%s2361] sm:$0x1]
        %v2364 = vlaneseq
        %v2365 = vshrl.u32 %v2364, 7
        %v2366 = vsub.s32 0, %v2365
        %v2367 = vrot.slane %v2362, %v2366
        %v2370 = vsel %vm867, %v2355, 0
        %v2373 = vsel %vm867, %v2357, 0
        %v2376 = vsel %vm867, %v2358, 0
        %v2379 = vsel %vm867, %v2359, 0
        %v2382 = vsel %vm867, %v2360, 0
        %2384 = vmatprep.subr.mxu0 0.0
        %2385 = vmatpush1.xpose.msra.mxu0 %v2373
        %2386 = vmatprep.subr.mxu0 0.0
        %2387 = vmatpush1.xpose.msra.mxu0 %v2376
        %2388 = vmatprep.subr.mxu0 0.0
        %2389 = vmatpush1.xpose.msra.mxu0 %v2379
        %2390 = vmatprep.subr.mxu0 0.0
        %2391 = vmatpush1.xpose.msra.mxu0 %v2382
        %2392 = vmatprep.subr.mxu0 0.0
        %2393 = vmatpush1.xpose.msra.mxu0 0.0
        %2394 = vmatprep.subr.mxu0 0.0
        %2395 = vmatpush1.xpose.msra.mxu0 0.0
        %2396 = vmatprep.subr.mxu0 0.0
        %2397 = vmatpush1.xpose.msra.mxu0 0.0
        %2398 = vmatprep.subr.mxu0 0.0
        %2399 = vmatpush1.xpose.msra.mxu0 0.0
        %2400 = vmatprep.subr.mxu0 0.0
        %2401 = vmatpush1.xpose.msra.mxu0 0.0
        %2402 = vmatprep.subr.mxu0 0.0
        %2403 = vmatpush1.xpose.msra.mxu0 0.0
        %2404 = vmatprep.subr.mxu0 0.0
        %2405 = vmatpush1.xpose.msra.mxu0 0.0
        %2406 = vmatprep.subr.mxu0 0.0
        %2407 = vmatpush1.xpose.msra.mxu0 0.0
        %2408 = vmatprep.subr.mxu0 0.0
        %2409 = vmatpush1.xpose.msra.mxu0 0.0
        %2410 = vmatprep.subr.mxu0 0.0
        %2411 = vmatpush1.xpose.msra.mxu0 0.0
        %2412 = vmatprep.subr.mxu0 0.0
        %2413 = vmatpush1.xpose.msra.mxu0 0.0
        %2414 = vmatprep.subr.mxu0 0.0
        %2415 = vmatpush1.xpose.msra.mxu0 0.0
        %2416 = vmatprep.subr.mxu0 0.0
        %2417 = vmatpush1.xpose.msra.mxu0 0.0
        %2418 = vmatprep.subr.mxu0 0.0
        %2419 = vmatpush1.xpose.msra.mxu0 0.0
        %2420 = vmatprep.subr.mxu0 0.0
        %2421 = vmatpush1.xpose.msra.mxu0 0.0
        %2422 = vmatprep.subr.mxu0 0.0
        %2423 = vmatpush1.xpose.msra.mxu0 0.0
        %2424 = vmatprep.subr.mxu0 0.0
        %2425 = vmatpush1.xpose.msra.mxu0 0.0
        %2426 = vmatprep.subr.mxu0 0.0
        %2427 = vmatpush1.xpose.msra.mxu0 0.0
        %2428 = vmatprep.subr.mxu0 0.0
        %2429 = vmatpush1.xpose.msra.mxu0 0.0
        %2430 = vmatprep.subr.mxu0 0.0
        %2431 = vmatpush1.xpose.msra.mxu0 0.0
        %2432 = vmatprep.subr.mxu0 0.0
        %2433 = vmatpush1.xpose.msra.mxu0 0.0
        %2434 = vmatprep.subr.mxu0 0.0
        %2435 = vmatpush1.xpose.msra.mxu0 0.0
        %2436 = vmatprep.subr.mxu0 0.0
        %2437 = vmatpush1.xpose.msra.mxu0 0.0
        %2438 = vmatprep.subr.mxu0 0.0
        %2439 = vmatpush1.xpose.msra.mxu0 0.0
        %2440 = vmatprep.subr.mxu0 0.0
        %2441 = vmatpush1.xpose.msra.mxu0 0.0
        %2442 = vmatprep.subr.mxu0 0.0
        %2443 = vmatpush1.xpose.msra.mxu0 0.0
        %2444 = vmatprep.subr.mxu0 0.0
        %2445 = vmatpush1.xpose.msra.mxu0 0.0
        %2446 = vmatprep.subr.mxu0 0.0
        %2447 = vmatpush1.xpose.msra.mxu0 0.0
        %2448 = vmatprep.mubr.f32.mxu0 0.0
        %2449 = vmatmul.mubr.f32.gmra.mrb[0].mxu0 %v2370
        %v2450 = vpop.f32.mrb[0].mxu0
        %v2451 = vadd.f32 %v2367, %v2450
        %v2452 = vpop.f32.mrb[0].mxu0
        %2453 = vdwg.mxu0
        %v2454 = vadd.f32 %v2256, %v2451
        %s2455 = scalar_lea.vmem %s17, 1
        %v2456 = vld [vmem:[%s2455] sm:$0x1]
        %s2457 = scalar_lea.vmem %s18, 1
        %v2458 = vld [vmem:[%s2457] sm:$0x1]
        %v2459 = vsel %vm867, %v2454, 0.0
        %2460 = vadd.xlane.f32.xlu0 %v2459
        %v2461 = vpop.xlane.xlu0 %2460
        %v2462 = vmul.f32 %v2461, %v1415
        %v2463 = vsub.f32 %v2454, %v2462
        %v2464 = vmul.f32 %v2463, %v2463
        %v2465 = vsel %vm867, %v2464, 0.0
        %2466 = vadd.xlane.f32.xlu0 %v2465
        %v2467 = vpop.xlane.xlu0 %2466
        %v2468 = vmul.f32 %v2467, %v1415
        %v2469 = vadd.f32 %v2468, 1e-05
        %v2470 = vrsqrt.pop %v2469
        %v2471 = vmul.f32 %v2463, %v2470
        %v2473 = vlaneseq
        %v2474 = vshrl.u32 %v2473, 7
        %v2475 = vsub.s32 0, %v2474
        %v2476 = vrot.slane %v2456, %v2475
        %v2478 = vmul.f32 %v2471, %v2476
        %v2480 = vlaneseq
        %v2481 = vshrl.u32 %v2480, 7
        %v2482 = vsub.s32 0, %v2481
        %v2483 = vrot.slane %v2458, %v2482
        %v2485 = vadd.f32 %v2478, %v2483
        %v2486 = vsel %vm867, %v2485, 0.0
        %v2487 = vrot.slane %v2486, 4
        %v2488 = vadd.f32 %v2486, %v2487
        %v2489 = vrot.slane %v2488, 2
        %v2490 = vadd.f32 %v2488, %v2489
        %v2491 = vrot.slane %v2490, 1
        %v2492 = vadd.f32 %v2490, %v2491
        %v2493 = vrcp.pop 8.0
        %v2494 = vmul.f32 %v2492, %v2493
        %v2495 = vld [vmem:[#allocation22] sm:$0xff]
        %v2496 = vld [vmem:[#allocation22 + $0x8] sm:$0x3]
        %v2497 = vld [vmem:[%s20] sm:$0x1]
        %v2499 = vsel %vm867, %v2494, 0
        %v2502 = vsel %vm867, %v2495, 0
        %v2505 = vsel %vm867, %v2496, 0
        %2507 = vmatprep.subr.mxu0 0.0
        %2508 = vmatpush1.xpose.msra.mxu0 %v2502
        %2509 = vmatprep.subr.mxu0 0.0
        %2510 = vmatpush1.xpose.msra.mxu0 %v2505
        %2511 = vmatprep.subr.mxu0 0.0
        %2512 = vmatpush1.xpose.msra.mxu0 0.0
        %2513 = vmatprep.subr.mxu0 0.0
        %2514 = vmatpush1.xpose.msra.mxu0 0.0
        %2515 = vmatprep.subr.mxu0 0.0
        %2516 = vmatpush1.xpose.msra.mxu0 0.0
        %2517 = vmatprep.subr.mxu0 0.0
        %2518 = vmatpush1.xpose.msra.mxu0 0.0
        %2519 = vmatprep.subr.mxu0 0.0
        %2520 = vmatpush1.xpose.msra.mxu0 0.0
        %2521 = vmatprep.subr.mxu0 0.0
        %2522 = vmatpush1.xpose.msra.mxu0 0.0
        %2523 = vmatprep.subr.mxu0 0.0
        %2524 = vmatpush1.xpose.msra.mxu0 0.0
        %2525 = vmatprep.subr.mxu0 0.0
        %2526 = vmatpush1.xpose.msra.mxu0 0.0
        %2527 = vmatprep.subr.mxu0 0.0
        %2528 = vmatpush1.xpose.msra.mxu0 0.0
        %2529 = vmatprep.subr.mxu0 0.0
        %2530 = vmatpush1.xpose.msra.mxu0 0.0
        %2531 = vmatprep.subr.mxu0 0.0
        %2532 = vmatpush1.xpose.msra.mxu0 0.0
        %2533 = vmatprep.subr.mxu0 0.0
        %2534 = vmatpush1.xpose.msra.mxu0 0.0
        %2535 = vmatprep.subr.mxu0 0.0
        %2536 = vmatpush1.xpose.msra.mxu0 0.0
        %2537 = vmatprep.subr.mxu0 0.0
        %2538 = vmatpush1.xpose.msra.mxu0 0.0
        %2539 = vmatprep.subr.mxu0 0.0
        %2540 = vmatpush1.xpose.msra.mxu0 0.0
        %2541 = vmatprep.subr.mxu0 0.0
        %2542 = vmatpush1.xpose.msra.mxu0 0.0
        %2543 = vmatprep.subr.mxu0 0.0
        %2544 = vmatpush1.xpose.msra.mxu0 0.0
        %2545 = vmatprep.subr.mxu0 0.0
        %2546 = vmatpush1.xpose.msra.mxu0 0.0
        %2547 = vmatprep.subr.mxu0 0.0
        %2548 = vmatpush1.xpose.msra.mxu0 0.0
        %2549 = vmatprep.subr.mxu0 0.0
        %2550 = vmatpush1.xpose.msra.mxu0 0.0
        %2551 = vmatprep.subr.mxu0 0.0
        %2552 = vmatpush1.xpose.msra.mxu0 0.0
        %2553 = vmatprep.subr.mxu0 0.0
        %2554 = vmatpush1.xpose.msra.mxu0 0.0
        %2555 = vmatprep.subr.mxu0 0.0
        %2556 = vmatpush1.xpose.msra.mxu0 0.0
        %2557 = vmatprep.subr.mxu0 0.0
        %2558 = vmatpush1.xpose.msra.mxu0 0.0
        %2559 = vmatprep.subr.mxu0 0.0
        %2560 = vmatpush1.xpose.msra.mxu0 0.0
        %2561 = vmatprep.subr.mxu0 0.0
        %2562 = vmatpush1.xpose.msra.mxu0 0.0
        %2563 = vmatprep.subr.mxu0 0.0
        %2564 = vmatpush1.xpose.msra.mxu0 0.0
        %2565 = vmatprep.subr.mxu0 0.0
        %2566 = vmatpush1.xpose.msra.mxu0 0.0
        %2567 = vmatprep.subr.mxu0 0.0
        %2568 = vmatpush1.xpose.msra.mxu0 0.0
        %2569 = vmatprep.subr.mxu0 0.0
        %2570 = vmatpush1.xpose.msra.mxu0 0.0
        %2571 = vmatprep.mubr.f32.mxu0 0.0
        %2572 = vmatmul.mubr.f32.gmra.mrb[0].mxu0 %v2499
        %v2573 = vpop.f32.mrb[0].mxu0
        %v2574 = vadd.f32 %v2497, %v2573
        %v2575 = vpop.f32.mrb[0].mxu0
        %2576 = vdwg.mxu0
        %vm2577 = vcmask 73728
        %2578 = vst.msk [vmem:[%s832] sm:$0x1] %vm2577, %v2574
        %s2579 = sand.u32 %s498, 1
        %s2580 = scalar_lea.sflag [#allocation4], %s2579
        %s2581 = sand.u32 %s498, 1
        %s2582 = scalar_lea.vmem [#allocation23], %s2581
        // Predicated region
        $region157: #{_lambda_.1} parent=103 // pred_check
          %p2583 = pneg %p508
        $region158: #{_lambda_.1} parent=103 // pred_check_branch
          %2585 = sbr.rel (%p2583) target = $region160
        $region159: #{_lambda_.1} parent=103 // pred_region
          %s2587 = ssub.s32 16, 16
          %2588 = vsyncadd %s2580, %s2587
          %s2589 = smul.addr %s44, 16
          %s2590 = scalar_lea.hbm %s21, %s2589
          %s2592 = sshll.u32 %s2582, 4
          %s2593 = int_to_ptr.vmem [resolvable:$true] %s2592
          %2595 = dma.vmem_to_hbm [thread:$0]  %s2593, 16, %s2590, %s2580
        $region160: #{_lambda_.1} parent=103 // pred_fallthru
          _
      $region104: #{_lambda_.1} parent=5 // pred_fallthru
        _
      %p2596 = scmp.le.s32.totalorder 2, %s39
      // Predicated region
      $region161: #{_lambda_.1} parent=5 // pred_check
        %p2597 = pneg %p2596
      $region162: #{_lambda_.1} parent=5 // pred_check_branch
        %2599 = sbr.rel (%p2597) target = $region164
      $region163: #{_lambda_.1} parent=5 // pred_region
        %s2600 = ssub.s32 %s39, 2
        // Predicated region
        $region165: #{_lambda_.1} parent=163 // pred_check
          %p2601 = pneg %p514
        $region166: #{_lambda_.1} parent=163 // pred_check_branch
          %2603 = sbr.rel (%p2601) target = $region168
        $region167: #{_lambda_.1} parent=163 // pred_region
          %s2604 = sand.u32 %s499, 1
          %s2605 = scalar_lea.sflag [#allocation4], %s2604
          %s2606 = sand.u32 %s499, 1
          %s2607 = scalar_lea.vmem [#allocation23], %s2606
          %2608 = dma.done %s2605, 16
        $region168: #{_lambda_.1} parent=163 // pred_fallthru
          _
      $region164: #{_lambda_.1} parent=5 // pred_fallthru
        _
    $region6: #{_lambda_.1} parent=1 // loop_footer
      %s43 = sadd.s32 1, %s39
    $region7: #{_lambda_.1} parent=1 // loop_footer_branch
      %38 = sbr.rel target = $region3
    $region8: #{_lambda_.1} parent=1 // loop_exit
      _
    %2609 = vsyncpa [#allocation3], 1
    %s2610 = scalar_lea.sflag [#allocation3], 1
    %2611 = vsyncpa %s2610, 1
    %2612 = vsyncpa [#allocation6], 1
    %2613 = vsyncpa [#allocation9], 1
    %2614 = vsyncpa [#allocation12], 1
    %2615 = vsyncpa [#allocation15], 1
    %2616 = vsyncpa [#allocation18], 1
    %2617 = vsyncpa [#allocation21], 1
    %2618 = vsyncpa [#allocation4], 1
    %s2619 = scalar_lea.sflag [#allocation4], 1
    %2620 = vsyncpa %s2619, 1

</llo_original>
